<compile_context>
chip_gen: v7x
topology: tpu7x:2x2x1
jax: 0.10.0
libtpu: 0.0.40
codegen_flags: <defaults>
</compile_context>

<pallas_src>
import math
import numpy as np
import jax
import jax.numpy as jnp
from jax import lax
from jax.experimental import pallas as pl
from jax.experimental.pallas import tpu as pltpu

# ---- config (mirrors the PyTorch module / config object) -------------------
DIM = 128                        # module-level `dim` (== config.dim)
NHEADS = 4                       # config.nheads
HSIZE = DIM // NHEADS            # 32
BLOCK_SIZE = 16                  # config.block_size (== T here)
NGROUPS = 4                      # config.ngroups
GROUP_T = BLOCK_SIZE // NGROUPS  # 4
NLAYERS = 2                      # config.nlayers
IDX = 0                          # layer index
RMS_EPS = 1e-5                   # RMSNorm eps
ITS_TIME = (NLAYERS % 2) ^ ((IDX + 1) % 2)   # == 1 for this config
assert ITS_TIME == 1

_NEG = -1e30                     # additive mask value (exp -> exact 0 in f32)


def _dot_t(a, b):
    """a:(M,K), b:(N,K) -> (M,N)   (i.e. 'md,nd->mn')."""
    return lax.dot_general(a, b, (((1,), (1,)), ((), ())),
                           preferred_element_type=jnp.float32)


# ---------------------------------------------------------------------------
# Fused Pallas kernel: one grid step == Bt batch elements, everything in VMEM.
# ---------------------------------------------------------------------------
def _block_kernel(x_ref, ln_ref, wattn_ref, wproj_ref,
                  msum_ref, mtt_ref, mst_ref, m2_ref,
                  out_ref, yq_ref, yk_ref, yv_ref):
    C = DIM
    hs = HSIZE
    scale = 1.0 / math.sqrt(hs)

    # ---- RMSNorm (ln1) --------------------------------------------------
    x = x_ref[...]                                            # (R, C) f32
    ms = jnp.mean(x * x, axis=-1, keepdims=True)
    xn = x * lax.rsqrt(ms + RMS_EPS) * ln_ref[...]            # (R, C)

    # ---- c_attn: one MXU matmul for the whole batch tile ----------------
    qkv = jnp.dot(xn, wattn_ref[...], preferred_element_type=jnp.float32)   # (R, 3C)

    # ---- per-group mean "summary" tokens for q/k/v in one matmul --------
    # Msum is a (Bt*G, Bt*T) block-diagonal averaging matrix.
    sums = jnp.dot(msum_ref[...], qkv, preferred_element_type=jnp.float32)  # (RG, 3C)

    # y[0] = summary q, y[1] = summary k — stored lane-dense (RG, 128)
    yq_ref[...] = sums[:, :C]
    yk_ref[...] = sums[:, C:2 * C]

    mtt = mtt_ref[...]        # (R, R)   same-batch & same-group & causal, additive
    mst = mst_ref[...]        # (RG, R)  summary-query -> same-batch same-group tokens
    m2b = m2_ref[...]         # (RG, RG) stage-2 causal over group summaries

    o_tok, o_grp = [], []
    for h in range(NHEADS):                                   # unrolled, static lane slices
        sl_q = slice(h * hs, (h + 1) * hs)
        sl_k = slice(C + h * hs, C + (h + 1) * hs)
        sl_v = slice(2 * C + h * hs, 2 * C + (h + 1) * hs)
        qh = qkv[:, sl_q] * scale                             # (R, hs) pre-scaled
        kh = qkv[:, sl_k]
        vh = qkv[:, sl_v]
        qsh = sums[:, sl_q] * scale                           # (RG, hs) pre-scaled
        ksh = sums[:, sl_k]
        vsh = sums[:, sl_v]

        # -- stage 1, token queries: causal within their 4-token group ----
        # (summary key sits at position group_t, never visible to token queries)
        s_tt = _dot_t(qh, kh) + mtt                           # (R, R)
        m1 = jnp.max(s_tt, axis=-1, keepdims=True)
        p1 = jnp.exp(s_tt - m1)
        l1 = jnp.sum(p1, axis=-1, keepdims=True)
        o_tok.append(jnp.dot(p1, vh, preferred_element_type=jnp.float32)
                     * pl.reciprocal(l1, approx=True))        # (R, hs)

        # -- stage 1, summary queries: 4 group tokens + own summary token -
        s_st = _dot_t(qsh, kh) + mst                          # (RG, R)
        s_ss = jnp.sum(qsh * ksh, axis=-1, keepdims=True)     # (RG, 1) self (summary) score
        m_s = jnp.maximum(jnp.max(s_st, axis=-1, keepdims=True), s_ss)
        p_st = jnp.exp(s_st - m_s)
        p_ss = jnp.exp(s_ss - m_s)
        den = jnp.sum(p_st, axis=-1, keepdims=True) + p_ss
        o_sum_h = ((jnp.dot(p_st, vh, preferred_element_type=jnp.float32) + p_ss * vsh)
                   * pl.reciprocal(den, approx=True))         # (RG, hs)

        # -- stage 2: causal attention over group summaries ---------------
        # values = stage-1 outputs at the summary positions
        s2 = _dot_t(qsh, ksh) + m2b                           # (RG, RG)
        m2m = jnp.max(s2, axis=-1, keepdims=True)
        p2 = jnp.exp(s2 - m2m)
        l2 = jnp.sum(p2, axis=-1, keepdims=True)
        o_grp.append(jnp.dot(p2, o_sum_h, preferred_element_type=jnp.float32)
                     * pl.reciprocal(l2, approx=True))        # (RG, hs)

    # ---- merge heads onto lanes, single K=128 c_proj matmul --------------
    o_merged = jnp.concatenate(o_tok, axis=-1)                # (R, C) lane-dense
    out_ref[...] = jnp.dot(o_merged, wproj_ref[...],
                           preferred_element_type=jnp.float32).astype(out_ref.dtype)
    yv_ref[...] = jnp.concatenate(o_grp, axis=-1)             # (RG, C) lane-dense


# ---------------------------------------------------------------------------
# Trace-time numpy mask / averaging-matrix constants (per batch tile).
# ---------------------------------------------------------------------------
def _build_constants(bt):
    R = bt * BLOCK_SIZE
    RG = bt * NGROUPS
    r = np.arange(R)
    b_r, t_r = r // BLOCK_SIZE, r % BLOCK_SIZE
    g_r = t_r // GROUP_T
    s = np.arange(RG)
    b_s, g_s = s // NGROUPS, s % NGROUPS

    mtt = np.where((b_r[:, None] == b_r[None, :])
                   & (g_r[:, None] == g_r[None, :])
                   & (t_r[None, :] <= t_r[:, None]), 0.0, _NEG).astype(np.float32)
    mst = np.where((b_s[:, None] == b_r[None, :])
                   & (g_s[:, None] == g_r[None, :]), 0.0, _NEG).astype(np.float32)
    # stage-2: first G-1 summaries attend causally; last group's row is kept
    # self-only (never read) just to avoid a fully-masked softmax row.
    valid2 = (b_s[:, None] == b_s[None, :]) & (
        ((g_s[:, None] <= NGROUPS - 2) & (g_s[None, :] <= g_s[:, None]))
        | ((g_s[:, None] == NGROUPS - 1) & (g_s[None, :] == NGROUPS - 1)))
    m2 = np.where(valid2, 0.0, _NEG).astype(np.float32)

    msum = np.zeros((RG, R), np.float32)
    for b in range(bt):
        for g in range(NGROUPS):
            r0 = b * BLOCK_SIZE + g * GROUP_T
            msum[b * NGROUPS + g, r0:r0 + GROUP_T] = 1.0 / GROUP_T
    return msum, mtt, mst, m2


# ---------------------------------------------------------------------------
# Wrapper: single pallas_call, grid over batch tiles.
# ---------------------------------------------------------------------------
def block_forward(x, ln1_weight, w_attn, w_proj, y_in=None, num_steps=None):
    """Block.forward: heads(ln1(x), y) on the its_time path. y_in unused (its_time==1)."""
    del y_in
    B, T, C = x.shape
    assert C == DIM and T == BLOCK_SIZE
    assert T == NGROUPS * GROUP_T, "grouping requires T == ngroups * group_t"
    if num_steps is None:
        # 2 balanced steps keep both v7x TensorCores busy; use num_steps=1 on v5e/v6e.
        num_steps = 2 if (B % 2 == 0 and B >= 2) else 1
    assert B % num_steps == 0
    bt = B // num_steps
    R = bt * T
    RG = bt * NGROUPS

    msum, mtt, mst, m2 = (jnp.asarray(c) for c in _build_constants(bt))
    x2 = x.reshape(B * T, C)
    ln2d = ln1_weight.reshape(1, C)

    out_shape = (
        jax.ShapeDtypeStruct((B * T, C), jnp.float32),          # attention output (lane-dense)
        jax.ShapeDtypeStruct((B * NGROUPS, C), jnp.float32),     # summary q (lane-dense)
        jax.ShapeDtypeStruct((B * NGROUPS, C), jnp.float32),     # summary k
        jax.ShapeDtypeStruct((B * NGROUPS, C), jnp.float32),     # stage-2 output, heads merged
    )
    grid_spec = pltpu.PrefetchScalarGridSpec(
        num_scalar_prefetch=0,
        grid=(num_steps,),
        in_specs=[
            pl.BlockSpec((R, C), lambda i: (i, 0)),              # x rows of this batch tile
            pl.BlockSpec((1, C), lambda i: (0, 0)),              # ln1 weight
            pl.BlockSpec((C, 3 * C), lambda i: (0, 0)),          # w_attn
            pl.BlockSpec((C, C), lambda i: (0, 0)),              # w_proj
            pl.BlockSpec((RG, R), lambda i: (0, 0)),             # group-mean matrix
            pl.BlockSpec((R, R), lambda i: (0, 0)),              # token-token mask
            pl.BlockSpec((RG, R), lambda i: (0, 0)),             # summary-token mask
            pl.BlockSpec((RG, RG), lambda i: (0, 0)),            # stage-2 mask
        ],
        out_specs=[
            pl.BlockSpec((R, C), lambda i: (i, 0)),
            pl.BlockSpec((RG, C), lambda i: (i, 0)),
            pl.BlockSpec((RG, C), lambda i: (i, 0)),
            pl.BlockSpec((RG, C), lambda i: (i, 0)),
        ],
    )
    x_out, yq, yk, yv = pl.pallas_call(
        _block_kernel,
        out_shape=out_shape,
        grid_spec=grid_spec,
        compiler_params=pltpu.CompilerParams(dimension_semantics=("parallel",)),
    )(x2, ln2d, w_attn, w_proj, msum, mtt, mst, m2)

    x_out = x_out.reshape(B, T, C)

    def _to_y(t):   # lane-dense (B*G, C) -> (B, H, G-1, 1, hs)  (cheap wrapper-side relayout)
        t = t.reshape(B, NGROUPS, NHEADS, HSIZE)[:, :NGROUPS - 1]
        return t.transpose(0, 2, 1, 3)[:, :, :, None, :]

    # block_drop / resid_dropout are identities (p = 0, eval mode)
    return x_out, (_to_y(yq), _to_y(yk), _to_y(yv))


# ---------------------------------------------------------------------------
# Pure-JAX reference (for correctness check)
# ---------------------------------------------------------------------------
def _sdpa_ref(q, k, v):
    D = q.shape[-1]
    Sq = q.shape[-2]
    s = jnp.einsum('...qd,...kd->...qk', q, k) / math.sqrt(D)
    mask = jnp.tril(jnp.ones((Sq, Sq), dtype=bool))
    s = jnp.where(mask, s, -jnp.inf)
    p = jax.nn.softmax(s, axis=-1)
    return jnp.einsum('...qk,...kd->...qd', p, v)


def _reference_forward(x, ln1_weight, w_attn, w_proj):
    B, T, C = x.shape
    n_groups = min(T // GROUP_T, NGROUPS)
    xf = x.astype(jnp.float32)
    xn = xf * lax.rsqrt(jnp.mean(xf * xf, axis=-1, keepdims=True) + RMS_EPS) * ln1_weight
    qkv = xn.reshape(B * T, C) @ w_attn
    q, k, v = jnp.split(qkv, 3, axis=-1)

    def to_grouped(t):   # (B*T, C) -> (B, H, G, group_t, hsize)
        return t.reshape(B, n_groups, GROUP_T, NHEADS, HSIZE).transpose(0, 3, 1, 2, 4)

    q, k, v = to_grouped(q), to_grouped(k), to_grouped(v)

    def append_mean(t):
        return jnp.concatenate([t, t.mean(axis=3, keepdims=True)], axis=3)

    qa, ka, va = append_mean(q), append_mean(k), append_mean(v)
    xa = _sdpa_ref(qa, ka, va)
    qg, kg, vg = qa[:, :, :-1, -1], ka[:, :, :-1, -1], xa[:, :, :-1, -1]
    vout = _sdpa_ref(qg, kg, vg)[:, :, :, None, :]
    y = (qg[:, :, :, None, :], kg[:, :, :, None, :], vout)
    xa = xa[:, :, :, :-1, :]
    xo = (xa.reshape(B, NHEADS, n_groups * GROUP_T, HSIZE)
          .transpose(0, 2, 1, 3).reshape(B, T, C))
    xo = (xo.reshape(B * T, C) @ w_proj).reshape(B, T, C)
    return xo, y


# ---------------------------------------------------------------------------
if __name__ == "__main__":
    key = jax.random.PRNGKey(0)
    k1, k2, k3, k4 = jax.random.split(key, 4)

    B, T = 8, BLOCK_SIZE          # 8 batch elements -> 2 grid steps of 64 fused rows each
    x = jax.random.normal(k1, (B, T, DIM), dtype=jnp.float32)
    ln1_weight = 1.0 + 0.1 * jax.random.normal(k4, (DIM,), dtype=jnp.float32)
    w_attn = 0.02 * jax.random.normal(k2, (DIM, 3 * DIM), dtype=jnp.float32)
    w_proj = 0.02 * jax.random.normal(k3, (DIM, DIM), dtype=jnp.float32)

    fwd = jax.jit(block_forward)
    out, y = fwd(x, ln1_weight, w_attn, w_proj)
    out = jax.block_until_ready(out)
    y = tuple(jax.block_until_ready(t) for t in y)

    ref_out, ref_y = _reference_forward(x, ln1_weight, w_attn, w_proj)
    assert out.shape == (B, T, DIM)
    # approx-reciprocal softmax normalization -> slightly relaxed tolerance
    assert jnp.allclose(out, ref_out, atol=2e-3, rtol=2e-3), "output mismatch"
    for a, b in zip(y, ref_y):
        assert a.shape == b.shape, "y shape mismatch"
        assert jnp.allclose(a, b, atol=2e-3, rtol=2e-3), "y mismatch"

    print("KERNEL_OK")
</pallas_src>

<mosaic_0001>
module attributes {stable_mosaic.version = 11 : i64} {
  func.func @_block_kernel(%arg0: i32, %arg1: memref<64x128xf32, #tpu.memory_space<vmem>>, %arg2: memref<1x128xf32, #tpu.memory_space<vmem>>, %arg3: memref<128x384xf32, #tpu.memory_space<vmem>>, %arg4: memref<128x128xf32, #tpu.memory_space<vmem>>, %arg5: memref<16x64xf32, #tpu.memory_space<vmem>>, %arg6: memref<64x64xf32, #tpu.memory_space<vmem>>, %arg7: memref<16x64xf32, #tpu.memory_space<vmem>>, %arg8: memref<16x16xf32, #tpu.memory_space<vmem>>, %arg9: memref<64x128xf32, #tpu.memory_space<vmem>>, %arg10: memref<16x128xf32, #tpu.memory_space<vmem>>, %arg11: memref<16x128xf32, #tpu.memory_space<vmem>>, %arg12: memref<16x128xf32, #tpu.memory_space<vmem>>) attributes {dimension_semantics = [#tpu.dimension_semantics<parallel>], iteration_bounds = array<i64: 2>, scalar_prefetch = 0 : i64, scratch_operands = 0 : i64, tpu.core_type = #tpu.core_type<tc>, window_params = [{transform_indices = @transform_0, window_bounds = array<i64: 64, 128>}, {pipeline_mode = #tpu.pipeline_mode<synchronous>, transform_indices = @transform_1, window_bounds = array<i64: 1, 128>}, {pipeline_mode = #tpu.pipeline_mode<synchronous>, transform_indices = @transform_2, window_bounds = array<i64: 128, 384>}, {pipeline_mode = #tpu.pipeline_mode<synchronous>, transform_indices = @transform_3, window_bounds = array<i64: 128, 128>}, {pipeline_mode = #tpu.pipeline_mode<synchronous>, transform_indices = @transform_4, window_bounds = array<i64: 16, 64>}, {pipeline_mode = #tpu.pipeline_mode<synchronous>, transform_indices = @transform_5, window_bounds = array<i64: 64, 64>}, {pipeline_mode = #tpu.pipeline_mode<synchronous>, transform_indices = @transform_6, window_bounds = array<i64: 16, 64>}, {pipeline_mode = #tpu.pipeline_mode<synchronous>, transform_indices = @transform_7, window_bounds = array<i64: 16, 16>}, {transform_indices = @transform_8, window_bounds = array<i64: 64, 128>}, {transform_indices = @transform_9, window_bounds = array<i64: 16, 128>}, {transform_indices = @transform_10, window_bounds = array<i64: 16, 128>}, {transform_indices = @transform_11, window_bounds = array<i64: 16, 128>}]} {
    %c0 = arith.constant 0 : index
    %c0_0 = arith.constant 0 : index
    %0 = vector.load %arg1[%c0, %c0_0] : memref<64x128xf32, #tpu.memory_space<vmem>>, vector<64x128xf32>
    %1 = arith.mulf %0, %0 : vector<64x128xf32>
    %cst = arith.constant dense<0.000000e+00> : vector<64xf32>
    %2 = vector.multi_reduction <add>, %1, %cst [1] : vector<64x128xf32> to vector<64xf32>
    %3 = vector.shape_cast %2 : vector<64xf32> to vector<64x1xf32>
    %cst_1 = arith.constant 1.280000e+02 : f32
    %4 = vector.broadcast %cst_1 : f32 to vector<64x1xf32>
    %5 = arith.divf %3, %4 : vector<64x1xf32>
    %cst_2 = arith.constant 9.99999974E-6 : f32
    %6 = vector.broadcast %cst_2 : f32 to vector<64x1xf32>
    %7 = arith.addf %5, %6 : vector<64x1xf32>
    %8 = math.rsqrt %7 : vector<64x1xf32>
    %9 = vector.broadcast %8 : vector<64x1xf32> to vector<64x128xf32>
    %10 = arith.mulf %0, %9 : vector<64x128xf32>
    %c0_3 = arith.constant 0 : index
    %c0_4 = arith.constant 0 : index
    %11 = vector.load %arg2[%c0_3, %c0_4] : memref<1x128xf32, #tpu.memory_space<vmem>>, vector<1x128xf32>
    %12 = vector.broadcast %11 : vector<1x128xf32> to vector<64x128xf32>
    %13 = arith.mulf %10, %12 : vector<64x128xf32>
    %c0_5 = arith.constant 0 : index
    %c0_6 = arith.constant 0 : index
    %14 = vector.load %arg3[%c0_5, %c0_6] : memref<128x384xf32, #tpu.memory_space<vmem>>, vector<128x384xf32>
    %cst_7 = arith.constant dense<0.000000e+00> : vector<64x384xf32>
    %15 = tpu.matmul %13, %14, %cst_7 {dimension_numbers = #tpu.dot_dimension_numbers<[1], [0], [0], [1], [0, 0, 1, 1], [], []>} : vector<64x128xf32>, vector<128x384xf32>, vector<64x384xf32> -> vector<64x384xf32>
    %c0_8 = arith.constant 0 : index
    %c0_9 = arith.constant 0 : index
    %16 = vector.load %arg5[%c0_8, %c0_9] : memref<16x64xf32, #tpu.memory_space<vmem>>, vector<16x64xf32>
    %cst_10 = arith.constant dense<0.000000e+00> : vector<16x384xf32>
    %17 = tpu.matmul %16, %15, %cst_10 {dimension_numbers = #tpu.dot_dimension_numbers<[1], [0], [0], [1], [0, 0, 1, 1], [], []>} : vector<16x64xf32>, vector<64x384xf32>, vector<16x384xf32> -> vector<16x384xf32>
    %18 = vector.extract_strided_slice %17 {offsets = [0, 0], sizes = [16, 128], strides = [1, 1]} : vector<16x384xf32> to vector<16x128xf32>
    %c0_11 = arith.constant 0 : index
    %c0_12 = arith.constant 0 : index
    %19 = vector.load %arg10[%c0_11, %c0_12] : memref<16x128xf32, #tpu.memory_space<vmem>>, vector<16x128xf32>
    tpu.vector_store %arg10[%c0_11, %c0_12], %18 {strides = array<i32>} : memref<16x128xf32, #tpu.memory_space<vmem>>, vector<16x128xf32>,
    %20 = vector.extract_strided_slice %17 {offsets = [0, 128], sizes = [16, 128], strides = [1, 1]} : vector<16x384xf32> to vector<16x128xf32>
    %c0_13 = arith.constant 0 : index
    %c0_14 = arith.constant 0 : index
    %21 = vector.load %arg11[%c0_13, %c0_14] : memref<16x128xf32, #tpu.memory_space<vmem>>, vector<16x128xf32>
    tpu.vector_store %arg11[%c0_13, %c0_14], %20 {strides = array<i32>} : memref<16x128xf32, #tpu.memory_space<vmem>>, vector<16x128xf32>,
    %c0_15 = arith.constant 0 : index
    %c0_16 = arith.constant 0 : index
    %22 = vector.load %arg6[%c0_15, %c0_16] : memref<64x64xf32, #tpu.memory_space<vmem>>, vector<64x64xf32>
    %c0_17 = arith.constant 0 : index
    %c0_18 = arith.constant 0 : index
    %23 = vector.load %arg7[%c0_17, %c0_18] : memref<16x64xf32, #tpu.memory_space<vmem>>, vector<16x64xf32>
    %c0_19 = arith.constant 0 : index
    %c0_20 = arith.constant 0 : index
    %24 = vector.load %arg8[%c0_19, %c0_20] : memref<16x16xf32, #tpu.memory_space<vmem>>, vector<16x16xf32>
    %25 = vector.extract_strided_slice %15 {offsets = [0, 0], sizes = [64, 32], strides = [1, 1]} : vector<64x384xf32> to vector<64x32xf32>
    %cst_21 = arith.constant 0.176776692 : f32
    %26 = vector.broadcast %cst_21 : f32 to vector<64x32xf32>
    %27 = arith.mulf %25, %26 : vector<64x32xf32>
    %28 = vector.extract_strided_slice %15 {offsets = [0, 128], sizes = [64, 32], strides = [1, 1]} : vector<64x384xf32> to vector<64x32xf32>
    %29 = vector.extract_strided_slice %15 {offsets = [0, 256], sizes = [64, 32], strides = [1, 1]} : vector<64x384xf32> to vector<64x32xf32>
    %30 = vector.extract_strided_slice %17 {offsets = [0, 0], sizes = [16, 32], strides = [1, 1]} : vector<16x384xf32> to vector<16x32xf32>
    %cst_22 = arith.constant 0.176776692 : f32
    %31 = vector.broadcast %cst_22 : f32 to vector<16x32xf32>
    %32 = arith.mulf %30, %31 : vector<16x32xf32>
    %33 = vector.extract_strided_slice %17 {offsets = [0, 128], sizes = [16, 32], strides = [1, 1]} : vector<16x384xf32> to vector<16x32xf32>
    %34 = vector.extract_strided_slice %17 {offsets = [0, 256], sizes = [16, 32], strides = [1, 1]} : vector<16x384xf32> to vector<16x32xf32>
    %cst_23 = arith.constant dense<0.000000e+00> : vector<64x64xf32>
    %35 = tpu.matmul %27, %28, %cst_23 {dimension_numbers = #tpu.dot_dimension_numbers<[1], [1], [0], [0], [0, 0, 1, 0], [], []>} : vector<64x32xf32>, vector<64x32xf32>, vector<64x64xf32> -> vector<64x64xf32>
    %36 = arith.addf %35, %22 : vector<64x64xf32>
    %cst_24 = arith.constant dense<0xFF800000> : vector<64xf32>
    %37 = vector.multi_reduction <maximumf>, %36, %cst_24 [1] : vector<64x64xf32> to vector<64xf32>
    %38 = vector.shape_cast %37 : vector<64xf32> to vector<64x1xf32>
    %39 = vector.broadcast %38 : vector<64x1xf32> to vector<64x64xf32>
    %40 = arith.subf %36, %39 : vector<64x64xf32>
    %41 = math.exp %40 : vector<64x64xf32>
    %cst_25 = arith.constant dense<0.000000e+00> : vector<64xf32>
    %42 = vector.multi_reduction <add>, %41, %cst_25 [1] : vector<64x64xf32> to vector<64xf32>
    %43 = vector.shape_cast %42 : vector<64xf32> to vector<64x1xf32>
    %cst_26 = arith.constant dense<0.000000e+00> : vector<64x32xf32>
    %44 = tpu.matmul %41, %29, %cst_26 {dimension_numbers = #tpu.dot_dimension_numbers<[1], [0], [0], [1], [0, 0, 1, 1], [], []>} : vector<64x64xf32>, vector<64x32xf32>, vector<64x32xf32> -> vector<64x32xf32>
    %45 = tpu.reciprocal %43 {approx = true} : vector<64x1xf32> -> vector<64x1xf32>
    %46 = vector.broadcast %45 : vector<64x1xf32> to vector<64x32xf32>
    %47 = arith.mulf %44, %46 : vector<64x32xf32>
    %cst_27 = arith.constant dense<0.000000e+00> : vector<16x64xf32>
    %48 = tpu.matmul %32, %28, %cst_27 {dimension_numbers = #tpu.dot_dimension_numbers<[1], [1], [0], [0], [0, 0, 1, 0], [], []>} : vector<16x32xf32>, vector<64x32xf32>, vector<16x64xf32> -> vector<16x64xf32>
    %49 = arith.addf %48, %23 : vector<16x64xf32>
    %50 = arith.mulf %32, %33 : vector<16x32xf32>
    %cst_28 = arith.constant dense<0.000000e+00> : vector<16xf32>
    %51 = vector.multi_reduction <add>, %50, %cst_28 [1] : vector<16x32xf32> to vector<16xf32>
    %52 = vector.shape_cast %51 : vector<16xf32> to vector<16x1xf32>
    %cst_29 = arith.constant dense<0xFF800000> : vector<16xf32>
    %53 = vector.multi_reduction <maximumf>, %49, %cst_29 [1] : vector<16x64xf32> to vector<16xf32>
    %54 = vector.shape_cast %53 : vector<16xf32> to vector<16x1xf32>
    %55 = arith.maximumf %54, %52 : vector<16x1xf32>
    %56 = vector.broadcast %55 : vector<16x1xf32> to vector<16x64xf32>
    %57 = arith.subf %49, %56 : vector<16x64xf32>
    %58 = math.exp %57 : vector<16x64xf32>
    %59 = arith.subf %52, %55 : vector<16x1xf32>
    %60 = math.exp %59 : vector<16x1xf32>
    %cst_30 = arith.constant dense<0.000000e+00> : vector<16xf32>
    %61 = vector.multi_reduction <add>, %58, %cst_30 [1] : vector<16x64xf32> to vector<16xf32>
    %62 = vector.shape_cast %61 : vector<16xf32> to vector<16x1xf32>
    %63 = arith.addf %62, %60 : vector<16x1xf32>
    %cst_31 = arith.constant dense<0.000000e+00> : vector<16x32xf32>
    %64 = tpu.matmul %58, %29, %cst_31 {dimension_numbers = #tpu.dot_dimension_numbers<[1], [0], [0], [1], [0, 0, 1, 1], [], []>} : vector<16x64xf32>, vector<64x32xf32>, vector<16x32xf32> -> vector<16x32xf32>
    %65 = vector.broadcast %60 : vector<16x1xf32> to vector<16x32xf32>
    %66 = arith.mulf %65, %34 : vector<16x32xf32>
    %67 = arith.addf %64, %66 : vector<16x32xf32>
    %68 = tpu.reciprocal %63 {approx = true} : vector<16x1xf32> -> vector<16x1xf32>
    %69 = vector.broadcast %68 : vector<16x1xf32> to vector<16x32xf32>
    %70 = arith.mulf %67, %69 : vector<16x32xf32>
    %cst_32 = arith.constant dense<0.000000e+00> : vector<16x16xf32>
    %71 = tpu.matmul %32, %33, %cst_32 {dimension_numbers = #tpu.dot_dimension_numbers<[1], [1], [0], [0], [0, 0, 1, 0], [], []>} : vector<16x32xf32>, vector<16x32xf32>, vector<16x16xf32> -> vector<16x16xf32>
    %72 = arith.addf %71, %24 : vector<16x16xf32>
    %cst_33 = arith.constant dense<0xFF800000> : vector<16xf32>
    %73 = vector.multi_reduction <maximumf>, %72, %cst_33 [1] : vector<16x16xf32> to vector<16xf32>
    %74 = vector.shape_cast %73 : vector<16xf32> to vector<16x1xf32>
    %75 = vector.broadcast %74 : vector<16x1xf32> to vector<16x16xf32>
    %76 = arith.subf %72, %75 : vector<16x16xf32>
    %77 = math.exp %76 : vector<16x16xf32>
    %cst_34 = arith.constant dense<0.000000e+00> : vector<16xf32>
    %78 = vector.multi_reduction <add>, %77, %cst_34 [1] : vector<16x16xf32> to vector<16xf32>
    %79 = vector.shape_cast %78 : vector<16xf32> to vector<16x1xf32>
    %cst_35 = arith.constant dense<0.000000e+00> : vector<16x32xf32>
    %80 = tpu.matmul %77, %70, %cst_35 {dimension_numbers = #tpu.dot_dimension_numbers<[1], [0], [0], [1], [0, 0, 1, 1], [], []>} : vector<16x16xf32>, vector<16x32xf32>, vector<16x32xf32> -> vector<16x32xf32>
    %81 = tpu.reciprocal %79 {approx = true} : vector<16x1xf32> -> vector<16x1xf32>
    %82 = vector.broadcast %81 : vector<16x1xf32> to vector<16x32xf32>
    %83 = arith.mulf %80, %82 : vector<16x32xf32>
    %84 = vector.extract_strided_slice %15 {offsets = [0, 32], sizes = [64, 32], strides = [1, 1]} : vector<64x384xf32> to vector<64x32xf32>
    %cst_36 = arith.constant 0.176776692 : f32
    %85 = vector.broadcast %cst_36 : f32 to vector<64x32xf32>
    %86 = arith.mulf %84, %85 : vector<64x32xf32>
    %87 = vector.extract_strided_slice %15 {offsets = [0, 160], sizes = [64, 32], strides = [1, 1]} : vector<64x384xf32> to vector<64x32xf32>
    %88 = vector.extract_strided_slice %15 {offsets = [0, 288], sizes = [64, 32], strides = [1, 1]} : vector<64x384xf32> to vector<64x32xf32>
    %89 = vector.extract_strided_slice %17 {offsets = [0, 32], sizes = [16, 32], strides = [1, 1]} : vector<16x384xf32> to vector<16x32xf32>
    %cst_37 = arith.constant 0.176776692 : f32
    %90 = vector.broadcast %cst_37 : f32 to vector<16x32xf32>
    %91 = arith.mulf %89, %90 : vector<16x32xf32>
    %92 = vector.extract_strided_slice %17 {offsets = [0, 160], sizes = [16, 32], strides = [1, 1]} : vector<16x384xf32> to vector<16x32xf32>
    %93 = vector.extract_strided_slice %17 {offsets = [0, 288], sizes = [16, 32], strides = [1, 1]} : vector<16x384xf32> to vector<16x32xf32>
    %cst_38 = arith.constant dense<0.000000e+00> : vector<64x64xf32>
    %94 = tpu.matmul %86, %87, %cst_38 {dimension_numbers = #tpu.dot_dimension_numbers<[1], [1], [0], [0], [0, 0, 1, 0], [], []>} : vector<64x32xf32>, vector<64x32xf32>, vector<64x64xf32> -> vector<64x64xf32>
    %95 = arith.addf %94, %22 : vector<64x64xf32>
    %cst_39 = arith.constant dense<0xFF800000> : vector<64xf32>
    %96 = vector.multi_reduction <maximumf>, %95, %cst_39 [1] : vector<64x64xf32> to vector<64xf32>
    %97 = vector.shape_cast %96 : vector<64xf32> to vector<64x1xf32>
    %98 = vector.broadcast %97 : vector<64x1xf32> to vector<64x64xf32>
    %99 = arith.subf %95, %98 : vector<64x64xf32>
    %100 = math.exp %99 : vector<64x64xf32>
    %cst_40 = arith.constant dense<0.000000e+00> : vector<64xf32>
    %101 = vector.multi_reduction <add>, %100, %cst_40 [1] : vector<64x64xf32> to vector<64xf32>
    %102 = vector.shape_cast %101 : vector<64xf32> to vector<64x1xf32>
    %cst_41 = arith.constant dense<0.000000e+00> : vector<64x32xf32>
    %103 = tpu.matmul %100, %88, %cst_41 {dimension_numbers = #tpu.dot_dimension_numbers<[1], [0], [0], [1], [0, 0, 1, 1], [], []>} : vector<64x64xf32>, vector<64x32xf32>, vector<64x32xf32> -> vector<64x32xf32>
    %104 = tpu.reciprocal %102 {approx = true} : vector<64x1xf32> -> vector<64x1xf32>
    %105 = vector.broadcast %104 : vector<64x1xf32> to vector<64x32xf32>
    %106 = arith.mulf %103, %105 : vector<64x32xf32>
    %cst_42 = arith.constant dense<0.000000e+00> : vector<16x64xf32>
    %107 = tpu.matmul %91, %87, %cst_42 {dimension_numbers = #tpu.dot_dimension_numbers<[1], [1], [0], [0], [0, 0, 1, 0], [], []>} : vector<16x32xf32>, vector<64x32xf32>, vector<16x64xf32> -> vector<16x64xf32>
    %108 = arith.addf %107, %23 : vector<16x64xf32>
    %109 = arith.mulf %91, %92 : vector<16x32xf32>
    %cst_43 = arith.constant dense<0.000000e+00> : vector<16xf32>
    %110 = vector.multi_reduction <add>, %109, %cst_43 [1] : vector<16x32xf32> to vector<16xf32>
    %111 = vector.shape_cast %110 : vector<16xf32> to vector<16x1xf32>
    %cst_44 = arith.constant dense<0xFF800000> : vector<16xf32>
    %112 = vector.multi_reduction <maximumf>, %108, %cst_44 [1] : vector<16x64xf32> to vector<16xf32>
    %113 = vector.shape_cast %112 : vector<16xf32> to vector<16x1xf32>
    %114 = arith.maximumf %113, %111 : vector<16x1xf32>
    %115 = vector.broadcast %114 : vector<16x1xf32> to vector<16x64xf32>
    %116 = arith.subf %108, %115 : vector<16x64xf32>
    %117 = math.exp %116 : vector<16x64xf32>
    %118 = arith.subf %111, %114 : vector<16x1xf32>
    %119 = math.exp %118 : vector<16x1xf32>
    %cst_45 = arith.constant dense<0.000000e+00> : vector<16xf32>
    %120 = vector.multi_reduction <add>, %117, %cst_45 [1] : vector<16x64xf32> to vector<16xf32>
    %121 = vector.shape_cast %120 : vector<16xf32> to vector<16x1xf32>
    %122 = arith.addf %121, %119 : vector<16x1xf32>
    %cst_46 = arith.constant dense<0.000000e+00> : vector<16x32xf32>
    %123 = tpu.matmul %117, %88, %cst_46 {dimension_numbers = #tpu.dot_dimension_numbers<[1], [0], [0], [1], [0, 0, 1, 1], [], []>} : vector<16x64xf32>, vector<64x32xf32>, vector<16x32xf32> -> vector<16x32xf32>
    %124 = vector.broadcast %119 : vector<16x1xf32> to vector<16x32xf32>
    %125 = arith.mulf %124, %93 : vector<16x32xf32>
    %126 = arith.addf %123, %125 : vector<16x32xf32>
    %127 = tpu.reciprocal %122 {approx = true} : vector<16x1xf32> -> vector<16x1xf32>
    %128 = vector.broadcast %127 : vector<16x1xf32> to vector<16x32xf32>
    %129 = arith.mulf %126, %128 : vector<16x32xf32>
    %cst_47 = arith.constant dense<0.000000e+00> : vector<16x16xf32>
    %130 = tpu.matmul %91, %92, %cst_47 {dimension_numbers = #tpu.dot_dimension_numbers<[1], [1], [0], [0], [0, 0, 1, 0], [], []>} : vector<16x32xf32>, vector<16x32xf32>, vector<16x16xf32> -> vector<16x16xf32>
    %131 = arith.addf %130, %24 : vector<16x16xf32>
    %cst_48 = arith.constant dense<0xFF800000> : vector<16xf32>
    %132 = vector.multi_reduction <maximumf>, %131, %cst_48 [1] : vector<16x16xf32> to vector<16xf32>
    %133 = vector.shape_cast %132 : vector<16xf32> to vector<16x1xf32>
    %134 = vector.broadcast %133 : vector<16x1xf32> to vector<16x16xf32>
    %135 = arith.subf %131, %134 : vector<16x16xf32>
    %136 = math.exp %135 : vector<16x16xf32>
    %cst_49 = arith.constant dense<0.000000e+00> : vector<16xf32>
    %137 = vector.multi_reduction <add>, %136, %cst_49 [1] : vector<16x16xf32> to vector<16xf32>
    %138 = vector.shape_cast %137 : vector<16xf32> to vector<16x1xf32>
    %cst_50 = arith.constant dense<0.000000e+00> : vector<16x32xf32>
    %139 = tpu.matmul %136, %129, %cst_50 {dimension_numbers = #tpu.dot_dimension_numbers<[1], [0], [0], [1], [0, 0, 1, 1], [], []>} : vector<16x16xf32>, vector<16x32xf32>, vector<16x32xf32> -> vector<16x32xf32>
    %140 = tpu.reciprocal %138 {approx = true} : vector<16x1xf32> -> vector<16x1xf32>
    %141 = vector.broadcast %140 : vector<16x1xf32> to vector<16x32xf32>
    %142 = arith.mulf %139, %141 : vector<16x32xf32>
    %143 = vector.extract_strided_slice %15 {offsets = [0, 64], sizes = [64, 32], strides = [1, 1]} : vector<64x384xf32> to vector<64x32xf32>
    %cst_51 = arith.constant 0.176776692 : f32
    %144 = vector.broadcast %cst_51 : f32 to vector<64x32xf32>
    %145 = arith.mulf %143, %144 : vector<64x32xf32>
    %146 = vector.extract_strided_slice %15 {offsets = [0, 192], sizes = [64, 32], strides = [1, 1]} : vector<64x384xf32> to vector<64x32xf32>
    %147 = vector.extract_strided_slice %15 {offsets = [0, 320], sizes = [64, 32], strides = [1, 1]} : vector<64x384xf32> to vector<64x32xf32>
    %148 = vector.extract_strided_slice %17 {offsets = [0, 64], sizes = [16, 32], strides = [1, 1]} : vector<16x384xf32> to vector<16x32xf32>
    %cst_52 = arith.constant 0.176776692 : f32
    %149 = vector.broadcast %cst_52 : f32 to vector<16x32xf32>
    %150 = arith.mulf %148, %149 : vector<16x32xf32>
    %151 = vector.extract_strided_slice %17 {offsets = [0, 192], sizes = [16, 32], strides = [1, 1]} : vector<16x384xf32> to vector<16x32xf32>
    %152 = vector.extract_strided_slice %17 {offsets = [0, 320], sizes = [16, 32], strides = [1, 1]} : vector<16x384xf32> to vector<16x32xf32>
    %cst_53 = arith.constant dense<0.000000e+00> : vector<64x64xf32>
    %153 = tpu.matmul %145, %146, %cst_53 {dimension_numbers = #tpu.dot_dimension_numbers<[1], [1], [0], [0], [0, 0, 1, 0], [], []>} : vector<64x32xf32>, vector<64x32xf32>, vector<64x64xf32> -> vector<64x64xf32>
    %154 = arith.addf %153, %22 : vector<64x64xf32>
    %cst_54 = arith.constant dense<0xFF800000> : vector<64xf32>
    %155 = vector.multi_reduction <maximumf>, %154, %cst_54 [1] : vector<64x64xf32> to vector<64xf32>
    %156 = vector.shape_cast %155 : vector<64xf32> to vector<64x1xf32>
    %157 = vector.broadcast %156 : vector<64x1xf32> to vector<64x64xf32>
    %158 = arith.subf %154, %157 : vector<64x64xf32>
    %159 = math.exp %158 : vector<64x64xf32>
    %cst_55 = arith.constant dense<0.000000e+00> : vector<64xf32>
    %160 = vector.multi_reduction <add>, %159, %cst_55 [1] : vector<64x64xf32> to vector<64xf32>
    %161 = vector.shape_cast %160 : vector<64xf32> to vector<64x1xf32>
    %cst_56 = arith.constant dense<0.000000e+00> : vector<64x32xf32>
    %162 = tpu.matmul %159, %147, %cst_56 {dimension_numbers = #tpu.dot_dimension_numbers<[1], [0], [0], [1], [0, 0, 1, 1], [], []>} : vector<64x64xf32>, vector<64x32xf32>, vector<64x32xf32> -> vector<64x32xf32>
    %163 = tpu.reciprocal %161 {approx = true} : vector<64x1xf32> -> vector<64x1xf32>
    %164 = vector.broadcast %163 : vector<64x1xf32> to vector<64x32xf32>
    %165 = arith.mulf %162, %164 : vector<64x32xf32>
    %cst_57 = arith.constant dense<0.000000e+00> : vector<16x64xf32>
    %166 = tpu.matmul %150, %146, %cst_57 {dimension_numbers = #tpu.dot_dimension_numbers<[1], [1], [0], [0], [0, 0, 1, 0], [], []>} : vector<16x32xf32>, vector<64x32xf32>, vector<16x64xf32> -> vector<16x64xf32>
    %167 = arith.addf %166, %23 : vector<16x64xf32>
    %168 = arith.mulf %150, %151 : vector<16x32xf32>
    %cst_58 = arith.constant dense<0.000000e+00> : vector<16xf32>
    %169 = vector.multi_reduction <add>, %168, %cst_58 [1] : vector<16x32xf32> to vector<16xf32>
    %170 = vector.shape_cast %169 : vector<16xf32> to vector<16x1xf32>
    %cst_59 = arith.constant dense<0xFF800000> : vector<16xf32>
    %171 = vector.multi_reduction <maximumf>, %167, %cst_59 [1] : vector<16x64xf32> to vector<16xf32>
    %172 = vector.shape_cast %171 : vector<16xf32> to vector<16x1xf32>
    %173 = arith.maximumf %172, %170 : vector<16x1xf32>
    %174 = vector.broadcast %173 : vector<16x1xf32> to vector<16x64xf32>
    %175 = arith.subf %167, %174 : vector<16x64xf32>
    %176 = math.exp %175 : vector<16x64xf32>
    %177 = arith.subf %170, %173 : vector<16x1xf32>
    %178 = math.exp %177 : vector<16x1xf32>
    %cst_60 = arith.constant dense<0.000000e+00> : vector<16xf32>
    %179 = vector.multi_reduction <add>, %176, %cst_60 [1] : vector<16x64xf32> to vector<16xf32>
    %180 = vector.shape_cast %179 : vector<16xf32> to vector<16x1xf32>
    %181 = arith.addf %180, %178 : vector<16x1xf32>
    %cst_61 = arith.constant dense<0.000000e+00> : vector<16x32xf32>
    %182 = tpu.matmul %176, %147, %cst_61 {dimension_numbers = #tpu.dot_dimension_numbers<[1], [0], [0], [1], [0, 0, 1, 1], [], []>} : vector<16x64xf32>, vector<64x32xf32>, vector<16x32xf32> -> vector<16x32xf32>
    %183 = vector.broadcast %178 : vector<16x1xf32> to vector<16x32xf32>
    %184 = arith.mulf %183, %152 : vector<16x32xf32>
    %185 = arith.addf %182, %184 : vector<16x32xf32>
    %186 = tpu.reciprocal %181 {approx = true} : vector<16x1xf32> -> vector<16x1xf32>
    %187 = vector.broadcast %186 : vector<16x1xf32> to vector<16x32xf32>
    %188 = arith.mulf %185, %187 : vector<16x32xf32>
    %cst_62 = arith.constant dense<0.000000e+00> : vector<16x16xf32>
    %189 = tpu.matmul %150, %151, %cst_62 {dimension_numbers = #tpu.dot_dimension_numbers<[1], [1], [0], [0], [0, 0, 1, 0], [], []>} : vector<16x32xf32>, vector<16x32xf32>, vector<16x16xf32> -> vector<16x16xf32>
    %190 = arith.addf %189, %24 : vector<16x16xf32>
    %cst_63 = arith.constant dense<0xFF800000> : vector<16xf32>
    %191 = vector.multi_reduction <maximumf>, %190, %cst_63 [1] : vector<16x16xf32> to vector<16xf32>
    %192 = vector.shape_cast %191 : vector<16xf32> to vector<16x1xf32>
    %193 = vector.broadcast %192 : vector<16x1xf32> to vector<16x16xf32>
    %194 = arith.subf %190, %193 : vector<16x16xf32>
    %195 = math.exp %194 : vector<16x16xf32>
    %cst_64 = arith.constant dense<0.000000e+00> : vector<16xf32>
    %196 = vector.multi_reduction <add>, %195, %cst_64 [1] : vector<16x16xf32> to vector<16xf32>
    %197 = vector.shape_cast %196 : vector<16xf32> to vector<16x1xf32>
    %cst_65 = arith.constant dense<0.000000e+00> : vector<16x32xf32>
    %198 = tpu.matmul %195, %188, %cst_65 {dimension_numbers = #tpu.dot_dimension_numbers<[1], [0], [0], [1], [0, 0, 1, 1], [], []>} : vector<16x16xf32>, vector<16x32xf32>, vector<16x32xf32> -> vector<16x32xf32>
    %199 = tpu.reciprocal %197 {approx = true} : vector<16x1xf32> -> vector<16x1xf32>
    %200 = vector.broadcast %199 : vector<16x1xf32> to vector<16x32xf32>
    %201 = arith.mulf %198, %200 : vector<16x32xf32>
    %202 = vector.extract_strided_slice %15 {offsets = [0, 96], sizes = [64, 32], strides = [1, 1]} : vector<64x384xf32> to vector<64x32xf32>
    %cst_66 = arith.constant 0.176776692 : f32
    %203 = vector.broadcast %cst_66 : f32 to vector<64x32xf32>
    %204 = arith.mulf %202, %203 : vector<64x32xf32>
    %205 = vector.extract_strided_slice %15 {offsets = [0, 224], sizes = [64, 32], strides = [1, 1]} : vector<64x384xf32> to vector<64x32xf32>
    %206 = vector.extract_strided_slice %15 {offsets = [0, 352], sizes = [64, 32], strides = [1, 1]} : vector<64x384xf32> to vector<64x32xf32>
    %207 = vector.extract_strided_slice %17 {offsets = [0, 96], sizes = [16, 32], strides = [1, 1]} : vector<16x384xf32> to vector<16x32xf32>
    %cst_67 = arith.constant 0.176776692 : f32
    %208 = vector.broadcast %cst_67 : f32 to vector<16x32xf32>
    %209 = arith.mulf %207, %208 : vector<16x32xf32>
    %210 = vector.extract_strided_slice %17 {offsets = [0, 224], sizes = [16, 32], strides = [1, 1]} : vector<16x384xf32> to vector<16x32xf32>
    %211 = vector.extract_strided_slice %17 {offsets = [0, 352], sizes = [16, 32], strides = [1, 1]} : vector<16x384xf32> to vector<16x32xf32>
    %cst_68 = arith.constant dense<0.000000e+00> : vector<64x64xf32>
    %212 = tpu.matmul %204, %205, %cst_68 {dimension_numbers = #tpu.dot_dimension_numbers<[1], [1], [0], [0], [0, 0, 1, 0], [], []>} : vector<64x32xf32>, vector<64x32xf32>, vector<64x64xf32> -> vector<64x64xf32>
    %213 = arith.addf %212, %22 : vector<64x64xf32>
    %cst_69 = arith.constant dense<0xFF800000> : vector<64xf32>
    %214 = vector.multi_reduction <maximumf>, %213, %cst_69 [1] : vector<64x64xf32> to vector<64xf32>
    %215 = vector.shape_cast %214 : vector<64xf32> to vector<64x1xf32>
    %216 = vector.broadcast %215 : vector<64x1xf32> to vector<64x64xf32>
    %217 = arith.subf %213, %216 : vector<64x64xf32>
    %218 = math.exp %217 : vector<64x64xf32>
    %cst_70 = arith.constant dense<0.000000e+00> : vector<64xf32>
    %219 = vector.multi_reduction <add>, %218, %cst_70 [1] : vector<64x64xf32> to vector<64xf32>
    %220 = vector.shape_cast %219 : vector<64xf32> to vector<64x1xf32>
    %cst_71 = arith.constant dense<0.000000e+00> : vector<64x32xf32>
    %221 = tpu.matmul %218, %206, %cst_71 {dimension_numbers = #tpu.dot_dimension_numbers<[1], [0], [0], [1], [0, 0, 1, 1], [], []>} : vector<64x64xf32>, vector<64x32xf32>, vector<64x32xf32> -> vector<64x32xf32>
    %222 = tpu.reciprocal %220 {approx = true} : vector<64x1xf32> -> vector<64x1xf32>
    %223 = vector.broadcast %222 : vector<64x1xf32> to vector<64x32xf32>
    %224 = arith.mulf %221, %223 : vector<64x32xf32>
    %cst_72 = arith.constant dense<0.000000e+00> : vector<16x64xf32>
    %225 = tpu.matmul %209, %205, %cst_72 {dimension_numbers = #tpu.dot_dimension_numbers<[1], [1], [0], [0], [0, 0, 1, 0], [], []>} : vector<16x32xf32>, vector<64x32xf32>, vector<16x64xf32> -> vector<16x64xf32>
    %226 = arith.addf %225, %23 : vector<16x64xf32>
    %227 = arith.mulf %209, %210 : vector<16x32xf32>
    %cst_73 = arith.constant dense<0.000000e+00> : vector<16xf32>
    %228 = vector.multi_reduction <add>, %227, %cst_73 [1] : vector<16x32xf32> to vector<16xf32>
    %229 = vector.shape_cast %228 : vector<16xf32> to vector<16x1xf32>
    %cst_74 = arith.constant dense<0xFF800000> : vector<16xf32>
    %230 = vector.multi_reduction <maximumf>, %226, %cst_74 [1] : vector<16x64xf32> to vector<16xf32>
    %231 = vector.shape_cast %230 : vector<16xf32> to vector<16x1xf32>
    %232 = arith.maximumf %231, %229 : vector<16x1xf32>
    %233 = vector.broadcast %232 : vector<16x1xf32> to vector<16x64xf32>
    %234 = arith.subf %226, %233 : vector<16x64xf32>
    %235 = math.exp %234 : vector<16x64xf32>
    %236 = arith.subf %229, %232 : vector<16x1xf32>
    %237 = math.exp %236 : vector<16x1xf32>
    %cst_75 = arith.constant dense<0.000000e+00> : vector<16xf32>
    %238 = vector.multi_reduction <add>, %235, %cst_75 [1] : vector<16x64xf32> to vector<16xf32>
    %239 = vector.shape_cast %238 : vector<16xf32> to vector<16x1xf32>
    %240 = arith.addf %239, %237 : vector<16x1xf32>
    %cst_76 = arith.constant dense<0.000000e+00> : vector<16x32xf32>
    %241 = tpu.matmul %235, %206, %cst_76 {dimension_numbers = #tpu.dot_dimension_numbers<[1], [0], [0], [1], [0, 0, 1, 1], [], []>} : vector<16x64xf32>, vector<64x32xf32>, vector<16x32xf32> -> vector<16x32xf32>
    %242 = vector.broadcast %237 : vector<16x1xf32> to vector<16x32xf32>
    %243 = arith.mulf %242, %211 : vector<16x32xf32>
    %244 = arith.addf %241, %243 : vector<16x32xf32>
    %245 = tpu.reciprocal %240 {approx = true} : vector<16x1xf32> -> vector<16x1xf32>
    %246 = vector.broadcast %245 : vector<16x1xf32> to vector<16x32xf32>
    %247 = arith.mulf %244, %246 : vector<16x32xf32>
    %cst_77 = arith.constant dense<0.000000e+00> : vector<16x16xf32>
    %248 = tpu.matmul %209, %210, %cst_77 {dimension_numbers = #tpu.dot_dimension_numbers<[1], [1], [0], [0], [0, 0, 1, 0], [], []>} : vector<16x32xf32>, vector<16x32xf32>, vector<16x16xf32> -> vector<16x16xf32>
    %249 = arith.addf %248, %24 : vector<16x16xf32>
    %cst_78 = arith.constant dense<0xFF800000> : vector<16xf32>
    %250 = vector.multi_reduction <maximumf>, %249, %cst_78 [1] : vector<16x16xf32> to vector<16xf32>
    %251 = vector.shape_cast %250 : vector<16xf32> to vector<16x1xf32>
    %252 = vector.broadcast %251 : vector<16x1xf32> to vector<16x16xf32>
    %253 = arith.subf %249, %252 : vector<16x16xf32>
    %254 = math.exp %253 : vector<16x16xf32>
    %cst_79 = arith.constant dense<0.000000e+00> : vector<16xf32>
    %255 = vector.multi_reduction <add>, %254, %cst_79 [1] : vector<16x16xf32> to vector<16xf32>
    %256 = vector.shape_cast %255 : vector<16xf32> to vector<16x1xf32>
    %cst_80 = arith.constant dense<0.000000e+00> : vector<16x32xf32>
    %257 = tpu.matmul %254, %247, %cst_80 {dimension_numbers = #tpu.dot_dimension_numbers<[1], [0], [0], [1], [0, 0, 1, 1], [], []>} : vector<16x16xf32>, vector<16x32xf32>, vector<16x32xf32> -> vector<16x32xf32>
    %258 = tpu.reciprocal %256 {approx = true} : vector<16x1xf32> -> vector<16x1xf32>
    %259 = vector.broadcast %258 : vector<16x1xf32> to vector<16x32xf32>
    %260 = arith.mulf %257, %259 : vector<16x32xf32>
    %261 = tpu.concatenate %47, %106, %165, %224 in 1 : vector<64x32xf32>, vector<64x32xf32>, vector<64x32xf32>, vector<64x32xf32> -> vector<64x128xf32>
    %c0_81 = arith.constant 0 : index
    %c0_82 = arith.constant 0 : index
    %262 = vector.load %arg4[%c0_81, %c0_82] : memref<128x128xf32, #tpu.memory_space<vmem>>, vector<128x128xf32>
    %cst_83 = arith.constant dense<0.000000e+00> : vector<64x128xf32>
    %263 = tpu.matmul %261, %262, %cst_83 {dimension_numbers = #tpu.dot_dimension_numbers<[1], [0], [0], [1], [0, 0, 1, 1], [], []>} : vector<64x128xf32>, vector<128x128xf32>, vector<64x128xf32> -> vector<64x128xf32>
    %c0_84 = arith.constant 0 : index
    %c0_85 = arith.constant 0 : index
    %264 = vector.load %arg9[%c0_84, %c0_85] : memref<64x128xf32, #tpu.memory_space<vmem>>, vector<64x128xf32>
    tpu.vector_store %arg9[%c0_84, %c0_85], %263 {strides = array<i32>} : memref<64x128xf32, #tpu.memory_space<vmem>>, vector<64x128xf32>,
    %265 = tpu.concatenate %83, %142, %201, %260 in 1 : vector<16x32xf32>, vector<16x32xf32>, vector<16x32xf32>, vector<16x32xf32> -> vector<16x128xf32>
    %c0_86 = arith.constant 0 : index
    %c0_87 = arith.constant 0 : index
    %266 = vector.load %arg12[%c0_86, %c0_87] : memref<16x128xf32, #tpu.memory_space<vmem>>, vector<16x128xf32>
    tpu.vector_store %arg12[%c0_86, %c0_87], %265 {strides = array<i32>} : memref<16x128xf32, #tpu.memory_space<vmem>>, vector<16x128xf32>,
    return
  }
  func.func @transform_0(%arg0: i32) -> (i32, i32) {
    %c0_i32 = arith.constant 0 : i32
    %c0_i32_0 = arith.constant 0 : i32
    return %arg0, %c0_i32 : i32, i32
  }
  func.func @transform_1(%arg0: i32) -> (i32, i32) {
    %c0_i32 = arith.constant 0 : i32
    %c0_i32_0 = arith.constant 0 : i32
    %c0_i32_1 = arith.constant 0 : i32
    return %c0_i32, %c0_i32_0 : i32, i32
  }
  func.func @transform_2(%arg0: i32) -> (i32, i32) {
    %c0_i32 = arith.constant 0 : i32
    %c0_i32_0 = arith.constant 0 : i32
    %c0_i32_1 = arith.constant 0 : i32
    return %c0_i32, %c0_i32_0 : i32, i32
  }
  func.func @transform_3(%arg0: i32) -> (i32, i32) {
    %c0_i32 = arith.constant 0 : i32
    %c0_i32_0 = arith.constant 0 : i32
    %c0_i32_1 = arith.constant 0 : i32
    return %c0_i32, %c0_i32_0 : i32, i32
  }
  func.func @transform_4(%arg0: i32) -> (i32, i32) {
    %c0_i32 = arith.constant 0 : i32
    %c0_i32_0 = arith.constant 0 : i32
    %c0_i32_1 = arith.constant 0 : i32
    return %c0_i32, %c0_i32_0 : i32, i32
  }
  func.func @transform_5(%arg0: i32) -> (i32, i32) {
    %c0_i32 = arith.constant 0 : i32
    %c0_i32_0 = arith.constant 0 : i32
    %c0_i32_1 = arith.constant 0 : i32
    return %c0_i32, %c0_i32_0 : i32, i32
  }
  func.func @transform_6(%arg0: i32) -> (i32, i32) {
    %c0_i32 = arith.constant 0 : i32
    %c0_i32_0 = arith.constant 0 : i32
    %c0_i32_1 = arith.constant 0 : i32
    return %c0_i32, %c0_i32_0 : i32, i32
  }
  func.func @transform_7(%arg0: i32) -> (i32, i32) {
    %c0_i32 = arith.constant 0 : i32
    %c0_i32_0 = arith.constant 0 : i32
    %c0_i32_1 = arith.constant 0 : i32
    return %c0_i32, %c0_i32_0 : i32, i32
  }
  func.func @transform_8(%arg0: i32) -> (i32, i32) {
    %c0_i32 = arith.constant 0 : i32
    %c0_i32_0 = arith.constant 0 : i32
    return %arg0, %c0_i32 : i32, i32
  }
  func.func @transform_9(%arg0: i32) -> (i32, i32) {
    %c0_i32 = arith.constant 0 : i32
    %c0_i32_0 = arith.constant 0 : i32
    return %arg0, %c0_i32 : i32, i32
  }
  func.func @transform_10(%arg0: i32) -> (i32, i32) {
    %c0_i32 = arith.constant 0 : i32
    %c0_i32_0 = arith.constant 0 : i32
    return %arg0, %c0_i32 : i32, i32
  }
  func.func @transform_11(%arg0: i32) -> (i32, i32) {
    %c0_i32 = arith.constant 0 : i32
    %c0_i32_0 = arith.constant 0 : i32
    return %arg0, %c0_i32 : i32, i32
  }
}

</mosaic_0001>

<llo_original>
// kernel: block_forward.1
$region0: #{block_forward.1}
  #allocation0 [shape = 'u32[]', space=smem, size = 0x4, offset = 0x4, fixed_abs, tag = 'smem constant byte address 0x4 - core index']
  #allocation1 [shape = 'u32[144,128]{1,0:T(1,128)}', space=vmem, size = 0x12000, scoped, tag = 'internal scratch']
  %s0 = inlined_call_operand.hbm [shape: f32[128,128], index: 0, kind: input, shape index: {}]
  %s1 = inlined_call_operand.vmem [shape: f32[1,128], index: 1, kind: input, shape index: {}]
  %s2 = inlined_call_operand.hbm [shape: f32[128,384], index: 2, kind: input, shape index: {}]
  %s3 = inlined_call_operand.hbm [shape: f32[128,128], index: 3, kind: input, shape index: {}]
  %s4 = inlined_call_operand.hbm [shape: f32[16,64], index: 4, kind: input, shape index: {}]
  %s5 = inlined_call_operand.hbm [shape: f32[64,64], index: 5, kind: input, shape index: {}]
  %s6 = inlined_call_operand.hbm [shape: f32[16,64], index: 6, kind: input, shape index: {}]
  %s7 = inlined_call_operand.vmem [shape: f32[16,16], index: 7, kind: input, shape index: {}]
  %s8 = inlined_call_operand.hbm [shape: f32[128,128], index: 8, kind: output, shape index: {0}]
  %s9 = inlined_call_operand.vmem [shape: f32[32,128], index: 9, kind: output, shape index: {1}]
  %s10 = inlined_call_operand.vmem [shape: f32[32,128], index: 10, kind: output, shape index: {2}]
  %s11 = inlined_call_operand.vmem [shape: f32[32,128], index: 11, kind: output, shape index: {3}]
  %12 = xla_tuple %s8, %s9, %s10, %s11
  %s13 = sld [smem:[#allocation0]]
  $region113: #{block_forward.1} parent=0
    _
  %s15 = ssub.s32 1, %s13
  %s16 = scalar_select 0, %s15, %s13
  $region1: #{block_forward.1} parent=0
    #allocation2 [shape = 'u8[65536]{0}', space=vmem, size = 0x10000, scoped, tag = 'input window, operand 0']
    #allocation3 [shape = 's32[2]{0}', space=sflag, size = 0x8, scoped, tag = 'scoped memory for block_forward.1']
    #allocation4 [shape = 's32[2]{0}', space=sflag, size = 0x8, scoped, tag = 'scoped memory for block_forward.1']
    #allocation5 [shape = 'u8[196608]{0}', space=vmem, size = 0x30000, scoped, tag = 'input window, operand 2, single buffered']
    #allocation6 [shape = 's32[1]{0}', space=sflag, size = 0x4, scoped, tag = 'scoped memory for block_forward.1']
    #allocation7 [shape = 'u8[65536]{0}', space=vmem, size = 0x10000, scoped, tag = 'input window, operand 3, single buffered']
    #allocation8 [shape = 'u8[8192]{0}', space=vmem, size = 0x2000, scoped, tag = 'input window, operand 4, single buffered']
    #allocation9 [shape = 's32[1]{0}', space=sflag, size = 0x4, scoped, tag = 'scoped memory for block_forward.1']
    #allocation10 [shape = 'u8[32768]{0}', space=vmem, size = 0x8000, scoped, tag = 'input window, operand 5, single buffered']
    #allocation11 [shape = 'u8[8192]{0}', space=vmem, size = 0x2000, scoped, tag = 'input window, operand 6, single buffered']
    #allocation12 [shape = 's32[1]{0}', space=sflag, size = 0x4, scoped, tag = 'scoped memory for block_forward.1']
    #allocation13 [shape = 'u8[65536]{0}', space=vmem, size = 0x10000, scoped, tag = 'output window, operand 0']
    %17 = vsyncpa [#allocation3], 0
    %s18 = scalar_lea.sflag [#allocation3], 1
    %19 = vsyncpa %s18, 0
    %20 = vsyncpa [#allocation6], 0
    %21 = vsyncpa [#allocation9], 0
    %22 = vsyncpa [#allocation12], 0
    %23 = vsyncpa [#allocation4], 0
    %s24 = scalar_lea.sflag [#allocation4], 1
    %25 = vsyncpa %s24, 0
    loop: start=0, step=1, limit=4
    $region2: #{block_forward.1} parent=1 // loop_pre_header
      _
    $region3: #{block_forward.1} parent=1 // loop_header
      %s27 = sphi 0, %s31
      %p28 = scmp.ge.s32.totalorder %s27, 4
      %s37 = sphi 0, %s39
      %s40 = sphi 0, %s37
      %s41 = sphi 0, %s40
      %s57 = sphi 0, %s41
      %s61 = sphi 0, %s61
      %s63 = sphi 0, %s61
      %s64 = sphi 0, %s63
      %s78 = sphi 0, %s64
      %s82 = sphi 0, %s82
      %s84 = sphi 0, %s82
      %s85 = sphi 0, %s84
      %s99 = sphi 0, %s85
      %s103 = sphi 0, %s103
      %s105 = sphi 0, %s103
      %s106 = sphi 0, %s105
      %s120 = sphi 0, %s106
      %s124 = sphi 0, %s124
      %s126 = sphi 0, %s124
      %s127 = sphi 0, %s126
      %s141 = sphi 0, %s127
      %s145 = sphi 0, %s145
      %s147 = sphi 0, %s145
      %s148 = sphi 0, %s147
      %s162 = sphi 0, %s148
      %s166 = sphi 0, %s166
      %s168 = sphi 0, %s166
      %s169 = sphi 0, %s168
      %s183 = sphi 0, %s169
      %s187 = sphi 0, %s187
      %s189 = sphi 0, %s187
      %s190 = sphi 0, %s189
      %s204 = sphi 0, %s190
      %s210 = sphi 0, %s212
      %s213 = sphi 0, %s210
      %s214 = sphi 0, %s213
      %s230 = sphi 0, %s214
      %s236 = sphi 0, %s238
      %s239 = sphi 0, %s236
      %s240 = sphi 0, %s239
      %s256 = sphi 0, %s240
      %s262 = sphi 0, %s264
      %s265 = sphi 0, %s262
      %s266 = sphi 0, %s265
      %s282 = sphi 0, %s266
      %s288 = sphi 0, %s290
      %s291 = sphi 0, %s288
      %s292 = sphi 0, %s291
      %s308 = sphi 0, %s292
    $region4: #{block_forward.1} parent=1 // loop_header_branch
      %30 = sbr.rel (%p28) target = $region8
    $region5: #{block_forward.1} parent=1 // loop_body
      %s32 = ssub.s32 %s27, 1
      %s33 = ssub.s32 %s27, 2
      %s34 = sadd.s32 %s27, 1
      %s35 = ssub.s32 %s27, %s34
      %p36 = scmp.eq.s32.totalorder %s35, 0
      %s38 = sadd.s32 %s37, 1
      %s39 = scalar_select %p36, %s37, %s38
      %p42 = pneg %p36
      %p43 = scmp.eq.s32.totalorder %s27, 1
      %p44 = por %p42, %p43
      %p45 = scmp.ne.s32.totalorder %s37, %s40
      %p46 = scmp.eq.s32.totalorder %s27, 0
      %p47 = por %p45, %p46
      %p48 = scmp.ne.s32.totalorder %s37, %s40
      %p49 = scmp.eq.s32.totalorder %s32, 1
      %p50 = por %p48, %p49
      %p51 = scmp.ne.s32.totalorder %s40, %s41
      %p52 = scmp.eq.s32.totalorder %s32, 0
      %p53 = por %p51, %p52
      %p54 = scmp.ne.s32.totalorder %s40, %s41
      %p55 = scmp.eq.s32.totalorder %s33, 1
      %p56 = por %p54, %p55
      %p58 = scmp.ne.s32.totalorder %s41, %s57
      %p59 = scmp.eq.s32.totalorder %s33, 0
      %p60 = por %p58, %p59
      %s62 = sadd.s32 %s61, 1
      %p65 = scmp.eq.s32.totalorder %s27, 1
      %p66 = scmp.ne.s32.totalorder %s61, %s63
      %p67 = scmp.eq.s32.totalorder %s27, 0
      %p68 = por %p66, %p67
      %p69 = scmp.ne.s32.totalorder %s61, %s63
      %p70 = scmp.eq.s32.totalorder %s32, 1
      %p71 = por %p69, %p70
      %p72 = scmp.ne.s32.totalorder %s63, %s64
      %p73 = scmp.eq.s32.totalorder %s32, 0
      %p74 = por %p72, %p73
      %p75 = scmp.ne.s32.totalorder %s63, %s64
      %p76 = scmp.eq.s32.totalorder %s33, 1
      %p77 = por %p75, %p76
      %p79 = scmp.ne.s32.totalorder %s64, %s78
      %p80 = scmp.eq.s32.totalorder %s33, 0
      %p81 = por %p79, %p80
      %s83 = sadd.s32 %s82, 1
      %p86 = scmp.eq.s32.totalorder %s27, 1
      %p87 = scmp.ne.s32.totalorder %s82, %s84
      %p88 = scmp.eq.s32.totalorder %s27, 0
      %p89 = por %p87, %p88
      %p90 = scmp.ne.s32.totalorder %s82, %s84
      %p91 = scmp.eq.s32.totalorder %s32, 1
      %p92 = por %p90, %p91
      %p93 = scmp.ne.s32.totalorder %s84, %s85
      %p94 = scmp.eq.s32.totalorder %s32, 0
      %p95 = por %p93, %p94
      %p96 = scmp.ne.s32.totalorder %s84, %s85
      %p97 = scmp.eq.s32.totalorder %s33, 1
      %p98 = por %p96, %p97
      %p100 = scmp.ne.s32.totalorder %s85, %s99
      %p101 = scmp.eq.s32.totalorder %s33, 0
      %p102 = por %p100, %p101
      %s104 = sadd.s32 %s103, 1
      %p107 = scmp.eq.s32.totalorder %s27, 1
      %p108 = scmp.ne.s32.totalorder %s103, %s105
      %p109 = scmp.eq.s32.totalorder %s27, 0
      %p110 = por %p108, %p109
      %p111 = scmp.ne.s32.totalorder %s103, %s105
      %p112 = scmp.eq.s32.totalorder %s32, 1
      %p113 = por %p111, %p112
      %p114 = scmp.ne.s32.totalorder %s105, %s106
      %p115 = scmp.eq.s32.totalorder %s32, 0
      %p116 = por %p114, %p115
      %p117 = scmp.ne.s32.totalorder %s105, %s106
      %p118 = scmp.eq.s32.totalorder %s33, 1
      %p119 = por %p117, %p118
      %p121 = scmp.ne.s32.totalorder %s106, %s120
      %p122 = scmp.eq.s32.totalorder %s33, 0
      %p123 = por %p121, %p122
      %s125 = sadd.s32 %s124, 1
      %p128 = scmp.eq.s32.totalorder %s27, 1
      %p129 = scmp.ne.s32.totalorder %s124, %s126
      %p130 = scmp.eq.s32.totalorder %s27, 0
      %p131 = por %p129, %p130
      %p132 = scmp.ne.s32.totalorder %s124, %s126
      %p133 = scmp.eq.s32.totalorder %s32, 1
      %p134 = por %p132, %p133
      %p135 = scmp.ne.s32.totalorder %s126, %s127
      %p136 = scmp.eq.s32.totalorder %s32, 0
      %p137 = por %p135, %p136
      %p138 = scmp.ne.s32.totalorder %s126, %s127
      %p139 = scmp.eq.s32.totalorder %s33, 1
      %p140 = por %p138, %p139
      %p142 = scmp.ne.s32.totalorder %s127, %s141
      %p143 = scmp.eq.s32.totalorder %s33, 0
      %p144 = por %p142, %p143
      %s146 = sadd.s32 %s145, 1
      %p149 = scmp.eq.s32.totalorder %s27, 1
      %p150 = scmp.ne.s32.totalorder %s145, %s147
      %p151 = scmp.eq.s32.totalorder %s27, 0
      %p152 = por %p150, %p151
      %p153 = scmp.ne.s32.totalorder %s145, %s147
      %p154 = scmp.eq.s32.totalorder %s32, 1
      %p155 = por %p153, %p154
      %p156 = scmp.ne.s32.totalorder %s147, %s148
      %p157 = scmp.eq.s32.totalorder %s32, 0
      %p158 = por %p156, %p157
      %p159 = scmp.ne.s32.totalorder %s147, %s148
      %p160 = scmp.eq.s32.totalorder %s33, 1
      %p161 = por %p159, %p160
      %p163 = scmp.ne.s32.totalorder %s148, %s162
      %p164 = scmp.eq.s32.totalorder %s33, 0
      %p165 = por %p163, %p164
      %s167 = sadd.s32 %s166, 1
      %p170 = scmp.eq.s32.totalorder %s27, 1
      %p171 = scmp.ne.s32.totalorder %s166, %s168
      %p172 = scmp.eq.s32.totalorder %s27, 0
      %p173 = por %p171, %p172
      %p174 = scmp.ne.s32.totalorder %s166, %s168
      %p175 = scmp.eq.s32.totalorder %s32, 1
      %p176 = por %p174, %p175
      %p177 = scmp.ne.s32.totalorder %s168, %s169
      %p178 = scmp.eq.s32.totalorder %s32, 0
      %p179 = por %p177, %p178
      %p180 = scmp.ne.s32.totalorder %s168, %s169
      %p181 = scmp.eq.s32.totalorder %s33, 1
      %p182 = por %p180, %p181
      %p184 = scmp.ne.s32.totalorder %s169, %s183
      %p185 = scmp.eq.s32.totalorder %s33, 0
      %p186 = por %p184, %p185
      %s188 = sadd.s32 %s187, 1
      %p191 = scmp.eq.s32.totalorder %s27, 1
      %p192 = scmp.ne.s32.totalorder %s187, %s189
      %p193 = scmp.eq.s32.totalorder %s27, 0
      %p194 = por %p192, %p193
      %p195 = scmp.ne.s32.totalorder %s187, %s189
      %p196 = scmp.eq.s32.totalorder %s32, 1
      %p197 = por %p195, %p196
      %p198 = scmp.ne.s32.totalorder %s189, %s190
      %p199 = scmp.eq.s32.totalorder %s32, 0
      %p200 = por %p198, %p199
      %p201 = scmp.ne.s32.totalorder %s189, %s190
      %p202 = scmp.eq.s32.totalorder %s33, 1
      %p203 = por %p201, %p202
      %p205 = scmp.ne.s32.totalorder %s190, %s204
      %p206 = scmp.eq.s32.totalorder %s33, 0
      %p207 = por %p205, %p206
      %s208 = ssub.s32 %s27, %s34
      %p209 = scmp.eq.s32.totalorder %s208, 0
      %s211 = sadd.s32 %s210, 1
      %s212 = scalar_select %p209, %s210, %s211
      %p215 = pneg %p209
      %p216 = scmp.eq.s32.totalorder %s27, 1
      %p217 = por %p215, %p216
      %p218 = scmp.ne.s32.totalorder %s210, %s213
      %p219 = scmp.eq.s32.totalorder %s27, 0
      %p220 = por %p218, %p219
      %p221 = scmp.ne.s32.totalorder %s210, %s213
      %p222 = scmp.eq.s32.totalorder %s32, 1
      %p223 = por %p221, %p222
      %p224 = scmp.ne.s32.totalorder %s213, %s214
      %p225 = scmp.eq.s32.totalorder %s32, 0
      %p226 = por %p224, %p225
      %p227 = scmp.ne.s32.totalorder %s213, %s214
      %p228 = scmp.eq.s32.totalorder %s33, 1
      %p229 = por %p227, %p228
      %p231 = scmp.ne.s32.totalorder %s214, %s230
      %p232 = scmp.eq.s32.totalorder %s33, 0
      %p233 = por %p231, %p232
      %s234 = ssub.s32 %s27, %s34
      %p235 = scmp.eq.s32.totalorder %s234, 0
      %s237 = sadd.s32 %s236, 1
      %s238 = scalar_select %p235, %s236, %s237
      %p241 = pneg %p235
      %p242 = scmp.eq.s32.totalorder %s27, 1
      %p243 = por %p241, %p242
      %p244 = scmp.ne.s32.totalorder %s236, %s239
      %p245 = scmp.eq.s32.totalorder %s27, 0
      %p246 = por %p244, %p245
      %p247 = scmp.ne.s32.totalorder %s236, %s239
      %p248 = scmp.eq.s32.totalorder %s32, 1
      %p249 = por %p247, %p248
      %p250 = scmp.ne.s32.totalorder %s239, %s240
      %p251 = scmp.eq.s32.totalorder %s32, 0
      %p252 = por %p250, %p251
      %p253 = scmp.ne.s32.totalorder %s239, %s240
      %p254 = scmp.eq.s32.totalorder %s33, 1
      %p255 = por %p253, %p254
      %p257 = scmp.ne.s32.totalorder %s240, %s256
      %p258 = scmp.eq.s32.totalorder %s33, 0
      %p259 = por %p257, %p258
      %s260 = ssub.s32 %s27, %s34
      %p261 = scmp.eq.s32.totalorder %s260, 0
      %s263 = sadd.s32 %s262, 1
      %s264 = scalar_select %p261, %s262, %s263
      %p267 = pneg %p261
      %p268 = scmp.eq.s32.totalorder %s27, 1
      %p269 = por %p267, %p268
      %p270 = scmp.ne.s32.totalorder %s262, %s265
      %p271 = scmp.eq.s32.totalorder %s27, 0
      %p272 = por %p270, %p271
      %p273 = scmp.ne.s32.totalorder %s262, %s265
      %p274 = scmp.eq.s32.totalorder %s32, 1
      %p275 = por %p273, %p274
      %p276 = scmp.ne.s32.totalorder %s265, %s266
      %p277 = scmp.eq.s32.totalorder %s32, 0
      %p278 = por %p276, %p277
      %p279 = scmp.ne.s32.totalorder %s265, %s266
      %p280 = scmp.eq.s32.totalorder %s33, 1
      %p281 = por %p279, %p280
      %p283 = scmp.ne.s32.totalorder %s266, %s282
      %p284 = scmp.eq.s32.totalorder %s33, 0
      %p285 = por %p283, %p284
      %s286 = ssub.s32 %s27, %s34
      %p287 = scmp.eq.s32.totalorder %s286, 0
      %s289 = sadd.s32 %s288, 1
      %s290 = scalar_select %p287, %s288, %s289
      %p293 = pneg %p287
      %p294 = scmp.eq.s32.totalorder %s27, 1
      %p295 = por %p293, %p294
      %p296 = scmp.ne.s32.totalorder %s288, %s291
      %p297 = scmp.eq.s32.totalorder %s27, 0
      %p298 = por %p296, %p297
      %p299 = scmp.ne.s32.totalorder %s288, %s291
      %p300 = scmp.eq.s32.totalorder %s32, 1
      %p301 = por %p299, %p300
      %p302 = scmp.ne.s32.totalorder %s291, %s292
      %p303 = scmp.eq.s32.totalorder %s32, 0
      %p304 = por %p302, %p303
      %p305 = scmp.ne.s32.totalorder %s291, %s292
      %p306 = scmp.eq.s32.totalorder %s33, 1
      %p307 = por %p305, %p306
      %p309 = scmp.ne.s32.totalorder %s292, %s308
      %p310 = scmp.eq.s32.totalorder %s33, 0
      %p311 = por %p309, %p310
      %p312 = scmp.le.s32.totalorder 1, %s27
      %p313 = scmp.lt.s32.totalorder %s27, 3
      %p314 = pnand %p312, %p313
      %p315 = pneg %p314
      // Predicated region
      $region9: #{block_forward.1} parent=5 // pred_check
        _
      $region10: #{block_forward.1} parent=5 // pred_check_branch
        %317 = sbr.rel (%p314) target = $region12
      $region11: #{block_forward.1} parent=5 // pred_region
        %s318 = ssub.s32 %s27, 1
        // Predicated region
        $region13: #{block_forward.1} parent=11 // pred_check
          %p319 = pneg %p74
        $region14: #{block_forward.1} parent=11 // pred_check_branch
          %321 = sbr.rel (%p319) target = $region16
        $region15: #{block_forward.1} parent=11 // pred_region
          _
        $region16: #{block_forward.1} parent=11 // pred_fallthru
          _
        // Predicated region
        $region17: #{block_forward.1} parent=11 // pred_check
          %p322 = pneg %p95
        $region18: #{block_forward.1} parent=11 // pred_check_branch
          %324 = sbr.rel (%p322) target = $region20
        $region19: #{block_forward.1} parent=11 // pred_region
          %s326 = ssub.s32 6144, 6144
          %327 = vsyncadd [#allocation6], %s326
          %s328 = sshll.u32 [#allocation5], 4
          %s329 = int_to_ptr.vmem [resolvable:$true] %s328
          %334 = dma.hbm_to_vmem [thread:$0]  %s2, 6144, %s329, [#allocation6], 384, 384, 24
        $region20: #{block_forward.1} parent=11 // pred_fallthru
          _
        // Predicated region
        $region21: #{block_forward.1} parent=11 // pred_check
          %p335 = pneg %p116
        $region22: #{block_forward.1} parent=11 // pred_check_branch
          %337 = sbr.rel (%p335) target = $region24
        $region23: #{block_forward.1} parent=11 // pred_region
          %s339 = ssub.s32 2048, 2048
          %340 = vsyncadd [#allocation6], %s339
          %s341 = sshll.u32 [#allocation7], 4
          %s342 = int_to_ptr.vmem [resolvable:$true] %s341
          %347 = dma.hbm_to_vmem [thread:$0]  %s3, 2048, %s342, [#allocation6], 128, 128, 8
        $region24: #{block_forward.1} parent=11 // pred_fallthru
          _
        // Predicated region
        $region25: #{block_forward.1} parent=11 // pred_check
          %p348 = pneg %p137
        $region26: #{block_forward.1} parent=11 // pred_check_branch
          %350 = sbr.rel (%p348) target = $region28
        $region27: #{block_forward.1} parent=11 // pred_region
          %s352 = ssub.s32 256, 256
          %353 = vsyncadd [#allocation9], %s352
          %s354 = sshll.u32 [#allocation8], 4
          %s355 = int_to_ptr.vmem [resolvable:$true] %s354
          %360 = dma.hbm_to_vmem [thread:$0]  %s4, 256, %s355, [#allocation9], 128, 128, 8
        $region28: #{block_forward.1} parent=11 // pred_fallthru
          _
        // Predicated region
        $region29: #{block_forward.1} parent=11 // pred_check
          %p361 = pneg %p158
        $region30: #{block_forward.1} parent=11 // pred_check_branch
          %363 = sbr.rel (%p361) target = $region32
        $region31: #{block_forward.1} parent=11 // pred_region
          %s365 = ssub.s32 1024, 1024
          %366 = vsyncadd [#allocation9], %s365
          %s367 = sshll.u32 [#allocation10], 4
          %s368 = int_to_ptr.vmem [resolvable:$true] %s367
          %373 = dma.hbm_to_vmem [thread:$0]  %s5, 1024, %s368, [#allocation9], 128, 128, 8
        $region32: #{block_forward.1} parent=11 // pred_fallthru
          _
        // Predicated region
        $region33: #{block_forward.1} parent=11 // pred_check
          %p374 = pneg %p179
        $region34: #{block_forward.1} parent=11 // pred_check_branch
          %376 = sbr.rel (%p374) target = $region36
        $region35: #{block_forward.1} parent=11 // pred_region
          %s378 = ssub.s32 256, 256
          %379 = vsyncadd [#allocation12], %s378
          %s380 = sshll.u32 [#allocation11], 4
          %s381 = int_to_ptr.vmem [resolvable:$true] %s380
          %386 = dma.hbm_to_vmem [thread:$0]  %s6, 256, %s381, [#allocation12], 128, 128, 8
        $region36: #{block_forward.1} parent=11 // pred_fallthru
          _
        // Predicated region
        $region37: #{block_forward.1} parent=11 // pred_check
          %p387 = pneg %p200
        $region38: #{block_forward.1} parent=11 // pred_check_branch
          %389 = sbr.rel (%p387) target = $region40
        $region39: #{block_forward.1} parent=11 // pred_region
          _
        $region40: #{block_forward.1} parent=11 // pred_fallthru
          _
      $region12: #{block_forward.1} parent=5 // pred_fallthru
        _
      %p390 = scmp.lt.s32.totalorder %s27, 2
      // Predicated region
      $region41: #{block_forward.1} parent=5 // pred_check
        %p391 = pneg %p390
      $region42: #{block_forward.1} parent=5 // pred_check_branch
        %393 = sbr.rel (%p391) target = $region44
      $region43: #{block_forward.1} parent=5 // pred_region
        // Predicated region
        $region45: #{block_forward.1} parent=43 // pred_check
          %p394 = pneg %p47
        $region46: #{block_forward.1} parent=43 // pred_check_branch
          %396 = sbr.rel (%p394) target = $region48
        $region47: #{block_forward.1} parent=43 // pred_region
          %s397 = sand.u32 %s37, 1
          %s398 = scalar_lea.sflag [#allocation3], %s397
          %s399 = sand.u32 %s37, 1
          %s400 = smul.addr %s399, 64
          %s401 = scalar_lea.vmem [#allocation2], %s400
          %s402 = smul.u32 8, %s27
          %s404 = ssub.s32 1024, 1024
          %405 = vsyncadd %s398, %s404
          %s406 = smul.addr %s402, 128
          %s407 = scalar_lea.hbm %s0, %s406
          %s408 = sshll.u32 %s401, 4
          %s409 = int_to_ptr.vmem [resolvable:$true] %s408
          %414 = dma.hbm_to_vmem [thread:$0]  %s407, 1024, %s409, %s398, 128, 128, 8
        $region48: #{block_forward.1} parent=43 // pred_fallthru
          _
      $region44: #{block_forward.1} parent=5 // pred_fallthru
        _
      %p415 = scmp.le.s32.totalorder 1, %s27
      %p416 = scmp.lt.s32.totalorder %s27, 3
      %p417 = pnand %p415, %p416
      %p418 = pneg %p417
      // Predicated region
      $region49: #{block_forward.1} parent=5 // pred_check
        _
      $region50: #{block_forward.1} parent=5 // pred_check_branch
        %420 = sbr.rel (%p417) target = $region52
      $region51: #{block_forward.1} parent=5 // pred_region
        %s421 = ssub.s32 %s27, 1
        %s422 = sand.u32 %s40, 1
        %s423 = scalar_lea.sflag [#allocation3], %s422
        %s424 = sand.u32 %s40, 1
        %s425 = smul.addr %s424, 64
        %s426 = scalar_lea.vmem [#allocation2], %s425
        // Predicated region
        $region53: #{block_forward.1} parent=51 // pred_check
          %p427 = pneg %p53
        $region54: #{block_forward.1} parent=51 // pred_check_branch
          %429 = sbr.rel (%p427) target = $region56
        $region55: #{block_forward.1} parent=51 // pred_region
          %430 = dma.done %s423, 1024
        $region56: #{block_forward.1} parent=51 // pred_fallthru
          _
        // Predicated region
        $region57: #{block_forward.1} parent=51 // pred_check
          %p431 = pneg %p95
        $region58: #{block_forward.1} parent=51 // pred_check_branch
          %433 = sbr.rel (%p431) target = $region60
        $region59: #{block_forward.1} parent=51 // pred_region
          %434 = dma.done [#allocation6], 6144
        $region60: #{block_forward.1} parent=51 // pred_fallthru
          _
        // Predicated region
        $region61: #{block_forward.1} parent=51 // pred_check
          %p435 = pneg %p116
        $region62: #{block_forward.1} parent=51 // pred_check_branch
          %437 = sbr.rel (%p435) target = $region64
        $region63: #{block_forward.1} parent=51 // pred_region
          %438 = dma.done [#allocation6], 2048
        $region64: #{block_forward.1} parent=51 // pred_fallthru
          _
        // Predicated region
        $region65: #{block_forward.1} parent=51 // pred_check
          %p439 = pneg %p137
        $region66: #{block_forward.1} parent=51 // pred_check_branch
          %441 = sbr.rel (%p439) target = $region68
        $region67: #{block_forward.1} parent=51 // pred_region
          %442 = dma.done [#allocation9], 256
        $region68: #{block_forward.1} parent=51 // pred_fallthru
          _
        // Predicated region
        $region69: #{block_forward.1} parent=51 // pred_check
          %p443 = pneg %p158
        $region70: #{block_forward.1} parent=51 // pred_check_branch
          %445 = sbr.rel (%p443) target = $region72
        $region71: #{block_forward.1} parent=51 // pred_region
          %446 = dma.done [#allocation9], 1024
        $region72: #{block_forward.1} parent=51 // pred_fallthru
          _
        // Predicated region
        $region73: #{block_forward.1} parent=51 // pred_check
          %p447 = pneg %p179
        $region74: #{block_forward.1} parent=51 // pred_check_branch
          %449 = sbr.rel (%p447) target = $region76
        $region75: #{block_forward.1} parent=51 // pred_region
          %450 = dma.done [#allocation12], 256
        $region76: #{block_forward.1} parent=51 // pred_fallthru
          _
        %s451 = sand.u32 %s40, 1
        %s452 = scalar_lea.sflag [#allocation3], %s451
        %s453 = sand.u32 %s40, 1
        %s454 = smul.addr %s453, 64
        %s455 = scalar_lea.vmem [#allocation2], %s454
        %p456 = pneg %p53
        %p457 = pneg %p50
        %p458 = pneg %p74
        %p459 = pneg %p71
        %p460 = pneg %p95
        %p461 = pneg %p92
        %p462 = pneg %p116
        %p463 = pneg %p113
        %p464 = pneg %p137
        %p465 = pneg %p134
        %p466 = pneg %p158
        %p467 = pneg %p155
        %p468 = pneg %p179
        %p469 = pneg %p176
        %p470 = pneg %p200
        %p471 = pneg %p197
        %p472 = pneg %p226
        %p473 = pneg %p223
        %s474 = sand.u32 %s213, 1
        %s475 = scalar_lea.sflag [#allocation4], %s474
        %s476 = sand.u32 %s213, 1
        %s477 = smul.addr %s476, 64
        %s478 = scalar_lea.vmem [#allocation13], %s477
        %p479 = pneg %p252
        %p480 = pneg %p249
        %s481 = smul.u32 2, %s32
        %p482 = scmp.lt.s32.totalorder %s481, 3
        %s483 = scalar_select %p482, %s481, 3
        %s484 = smul.addr %s483, 8
        %s485 = scalar_lea.vmem %s9, %s484
        %p486 = pneg %p278
        %p487 = pneg %p275
        %s488 = smul.u32 2, %s32
        %p489 = scmp.lt.s32.totalorder %s488, 3
        %s490 = scalar_select %p489, %s488, 3
        %s491 = smul.addr %s490, 8
        %s492 = scalar_lea.vmem %s10, %s491
        %p493 = pneg %p304
        %p494 = pneg %p301
        %s495 = smul.u32 2, %s32
        %p496 = scmp.lt.s32.totalorder %s495, 3
        %s497 = scalar_select %p496, %s495, 3
        %s498 = smul.addr %s497, 8
        %s499 = scalar_lea.vmem %s11, %s498
        %s500 = smul.u32 8, %s32
        %s501 = smul.u32 8, %s32
        %s502 = smul.u32 2, %s32
        %p503 = scmp.lt.s32.totalorder %s502, 3
        %s504 = scalar_select %p503, %s502, 3
        %s505 = smul.addr %s504, 8
        %s506 = scalar_lea.vmem %s9, %s505
        %s507 = smul.u32 2, %s32
        %s508 = smul.u32 2, %s32
        %p509 = scmp.lt.s32.totalorder %s508, 3
        %s510 = scalar_select %p509, %s508, 3
        %s511 = smul.addr %s510, 8
        %s512 = scalar_lea.vmem %s10, %s511
        %s513 = smul.u32 2, %s32
        %s514 = smul.u32 2, %s32
        %p515 = scmp.lt.s32.totalorder %s514, 3
        %s516 = scalar_select %p515, %s514, 3
        %s517 = smul.addr %s516, 8
        %s518 = scalar_lea.vmem %s11, %s517
        %s519 = smul.u32 2, %s32
        %v520 = vld [vmem:[%s426] sm:$0xff]
        %v521 = vld [vmem:[%s426 + $0x8] sm:$0xff]
        %v522 = vld [vmem:[%s426 + $0x10] sm:$0xff]
        %v523 = vld [vmem:[%s426 + $0x18] sm:$0xff]
        %v524 = vld [vmem:[%s426 + $0x20] sm:$0xff]
        %v525 = vld [vmem:[%s426 + $0x28] sm:$0xff]
        %v526 = vld [vmem:[%s426 + $0x30] sm:$0xff]
        %v527 = vld [vmem:[%s426 + $0x38] sm:$0xff]
        %v528 = vmul.f32 %v520, %v520
        %v529 = vmul.f32 %v521, %v521
        %v530 = vmul.f32 %v522, %v522
        %v531 = vmul.f32 %v523, %v523
        %v532 = vmul.f32 %v524, %v524
        %v533 = vmul.f32 %v525, %v525
        %v534 = vmul.f32 %v526, %v526
        %v535 = vmul.f32 %v527, %v527
        %536 = vadd.xlane.f32.xlu0 %v528
        %v537 = vpop.xlane.xlu0 %536
        %538 = vadd.xlane.f32.xlu0 %v529
        %v539 = vpop.xlane.xlu0 %538
        %540 = vadd.xlane.f32.xlu0 %v530
        %v541 = vpop.xlane.xlu0 %540
        %542 = vadd.xlane.f32.xlu0 %v531
        %v543 = vpop.xlane.xlu0 %542
        %544 = vadd.xlane.f32.xlu0 %v532
        %v545 = vpop.xlane.xlu0 %544
        %546 = vadd.xlane.f32.xlu0 %v533
        %v547 = vpop.xlane.xlu0 %546
        %548 = vadd.xlane.f32.xlu0 %v534
        %v549 = vpop.xlane.xlu0 %548
        %550 = vadd.xlane.f32.xlu0 %v535
        %v551 = vpop.xlane.xlu0 %550
        %v552 = vrcp.pop 128.0
        %v553 = vmul.f32 %v537, %v552
        %v554 = vmul.f32 %v539, %v552
        %v555 = vmul.f32 %v541, %v552
        %v556 = vmul.f32 %v543, %v552
        %v557 = vmul.f32 %v545, %v552
        %v558 = vmul.f32 %v547, %v552
        %v559 = vmul.f32 %v549, %v552
        %v560 = vmul.f32 %v551, %v552
        %v561 = vadd.f32 %v553, 1e-05
        %v562 = vadd.f32 %v554, 1e-05
        %v563 = vadd.f32 %v555, 1e-05
        %v564 = vadd.f32 %v556, 1e-05
        %v565 = vadd.f32 %v557, 1e-05
        %v566 = vadd.f32 %v558, 1e-05
        %v567 = vadd.f32 %v559, 1e-05
        %v568 = vadd.f32 %v560, 1e-05
        %v569 = vrsqrt.pop %v561
        %v570 = vrsqrt.pop %v562
        %v571 = vrsqrt.pop %v563
        %v572 = vrsqrt.pop %v564
        %v573 = vrsqrt.pop %v565
        %v574 = vrsqrt.pop %v566
        %v575 = vrsqrt.pop %v567
        %v576 = vrsqrt.pop %v568
        %v577 = vmul.f32 %v520, %v569
        %v578 = vmul.f32 %v521, %v570
        %v579 = vmul.f32 %v522, %v571
        %v580 = vmul.f32 %v523, %v572
        %v581 = vmul.f32 %v524, %v573
        %v582 = vmul.f32 %v525, %v574
        %v583 = vmul.f32 %v526, %v575
        %v584 = vmul.f32 %v527, %v576
        %v585 = vld [vmem:[%s1] sm:$0x1]
        %v587 = vlaneseq
        %v588 = vshrl.u32 %v587, 7
        %v589 = vsub.s32 0, %v588
        %v590 = vrot.slane %v585, %v589
        %v592 = vmul.f32 %v577, %v590
        %v593 = vmul.f32 %v578, %v590
        %v594 = vmul.f32 %v579, %v590
        %v595 = vmul.f32 %v580, %v590
        %v596 = vmul.f32 %v581, %v590
        %v597 = vmul.f32 %v582, %v590
        %v598 = vmul.f32 %v583, %v590
        %v599 = vmul.f32 %v584, %v590
        %v600 = vld [vmem:[#allocation5] sm:$0xff]
        %v601 = vld [vmem:[#allocation5 + $0x8] sm:$0xff]
        %v602 = vld [vmem:[#allocation5 + $0x10] sm:$0xff]
        %v603 = vld [vmem:[#allocation5 + $0x18] sm:$0xff]
        %v604 = vld [vmem:[#allocation5 + $0x20] sm:$0xff]
        %v605 = vld [vmem:[#allocation5 + $0x28] sm:$0xff]
        %v606 = vld [vmem:[#allocation5 + $0x30] sm:$0xff]
        %v607 = vld [vmem:[#allocation5 + $0x38] sm:$0xff]
        %v608 = vld [vmem:[#allocation5 + $0x40] sm:$0xff]
        %v609 = vld [vmem:[#allocation5 + $0x48] sm:$0xff]
        %v610 = vld [vmem:[#allocation5 + $0x50] sm:$0xff]
        %v611 = vld [vmem:[#allocation5 + $0x58] sm:$0xff]
        %v612 = vld [vmem:[#allocation5 + $0x60] sm:$0xff]
        %v613 = vld [vmem:[#allocation5 + $0x68] sm:$0xff]
        %v614 = vld [vmem:[#allocation5 + $0x70] sm:$0xff]
        %v615 = vld [vmem:[#allocation5 + $0x78] sm:$0xff]
        %v616 = vld [vmem:[#allocation5 + $0x80] sm:$0xff]
        %v617 = vld [vmem:[#allocation5 + $0x88] sm:$0xff]
        %v618 = vld [vmem:[#allocation5 + $0x90] sm:$0xff]
        %v619 = vld [vmem:[#allocation5 + $0x98] sm:$0xff]
        %v620 = vld [vmem:[#allocation5 + $0xa0] sm:$0xff]
        %v621 = vld [vmem:[#allocation5 + $0xa8] sm:$0xff]
        %v622 = vld [vmem:[#allocation5 + $0xb0] sm:$0xff]
        %v623 = vld [vmem:[#allocation5 + $0xb8] sm:$0xff]
        %v624 = vld [vmem:[#allocation5 + $0xc0] sm:$0xff]
        %v625 = vld [vmem:[#allocation5 + $0xc8] sm:$0xff]
        %v626 = vld [vmem:[#allocation5 + $0xd0] sm:$0xff]
        %v627 = vld [vmem:[#allocation5 + $0xd8] sm:$0xff]
        %v628 = vld [vmem:[#allocation5 + $0xe0] sm:$0xff]
        %v629 = vld [vmem:[#allocation5 + $0xe8] sm:$0xff]
        %v630 = vld [vmem:[#allocation5 + $0xf0] sm:$0xff]
        %v631 = vld [vmem:[#allocation5 + $0xf8] sm:$0xff]
        %v632 = vld [vmem:[#allocation5 + $0x100] sm:$0xff]
        %v633 = vld [vmem:[#allocation5 + $0x108] sm:$0xff]
        %v634 = vld [vmem:[#allocation5 + $0x110] sm:$0xff]
        %v635 = vld [vmem:[#allocation5 + $0x118] sm:$0xff]
        %v636 = vld [vmem:[#allocation5 + $0x120] sm:$0xff]
        %v637 = vld [vmem:[#allocation5 + $0x128] sm:$0xff]
        %v638 = vld [vmem:[#allocation5 + $0x130] sm:$0xff]
        %v639 = vld [vmem:[#allocation5 + $0x138] sm:$0xff]
        %v640 = vld [vmem:[#allocation5 + $0x140] sm:$0xff]
        %v641 = vld [vmem:[#allocation5 + $0x148] sm:$0xff]
        %v642 = vld [vmem:[#allocation5 + $0x150] sm:$0xff]
        %v643 = vld [vmem:[#allocation5 + $0x158] sm:$0xff]
        %v644 = vld [vmem:[#allocation5 + $0x160] sm:$0xff]
        %v645 = vld [vmem:[#allocation5 + $0x168] sm:$0xff]
        %v646 = vld [vmem:[#allocation5 + $0x170] sm:$0xff]
        %v647 = vld [vmem:[#allocation5 + $0x178] sm:$0xff]
        %648 = vmatprep.subr.mxu0 %v601
        %649 = vmatpush1.msra.mxu0 %v600
        %650 = vmatprep.subr.mxu0 %v604
        %651 = vmatpush1.msra.mxu0 %v603
        %652 = vmatprep.subr.mxu0 %v607
        %653 = vmatpush1.msra.mxu0 %v606
        %654 = vmatprep.subr.mxu0 %v610
        %655 = vmatpush1.msra.mxu0 %v609
        %656 = vmatprep.subr.mxu0 %v613
        %657 = vmatpush1.msra.mxu0 %v612
        %658 = vmatprep.subr.mxu0 %v616
        %659 = vmatpush1.msra.mxu0 %v615
        %660 = vmatprep.subr.mxu0 %v619
        %661 = vmatpush1.msra.mxu0 %v618
        %662 = vmatprep.subr.mxu0 %v622
        %663 = vmatpush1.msra.mxu0 %v621
        %664 = vmatprep.subr.mxu0 %v625
        %665 = vmatpush1.msra.mxu0 %v624
        %666 = vmatprep.subr.mxu0 %v628
        %667 = vmatpush1.msra.mxu0 %v627
        %668 = vmatprep.subr.mxu0 %v631
        %669 = vmatpush1.msra.mxu0 %v630
        %670 = vmatprep.subr.mxu0 %v634
        %671 = vmatpush1.msra.mxu0 %v633
        %672 = vmatprep.subr.mxu0 %v637
        %673 = vmatpush1.msra.mxu0 %v636
        %674 = vmatprep.subr.mxu0 %v640
        %675 = vmatpush1.msra.mxu0 %v639
        %676 = vmatprep.subr.mxu0 %v643
        %677 = vmatpush1.msra.mxu0 %v642
        %678 = vmatprep.subr.mxu0 %v646
        %679 = vmatpush1.msra.mxu0 %v645
        %680 = vmatprep.subr.mxu0 0.0
        %681 = vmatpush1.msra.mxu0 0.0
        %682 = vmatprep.subr.mxu0 0.0
        %683 = vmatpush1.msra.mxu0 0.0
        %684 = vmatprep.subr.mxu0 0.0
        %685 = vmatpush1.msra.mxu0 0.0
        %686 = vmatprep.subr.mxu0 0.0
        %687 = vmatpush1.msra.mxu0 0.0
        %688 = vmatprep.subr.mxu0 0.0
        %689 = vmatpush1.msra.mxu0 0.0
        %690 = vmatprep.subr.mxu0 0.0
        %691 = vmatpush1.msra.mxu0 0.0
        %692 = vmatprep.subr.mxu0 0.0
        %693 = vmatpush1.msra.mxu0 0.0
        %694 = vmatprep.subr.mxu0 0.0
        %695 = vmatpush1.msra.mxu0 0.0
        %696 = vmatprep.subr.mxu0 0.0
        %697 = vmatpush1.msra.mxu0 0.0
        %698 = vmatprep.subr.mxu0 0.0
        %699 = vmatpush1.msra.mxu0 0.0
        %700 = vmatprep.subr.mxu0 0.0
        %701 = vmatpush1.msra.mxu0 0.0
        %702 = vmatprep.subr.mxu0 0.0
        %703 = vmatpush1.msra.mxu0 0.0
        %704 = vmatprep.subr.mxu0 0.0
        %705 = vmatpush1.msra.mxu0 0.0
        %706 = vmatprep.subr.mxu0 0.0
        %707 = vmatpush1.msra.mxu0 0.0
        %708 = vmatprep.subr.mxu0 0.0
        %709 = vmatpush1.msra.mxu0 0.0
        %710 = vmatprep.subr.mxu0 0.0
        %711 = vmatpush1.msra.mxu0 0.0
        %712 = vmatprep.mubr.f32.mxu0 0.0
        %713 = vmatmul.mubr.f32.gmra.mrb[0].mxu0 %v592
        %v714 = vpop.f32.mrb[0].mxu0
        %v715 = vadd.f32 0.0, %v714
        %v716 = vpop.f32.mrb[0].mxu0
        %v717 = vadd.f32 0.0, %v716
        %718 = vmatprep.mubr.f32.mxu0 0.0
        %719 = vmatmul.mubr.f32.gmra.mrb[0].mxu0 %v593
        %v720 = vpop.f32.mrb[0].mxu0
        %v721 = vadd.f32 0.0, %v720
        %v722 = vpop.f32.mrb[0].mxu0
        %v723 = vadd.f32 0.0, %v722
        %724 = vmatprep.mubr.f32.mxu0 0.0
        %725 = vmatmul.mubr.f32.gmra.mrb[0].mxu0 %v594
        %v726 = vpop.f32.mrb[0].mxu0
        %v727 = vadd.f32 0.0, %v726
        %v728 = vpop.f32.mrb[0].mxu0
        %v729 = vadd.f32 0.0, %v728
        %730 = vmatprep.mubr.f32.mxu0 0.0
        %731 = vmatmul.mubr.f32.gmra.mrb[0].mxu0 %v595
        %v732 = vpop.f32.mrb[0].mxu0
        %v733 = vadd.f32 0.0, %v732
        %v734 = vpop.f32.mrb[0].mxu0
        %v735 = vadd.f32 0.0, %v734
        %736 = vmatprep.mubr.f32.mxu0 0.0
        %737 = vmatmul.mubr.f32.gmra.mrb[0].mxu0 %v596
        %v738 = vpop.f32.mrb[0].mxu0
        %v739 = vadd.f32 0.0, %v738
        %v740 = vpop.f32.mrb[0].mxu0
        %v741 = vadd.f32 0.0, %v740
        %742 = vmatprep.mubr.f32.mxu0 0.0
        %743 = vmatmul.mubr.f32.gmra.mrb[0].mxu0 %v597
        %v744 = vpop.f32.mrb[0].mxu0
        %v745 = vadd.f32 0.0, %v744
        %v746 = vpop.f32.mrb[0].mxu0
        %v747 = vadd.f32 0.0, %v746
        %748 = vmatprep.mubr.f32.mxu0 0.0
        %749 = vmatmul.mubr.f32.gmra.mrb[0].mxu0 %v598
        %v750 = vpop.f32.mrb[0].mxu0
        %v751 = vadd.f32 0.0, %v750
        %v752 = vpop.f32.mrb[0].mxu0
        %v753 = vadd.f32 0.0, %v752
        %754 = vmatprep.mubr.f32.mxu0 0.0
        %755 = vmatmul.mubr.f32.gmra.mrb[0].mxu0 %v599
        %v756 = vpop.f32.mrb[0].mxu0
        %v757 = vadd.f32 0.0, %v756
        %v758 = vpop.f32.mrb[0].mxu0
        %v759 = vadd.f32 0.0, %v758
        %760 = vdwg.mxu0
        %761 = vmatprep.subr.mxu0 0.0
        %762 = vmatpush1.msra.mxu0 %v602
        %763 = vmatprep.subr.mxu0 0.0
        %764 = vmatpush1.msra.mxu0 %v605
        %765 = vmatprep.subr.mxu0 0.0
        %766 = vmatpush1.msra.mxu0 %v608
        %767 = vmatprep.subr.mxu0 0.0
        %768 = vmatpush1.msra.mxu0 %v611
        %769 = vmatprep.subr.mxu0 0.0
        %770 = vmatpush1.msra.mxu0 %v614
        %771 = vmatprep.subr.mxu0 0.0
        %772 = vmatpush1.msra.mxu0 %v617
        %773 = vmatprep.subr.mxu0 0.0
        %774 = vmatpush1.msra.mxu0 %v620
        %775 = vmatprep.subr.mxu0 0.0
        %776 = vmatpush1.msra.mxu0 %v623
        %777 = vmatprep.subr.mxu0 0.0
        %778 = vmatpush1.msra.mxu0 %v626
        %779 = vmatprep.subr.mxu0 0.0
        %780 = vmatpush1.msra.mxu0 %v629
        %781 = vmatprep.subr.mxu0 0.0
        %782 = vmatpush1.msra.mxu0 %v632
        %783 = vmatprep.subr.mxu0 0.0
        %784 = vmatpush1.msra.mxu0 %v635
        %785 = vmatprep.subr.mxu0 0.0
        %786 = vmatpush1.msra.mxu0 %v638
        %787 = vmatprep.subr.mxu0 0.0
        %788 = vmatpush1.msra.mxu0 %v641
        %789 = vmatprep.subr.mxu0 0.0
        %790 = vmatpush1.msra.mxu0 %v644
        %791 = vmatprep.subr.mxu0 0.0
        %792 = vmatpush1.msra.mxu0 %v647
        %793 = vmatprep.subr.mxu0 0.0
        %794 = vmatpush1.msra.mxu0 0.0
        %795 = vmatprep.subr.mxu0 0.0
        %796 = vmatpush1.msra.mxu0 0.0
        %797 = vmatprep.subr.mxu0 0.0
        %798 = vmatpush1.msra.mxu0 0.0
        %799 = vmatprep.subr.mxu0 0.0
        %800 = vmatpush1.msra.mxu0 0.0
        %801 = vmatprep.subr.mxu0 0.0
        %802 = vmatpush1.msra.mxu0 0.0
        %803 = vmatprep.subr.mxu0 0.0
        %804 = vmatpush1.msra.mxu0 0.0
        %805 = vmatprep.subr.mxu0 0.0
        %806 = vmatpush1.msra.mxu0 0.0
        %807 = vmatprep.subr.mxu0 0.0
        %808 = vmatpush1.msra.mxu0 0.0
        %809 = vmatprep.subr.mxu0 0.0
        %810 = vmatpush1.msra.mxu0 0.0
        %811 = vmatprep.subr.mxu0 0.0
        %812 = vmatpush1.msra.mxu0 0.0
        %813 = vmatprep.subr.mxu0 0.0
        %814 = vmatpush1.msra.mxu0 0.0
        %815 = vmatprep.subr.mxu0 0.0
        %816 = vmatpush1.msra.mxu0 0.0
        %817 = vmatprep.subr.mxu0 0.0
        %818 = vmatpush1.msra.mxu0 0.0
        %819 = vmatprep.subr.mxu0 0.0
        %820 = vmatpush1.msra.mxu0 0.0
        %821 = vmatprep.subr.mxu0 0.0
        %822 = vmatpush1.msra.mxu0 0.0
        %823 = vmatprep.subr.mxu0 0.0
        %824 = vmatpush1.msra.mxu0 0.0
        %825 = vmatprep.mubr.f32.mxu0 0.0
        %826 = vmatmul.mubr.f32.gmra.mrb[0].mxu0 %v592
        %v827 = vpop.f32.mrb[0].mxu0
        %v828 = vadd.f32 0.0, %v827
        %v829 = vpop.f32.mrb[0].mxu0
        %830 = vmatprep.mubr.f32.mxu0 0.0
        %831 = vmatmul.mubr.f32.gmra.mrb[0].mxu0 %v593
        %v832 = vpop.f32.mrb[0].mxu0
        %v833 = vadd.f32 0.0, %v832
        %v834 = vpop.f32.mrb[0].mxu0
        %835 = vmatprep.mubr.f32.mxu0 0.0
        %836 = vmatmul.mubr.f32.gmra.mrb[0].mxu0 %v594
        %v837 = vpop.f32.mrb[0].mxu0
        %v838 = vadd.f32 0.0, %v837
        %v839 = vpop.f32.mrb[0].mxu0
        %840 = vmatprep.mubr.f32.mxu0 0.0
        %841 = vmatmul.mubr.f32.gmra.mrb[0].mxu0 %v595
        %v842 = vpop.f32.mrb[0].mxu0
        %v843 = vadd.f32 0.0, %v842
        %v844 = vpop.f32.mrb[0].mxu0
        %845 = vmatprep.mubr.f32.mxu0 0.0
        %846 = vmatmul.mubr.f32.gmra.mrb[0].mxu0 %v596
        %v847 = vpop.f32.mrb[0].mxu0
        %v848 = vadd.f32 0.0, %v847
        %v849 = vpop.f32.mrb[0].mxu0
        %850 = vmatprep.mubr.f32.mxu0 0.0
        %851 = vmatmul.mubr.f32.gmra.mrb[0].mxu0 %v597
        %v852 = vpop.f32.mrb[0].mxu0
        %v853 = vadd.f32 0.0, %v852
        %v854 = vpop.f32.mrb[0].mxu0
        %855 = vmatprep.mubr.f32.mxu0 0.0
        %856 = vmatmul.mubr.f32.gmra.mrb[0].mxu0 %v598
        %v857 = vpop.f32.mrb[0].mxu0
        %v858 = vadd.f32 0.0, %v857
        %v859 = vpop.f32.mrb[0].mxu0
        %860 = vmatprep.mubr.f32.mxu0 0.0
        %861 = vmatmul.mubr.f32.gmra.mrb[0].mxu0 %v599
        %v862 = vpop.f32.mrb[0].mxu0
        %v863 = vadd.f32 0.0, %v862
        %v864 = vpop.f32.mrb[0].mxu0
        %865 = vdwg.mxu0
        %v866 = vld [vmem:[#allocation8] sm:$0xff]
        %v867 = vld [vmem:[#allocation8 + $0x8] sm:$0xff]
        %vm868 = vcmask 523264
        %v870 = vsel %vm868, %v866, 0
        %v873 = vsel %vm868, %v867, 0
        %875 = vmatprep.subr.mxu0 %v717
        %876 = vmatpush1.msra.mxu0 %v715
        %877 = vmatprep.subr.mxu0 %v723
        %878 = vmatpush1.msra.mxu0 %v721
        %879 = vmatprep.subr.mxu0 %v729
        %880 = vmatpush1.msra.mxu0 %v727
        %881 = vmatprep.subr.mxu0 %v735
        %882 = vmatpush1.msra.mxu0 %v733
        %883 = vmatprep.subr.mxu0 %v741
        %884 = vmatpush1.msra.mxu0 %v739
        %885 = vmatprep.subr.mxu0 %v747
        %886 = vmatpush1.msra.mxu0 %v745
        %887 = vmatprep.subr.mxu0 %v753
        %888 = vmatpush1.msra.mxu0 %v751
        %889 = vmatprep.subr.mxu0 %v759
        %890 = vmatpush1.msra.mxu0 %v757
        %891 = vmatprep.subr.mxu0 0.0
        %892 = vmatpush1.msra.mxu0 0.0
        %893 = vmatprep.subr.mxu0 0.0
        %894 = vmatpush1.msra.mxu0 0.0
        %895 = vmatprep.subr.mxu0 0.0
        %896 = vmatpush1.msra.mxu0 0.0
        %897 = vmatprep.subr.mxu0 0.0
        %898 = vmatpush1.msra.mxu0 0.0
        %899 = vmatprep.subr.mxu0 0.0
        %900 = vmatpush1.msra.mxu0 0.0
        %901 = vmatprep.subr.mxu0 0.0
        %902 = vmatpush1.msra.mxu0 0.0
        %903 = vmatprep.subr.mxu0 0.0
        %904 = vmatpush1.msra.mxu0 0.0
        %905 = vmatprep.subr.mxu0 0.0
        %906 = vmatpush1.msra.mxu0 0.0
        %907 = vmatprep.subr.mxu0 0.0
        %908 = vmatpush1.msra.mxu0 0.0
        %909 = vmatprep.subr.mxu0 0.0
        %910 = vmatpush1.msra.mxu0 0.0
        %911 = vmatprep.subr.mxu0 0.0
        %912 = vmatpush1.msra.mxu0 0.0
        %913 = vmatprep.subr.mxu0 0.0
        %914 = vmatpush1.msra.mxu0 0.0
        %915 = vmatprep.subr.mxu0 0.0
        %916 = vmatpush1.msra.mxu0 0.0
        %917 = vmatprep.subr.mxu0 0.0
        %918 = vmatpush1.msra.mxu0 0.0
        %919 = vmatprep.subr.mxu0 0.0
        %920 = vmatpush1.msra.mxu0 0.0
        %921 = vmatprep.subr.mxu0 0.0
        %922 = vmatpush1.msra.mxu0 0.0
        %923 = vmatprep.subr.mxu0 0.0
        %924 = vmatpush1.msra.mxu0 0.0
        %925 = vmatprep.subr.mxu0 0.0
        %926 = vmatpush1.msra.mxu0 0.0
        %927 = vmatprep.subr.mxu0 0.0
        %928 = vmatpush1.msra.mxu0 0.0
        %929 = vmatprep.subr.mxu0 0.0
        %930 = vmatpush1.msra.mxu0 0.0
        %931 = vmatprep.subr.mxu0 0.0
        %932 = vmatpush1.msra.mxu0 0.0
        %933 = vmatprep.subr.mxu0 0.0
        %934 = vmatpush1.msra.mxu0 0.0
        %935 = vmatprep.subr.mxu0 0.0
        %936 = vmatpush1.msra.mxu0 0.0
        %937 = vmatprep.subr.mxu0 0.0
        %938 = vmatpush1.msra.mxu0 0.0
        %939 = vmatprep.mubr.f32.mxu0 0.0
        %940 = vmatmul.mubr.f32.gmra.mrb[0].mxu0 %v870
        %v941 = vpop.f32.mrb[0].mxu0
        %v942 = vadd.f32 0.0, %v941
        %v943 = vpop.f32.mrb[0].mxu0
        %v944 = vadd.f32 0.0, %v943
        %945 = vmatprep.mubr.f32.mxu0 0.0
        %946 = vmatmul.mubr.f32.gmra.mrb[0].mxu0 %v873
        %v947 = vpop.f32.mrb[0].mxu0
        %v948 = vadd.f32 0.0, %v947
        %v949 = vpop.f32.mrb[0].mxu0
        %v950 = vadd.f32 0.0, %v949
        %951 = vdwg.mxu0
        %952 = vmatprep.subr.mxu0 0.0
        %953 = vmatpush1.msra.mxu0 %v828
        %954 = vmatprep.subr.mxu0 0.0
        %955 = vmatpush1.msra.mxu0 %v833
        %956 = vmatprep.subr.mxu0 0.0
        %957 = vmatpush1.msra.mxu0 %v838
        %958 = vmatprep.subr.mxu0 0.0
        %959 = vmatpush1.msra.mxu0 %v843
        %960 = vmatprep.subr.mxu0 0.0
        %961 = vmatpush1.msra.mxu0 %v848
        %962 = vmatprep.subr.mxu0 0.0
        %963 = vmatpush1.msra.mxu0 %v853
        %964 = vmatprep.subr.mxu0 0.0
        %965 = vmatpush1.msra.mxu0 %v858
        %966 = vmatprep.subr.mxu0 0.0
        %967 = vmatpush1.msra.mxu0 %v863
        %968 = vmatprep.subr.mxu0 0.0
        %969 = vmatpush1.msra.mxu0 0.0
        %970 = vmatprep.subr.mxu0 0.0
        %971 = vmatpush1.msra.mxu0 0.0
        %972 = vmatprep.subr.mxu0 0.0
        %973 = vmatpush1.msra.mxu0 0.0
        %974 = vmatprep.subr.mxu0 0.0
        %975 = vmatpush1.msra.mxu0 0.0
        %976 = vmatprep.subr.mxu0 0.0
        %977 = vmatpush1.msra.mxu0 0.0
        %978 = vmatprep.subr.mxu0 0.0
        %979 = vmatpush1.msra.mxu0 0.0
        %980 = vmatprep.subr.mxu0 0.0
        %981 = vmatpush1.msra.mxu0 0.0
        %982 = vmatprep.subr.mxu0 0.0
        %983 = vmatpush1.msra.mxu0 0.0
        %984 = vmatprep.subr.mxu0 0.0
        %985 = vmatpush1.msra.mxu0 0.0
        %986 = vmatprep.subr.mxu0 0.0
        %987 = vmatpush1.msra.mxu0 0.0
        %988 = vmatprep.subr.mxu0 0.0
        %989 = vmatpush1.msra.mxu0 0.0
        %990 = vmatprep.subr.mxu0 0.0
        %991 = vmatpush1.msra.mxu0 0.0
        %992 = vmatprep.subr.mxu0 0.0
        %993 = vmatpush1.msra.mxu0 0.0
        %994 = vmatprep.subr.mxu0 0.0
        %995 = vmatpush1.msra.mxu0 0.0
        %996 = vmatprep.subr.mxu0 0.0
        %997 = vmatpush1.msra.mxu0 0.0
        %998 = vmatprep.subr.mxu0 0.0
        %999 = vmatpush1.msra.mxu0 0.0
        %1000 = vmatprep.subr.mxu0 0.0
        %1001 = vmatpush1.msra.mxu0 0.0
        %1002 = vmatprep.subr.mxu0 0.0
        %1003 = vmatpush1.msra.mxu0 0.0
        %1004 = vmatprep.subr.mxu0 0.0
        %1005 = vmatpush1.msra.mxu0 0.0
        %1006 = vmatprep.subr.mxu0 0.0
        %1007 = vmatpush1.msra.mxu0 0.0
        %1008 = vmatprep.subr.mxu0 0.0
        %1009 = vmatpush1.msra.mxu0 0.0
        %1010 = vmatprep.subr.mxu0 0.0
        %1011 = vmatpush1.msra.mxu0 0.0
        %1012 = vmatprep.subr.mxu0 0.0
        %1013 = vmatpush1.msra.mxu0 0.0
        %1014 = vmatprep.subr.mxu0 0.0
        %1015 = vmatpush1.msra.mxu0 0.0
        %1016 = vmatprep.mubr.f32.mxu0 0.0
        %1017 = vmatmul.mubr.f32.gmra.mrb[0].mxu0 %v870
        %v1018 = vpop.f32.mrb[0].mxu0
        %v1019 = vadd.f32 0.0, %v1018
        %v1020 = vpop.f32.mrb[0].mxu0
        %1021 = vmatprep.mubr.f32.mxu0 0.0
        %1022 = vmatmul.mubr.f32.gmra.mrb[0].mxu0 %v873
        %v1023 = vpop.f32.mrb[0].mxu0
        %v1024 = vadd.f32 0.0, %v1023
        %v1025 = vpop.f32.mrb[0].mxu0
        %1026 = vdwg.mxu0
        %1027 = vst [vmem:[%s506] sm:$0xff] %v942
        %1028 = vst [vmem:[%s506 + $0x8] sm:$0xff] %v948
        %1029 = vst [vmem:[%s512] sm:$0xff] %v944
        %1030 = vst [vmem:[%s512 + $0x8] sm:$0xff] %v950
        %v1031 = vld [vmem:[#allocation10] sm:$0xff]
        %v1032 = vld [vmem:[#allocation10 + $0x8] sm:$0xff]
        %v1033 = vld [vmem:[#allocation10 + $0x10] sm:$0xff]
        %v1034 = vld [vmem:[#allocation10 + $0x18] sm:$0xff]
        %v1035 = vld [vmem:[#allocation10 + $0x20] sm:$0xff]
        %v1036 = vld [vmem:[#allocation10 + $0x28] sm:$0xff]
        %v1037 = vld [vmem:[#allocation10 + $0x30] sm:$0xff]
        %v1038 = vld [vmem:[#allocation10 + $0x38] sm:$0xff]
        %v1039 = vld [vmem:[#allocation11] sm:$0xff]
        %v1040 = vld [vmem:[#allocation11 + $0x8] sm:$0xff]
        %v1041 = vld [vmem:[%s7] sm:$0xff]
        %v1042 = vld [vmem:[%s7 + $0x8] sm:$0xff]
        %v1043 = vmul.f32 %v715, 0.17677669
        %v1044 = vmul.f32 %v721, 0.17677669
        %v1045 = vmul.f32 %v727, 0.17677669
        %v1046 = vmul.f32 %v733, 0.17677669
        %v1047 = vmul.f32 %v739, 0.17677669
        %v1048 = vmul.f32 %v745, 0.17677669
        %v1049 = vmul.f32 %v751, 0.17677669
        %v1050 = vmul.f32 %v757, 0.17677669
        %v1051 = vmul.f32 %v942, 0.17677669
        %v1052 = vmul.f32 %v948, 0.17677669
        %vm1053 = vcmask 261120
        %v1055 = vsel %vm1053, %v1043, 0
        %v1058 = vsel %vm1053, %v1044, 0
        %v1061 = vsel %vm1053, %v1045, 0
        %v1064 = vsel %vm1053, %v1046, 0
        %v1067 = vsel %vm1053, %v1047, 0
        %v1070 = vsel %vm1053, %v1048, 0
        %v1073 = vsel %vm1053, %v1049, 0
        %v1076 = vsel %vm1053, %v1050, 0
        %v1079 = vsel %vm1053, %v717, 0
        %v1082 = vsel %vm1053, %v723, 0
        %v1085 = vsel %vm1053, %v729, 0
        %v1088 = vsel %vm1053, %v735, 0
        %v1091 = vsel %vm1053, %v741, 0
        %v1094 = vsel %vm1053, %v747, 0
        %v1097 = vsel %vm1053, %v753, 0
        %v1100 = vsel %vm1053, %v759, 0
        %1102 = vmatprep.subr.mxu0 0.0
        %1103 = vmatpush1.xpose.msra.mxu0 %v1079
        %1104 = vmatprep.subr.mxu0 0.0
        %1105 = vmatpush1.xpose.msra.mxu0 %v1082
        %1106 = vmatprep.subr.mxu0 0.0
        %1107 = vmatpush1.xpose.msra.mxu0 %v1085
        %1108 = vmatprep.subr.mxu0 0.0
        %1109 = vmatpush1.xpose.msra.mxu0 %v1088
        %1110 = vmatprep.subr.mxu0 0.0
        %1111 = vmatpush1.xpose.msra.mxu0 %v1091
        %1112 = vmatprep.subr.mxu0 0.0
        %1113 = vmatpush1.xpose.msra.mxu0 %v1094
        %1114 = vmatprep.subr.mxu0 0.0
        %1115 = vmatpush1.xpose.msra.mxu0 %v1097
        %1116 = vmatprep.subr.mxu0 0.0
        %1117 = vmatpush1.xpose.msra.mxu0 %v1100
        %1118 = vmatprep.subr.mxu0 0.0
        %1119 = vmatpush1.xpose.msra.mxu0 0.0
        %1120 = vmatprep.subr.mxu0 0.0
        %1121 = vmatpush1.xpose.msra.mxu0 0.0
        %1122 = vmatprep.subr.mxu0 0.0
        %1123 = vmatpush1.xpose.msra.mxu0 0.0
        %1124 = vmatprep.subr.mxu0 0.0
        %1125 = vmatpush1.xpose.msra.mxu0 0.0
        %1126 = vmatprep.subr.mxu0 0.0
        %1127 = vmatpush1.xpose.msra.mxu0 0.0
        %1128 = vmatprep.subr.mxu0 0.0
        %1129 = vmatpush1.xpose.msra.mxu0 0.0
        %1130 = vmatprep.subr.mxu0 0.0
        %1131 = vmatpush1.xpose.msra.mxu0 0.0
        %1132 = vmatprep.subr.mxu0 0.0
        %1133 = vmatpush1.xpose.msra.mxu0 0.0
        %1134 = vmatprep.subr.mxu0 0.0
        %1135 = vmatpush1.xpose.msra.mxu0 0.0
        %1136 = vmatprep.subr.mxu0 0.0
        %1137 = vmatpush1.xpose.msra.mxu0 0.0
        %1138 = vmatprep.subr.mxu0 0.0
        %1139 = vmatpush1.xpose.msra.mxu0 0.0
        %1140 = vmatprep.subr.mxu0 0.0
        %1141 = vmatpush1.xpose.msra.mxu0 0.0
        %1142 = vmatprep.subr.mxu0 0.0
        %1143 = vmatpush1.xpose.msra.mxu0 0.0
        %1144 = vmatprep.subr.mxu0 0.0
        %1145 = vmatpush1.xpose.msra.mxu0 0.0
        %1146 = vmatprep.subr.mxu0 0.0
        %1147 = vmatpush1.xpose.msra.mxu0 0.0
        %1148 = vmatprep.subr.mxu0 0.0
        %1149 = vmatpush1.xpose.msra.mxu0 0.0
        %1150 = vmatprep.subr.mxu0 0.0
        %1151 = vmatpush1.xpose.msra.mxu0 0.0
        %1152 = vmatprep.subr.mxu0 0.0
        %1153 = vmatpush1.xpose.msra.mxu0 0.0
        %1154 = vmatprep.subr.mxu0 0.0
        %1155 = vmatpush1.xpose.msra.mxu0 0.0
        %1156 = vmatprep.subr.mxu0 0.0
        %1157 = vmatpush1.xpose.msra.mxu0 0.0
        %1158 = vmatprep.subr.mxu0 0.0
        %1159 = vmatpush1.xpose.msra.mxu0 0.0
        %1160 = vmatprep.subr.mxu0 0.0
        %1161 = vmatpush1.xpose.msra.mxu0 0.0
        %1162 = vmatprep.subr.mxu0 0.0
        %1163 = vmatpush1.xpose.msra.mxu0 0.0
        %1164 = vmatprep.subr.mxu0 0.0
        %1165 = vmatpush1.xpose.msra.mxu0 0.0
        %1166 = vmatprep.mubr.f32.mxu0 0.0
        %1167 = vmatmul.mubr.f32.gmra.mrb[0].mxu0 %v1055
        %v1168 = vpop.f32.mrb[0].mxu0
        %v1169 = vadd.f32 %v1031, %v1168
        %v1170 = vpop.f32.mrb[0].mxu0
        %1171 = vmatprep.mubr.f32.mxu0 0.0
        %1172 = vmatmul.mubr.f32.gmra.mrb[0].mxu0 %v1058
        %v1173 = vpop.f32.mrb[0].mxu0
        %v1174 = vadd.f32 %v1032, %v1173
        %v1175 = vpop.f32.mrb[0].mxu0
        %1176 = vmatprep.mubr.f32.mxu0 0.0
        %1177 = vmatmul.mubr.f32.gmra.mrb[0].mxu0 %v1061
        %v1178 = vpop.f32.mrb[0].mxu0
        %v1179 = vadd.f32 %v1033, %v1178
        %v1180 = vpop.f32.mrb[0].mxu0
        %1181 = vmatprep.mubr.f32.mxu0 0.0
        %1182 = vmatmul.mubr.f32.gmra.mrb[0].mxu0 %v1064
        %v1183 = vpop.f32.mrb[0].mxu0
        %v1184 = vadd.f32 %v1034, %v1183
        %v1185 = vpop.f32.mrb[0].mxu0
        %1186 = vmatprep.mubr.f32.mxu0 0.0
        %1187 = vmatmul.mubr.f32.gmra.mrb[0].mxu0 %v1067
        %v1188 = vpop.f32.mrb[0].mxu0
        %v1189 = vadd.f32 %v1035, %v1188
        %v1190 = vpop.f32.mrb[0].mxu0
        %1191 = vmatprep.mubr.f32.mxu0 0.0
        %1192 = vmatmul.mubr.f32.gmra.mrb[0].mxu0 %v1070
        %v1193 = vpop.f32.mrb[0].mxu0
        %v1194 = vadd.f32 %v1036, %v1193
        %v1195 = vpop.f32.mrb[0].mxu0
        %1196 = vmatprep.mubr.f32.mxu0 0.0
        %1197 = vmatmul.mubr.f32.gmra.mrb[0].mxu0 %v1073
        %v1198 = vpop.f32.mrb[0].mxu0
        %v1199 = vadd.f32 %v1037, %v1198
        %v1200 = vpop.f32.mrb[0].mxu0
        %1201 = vmatprep.mubr.f32.mxu0 0.0
        %1202 = vmatmul.mubr.f32.gmra.mrb[0].mxu0 %v1076
        %v1203 = vpop.f32.mrb[0].mxu0
        %v1204 = vadd.f32 %v1038, %v1203
        %v1205 = vpop.f32.mrb[0].mxu0
        %1206 = vdwg.mxu0
        %v1207 = vsel %vm868, %v1169, -inf
        %1208 = vmax.xlane.f32.xlu0 %v1207
        %v1209 = vpop.xlane.xlu0 %1208
        %v1210 = vsel %vm868, %v1174, -inf
        %1211 = vmax.xlane.f32.xlu0 %v1210
        %v1212 = vpop.xlane.xlu0 %1211
        %v1213 = vsel %vm868, %v1179, -inf
        %1214 = vmax.xlane.f32.xlu0 %v1213
        %v1215 = vpop.xlane.xlu0 %1214
        %v1216 = vsel %vm868, %v1184, -inf
        %1217 = vmax.xlane.f32.xlu0 %v1216
        %v1218 = vpop.xlane.xlu0 %1217
        %v1219 = vsel %vm868, %v1189, -inf
        %1220 = vmax.xlane.f32.xlu0 %v1219
        %v1221 = vpop.xlane.xlu0 %1220
        %v1222 = vsel %vm868, %v1194, -inf
        %1223 = vmax.xlane.f32.xlu0 %v1222
        %v1224 = vpop.xlane.xlu0 %1223
        %v1225 = vsel %vm868, %v1199, -inf
        %1226 = vmax.xlane.f32.xlu0 %v1225
        %v1227 = vpop.xlane.xlu0 %1226
        %v1228 = vsel %vm868, %v1204, -inf
        %1229 = vmax.xlane.f32.xlu0 %v1228
        %v1230 = vpop.xlane.xlu0 %1229
        %v1231 = vsub.f32 %v1169, %v1209
        %v1232 = vsub.f32 %v1174, %v1212
        %v1233 = vsub.f32 %v1179, %v1215
        %v1234 = vsub.f32 %v1184, %v1218
        %v1235 = vsub.f32 %v1189, %v1221
        %v1236 = vsub.f32 %v1194, %v1224
        %v1237 = vsub.f32 %v1199, %v1227
        %v1238 = vsub.f32 %v1204, %v1230
        %v1239 = vmul.f32 %v1231, 1.442695
        %v1240 = vpow.pop %v1239
        %v1241 = vmul.f32 %v1232, 1.442695
        %v1242 = vpow.pop %v1241
        %v1243 = vmul.f32 %v1233, 1.442695
        %v1244 = vpow.pop %v1243
        %v1245 = vmul.f32 %v1234, 1.442695
        %v1246 = vpow.pop %v1245
        %v1247 = vmul.f32 %v1235, 1.442695
        %v1248 = vpow.pop %v1247
        %v1249 = vmul.f32 %v1236, 1.442695
        %v1250 = vpow.pop %v1249
        %v1251 = vmul.f32 %v1237, 1.442695
        %v1252 = vpow.pop %v1251
        %v1253 = vmul.f32 %v1238, 1.442695
        %v1254 = vpow.pop %v1253
        %v1255 = vsel %vm868, %v1240, 0.0
        %1256 = vadd.xlane.f32.xlu0 %v1255
        %v1257 = vpop.xlane.xlu0 %1256
        %v1258 = vsel %vm868, %v1242, 0.0
        %1259 = vadd.xlane.f32.xlu0 %v1258
        %v1260 = vpop.xlane.xlu0 %1259
        %v1261 = vsel %vm868, %v1244, 0.0
        %1262 = vadd.xlane.f32.xlu0 %v1261
        %v1263 = vpop.xlane.xlu0 %1262
        %v1264 = vsel %vm868, %v1246, 0.0
        %1265 = vadd.xlane.f32.xlu0 %v1264
        %v1266 = vpop.xlane.xlu0 %1265
        %v1267 = vsel %vm868, %v1248, 0.0
        %1268 = vadd.xlane.f32.xlu0 %v1267
        %v1269 = vpop.xlane.xlu0 %1268
        %v1270 = vsel %vm868, %v1250, 0.0
        %1271 = vadd.xlane.f32.xlu0 %v1270
        %v1272 = vpop.xlane.xlu0 %1271
        %v1273 = vsel %vm868, %v1252, 0.0
        %1274 = vadd.xlane.f32.xlu0 %v1273
        %v1275 = vpop.xlane.xlu0 %1274
        %v1276 = vsel %vm868, %v1254, 0.0
        %1277 = vadd.xlane.f32.xlu0 %v1276
        %v1278 = vpop.xlane.xlu0 %1277
        %v1280 = vsel %vm868, %v1240, 0
        %v1283 = vsel %vm868, %v1242, 0
        %v1286 = vsel %vm868, %v1244, 0
        %v1289 = vsel %vm868, %v1246, 0
        %v1292 = vsel %vm868, %v1248, 0
        %v1295 = vsel %vm868, %v1250, 0
        %v1298 = vsel %vm868, %v1252, 0
        %v1301 = vsel %vm868, %v1254, 0
        %1303 = vmatprep.subr.mxu0 0.0
        %1304 = vmatpush1.msra.mxu0 %v828
        %1305 = vmatprep.subr.mxu0 0.0
        %1306 = vmatpush1.msra.mxu0 %v833
        %1307 = vmatprep.subr.mxu0 0.0
        %1308 = vmatpush1.msra.mxu0 %v838
        %1309 = vmatprep.subr.mxu0 0.0
        %1310 = vmatpush1.msra.mxu0 %v843
        %1311 = vmatprep.subr.mxu0 0.0
        %1312 = vmatpush1.msra.mxu0 %v848
        %1313 = vmatprep.subr.mxu0 0.0
        %1314 = vmatpush1.msra.mxu0 %v853
        %1315 = vmatprep.subr.mxu0 0.0
        %1316 = vmatpush1.msra.mxu0 %v858
        %1317 = vmatprep.subr.mxu0 0.0
        %1318 = vmatpush1.msra.mxu0 %v863
        %1319 = vmatprep.subr.mxu0 0.0
        %1320 = vmatpush1.msra.mxu0 0.0
        %1321 = vmatprep.subr.mxu0 0.0
        %1322 = vmatpush1.msra.mxu0 0.0
        %1323 = vmatprep.subr.mxu0 0.0
        %1324 = vmatpush1.msra.mxu0 0.0
        %1325 = vmatprep.subr.mxu0 0.0
        %1326 = vmatpush1.msra.mxu0 0.0
        %1327 = vmatprep.subr.mxu0 0.0
        %1328 = vmatpush1.msra.mxu0 0.0
        %1329 = vmatprep.subr.mxu0 0.0
        %1330 = vmatpush1.msra.mxu0 0.0
        %1331 = vmatprep.subr.mxu0 0.0
        %1332 = vmatpush1.msra.mxu0 0.0
        %1333 = vmatprep.subr.mxu0 0.0
        %1334 = vmatpush1.msra.mxu0 0.0
        %1335 = vmatprep.subr.mxu0 0.0
        %1336 = vmatpush1.msra.mxu0 0.0
        %1337 = vmatprep.subr.mxu0 0.0
        %1338 = vmatpush1.msra.mxu0 0.0
        %1339 = vmatprep.subr.mxu0 0.0
        %1340 = vmatpush1.msra.mxu0 0.0
        %1341 = vmatprep.subr.mxu0 0.0
        %1342 = vmatpush1.msra.mxu0 0.0
        %1343 = vmatprep.subr.mxu0 0.0
        %1344 = vmatpush1.msra.mxu0 0.0
        %1345 = vmatprep.subr.mxu0 0.0
        %1346 = vmatpush1.msra.mxu0 0.0
        %1347 = vmatprep.subr.mxu0 0.0
        %1348 = vmatpush1.msra.mxu0 0.0
        %1349 = vmatprep.subr.mxu0 0.0
        %1350 = vmatpush1.msra.mxu0 0.0
        %1351 = vmatprep.subr.mxu0 0.0
        %1352 = vmatpush1.msra.mxu0 0.0
        %1353 = vmatprep.subr.mxu0 0.0
        %1354 = vmatpush1.msra.mxu0 0.0
        %1355 = vmatprep.subr.mxu0 0.0
        %1356 = vmatpush1.msra.mxu0 0.0
        %1357 = vmatprep.subr.mxu0 0.0
        %1358 = vmatpush1.msra.mxu0 0.0
        %1359 = vmatprep.subr.mxu0 0.0
        %1360 = vmatpush1.msra.mxu0 0.0
        %1361 = vmatprep.subr.mxu0 0.0
        %1362 = vmatpush1.msra.mxu0 0.0
        %1363 = vmatprep.subr.mxu0 0.0
        %1364 = vmatpush1.msra.mxu0 0.0
        %1365 = vmatprep.subr.mxu0 0.0
        %1366 = vmatpush1.msra.mxu0 0.0
        %1367 = vmatprep.mubr.f32.mxu0 0.0
        %1368 = vmatmul.mubr.f32.gmra.mrb[0].mxu0 %v1280
        %v1369 = vpop.f32.mrb[0].mxu0
        %v1370 = vadd.f32 0.0, %v1369
        %v1371 = vpop.f32.mrb[0].mxu0
        %1372 = vmatprep.mubr.f32.mxu0 0.0
        %1373 = vmatmul.mubr.f32.gmra.mrb[0].mxu0 %v1283
        %v1374 = vpop.f32.mrb[0].mxu0
        %v1375 = vadd.f32 0.0, %v1374
        %v1376 = vpop.f32.mrb[0].mxu0
        %1377 = vmatprep.mubr.f32.mxu0 0.0
        %1378 = vmatmul.mubr.f32.gmra.mrb[0].mxu0 %v1286
        %v1379 = vpop.f32.mrb[0].mxu0
        %v1380 = vadd.f32 0.0, %v1379
        %v1381 = vpop.f32.mrb[0].mxu0
        %1382 = vmatprep.mubr.f32.mxu0 0.0
        %1383 = vmatmul.mubr.f32.gmra.mrb[0].mxu0 %v1289
        %v1384 = vpop.f32.mrb[0].mxu0
        %v1385 = vadd.f32 0.0, %v1384
        %v1386 = vpop.f32.mrb[0].mxu0
        %1387 = vmatprep.mubr.f32.mxu0 0.0
        %1388 = vmatmul.mubr.f32.gmra.mrb[0].mxu0 %v1292
        %v1389 = vpop.f32.mrb[0].mxu0
        %v1390 = vadd.f32 0.0, %v1389
        %v1391 = vpop.f32.mrb[0].mxu0
        %1392 = vmatprep.mubr.f32.mxu0 0.0
        %1393 = vmatmul.mubr.f32.gmra.mrb[0].mxu0 %v1295
        %v1394 = vpop.f32.mrb[0].mxu0
        %v1395 = vadd.f32 0.0, %v1394
        %v1396 = vpop.f32.mrb[0].mxu0
        %1397 = vmatprep.mubr.f32.mxu0 0.0
        %1398 = vmatmul.mubr.f32.gmra.mrb[0].mxu0 %v1298
        %v1399 = vpop.f32.mrb[0].mxu0
        %v1400 = vadd.f32 0.0, %v1399
        %v1401 = vpop.f32.mrb[0].mxu0
        %1402 = vmatprep.mubr.f32.mxu0 0.0
        %1403 = vmatmul.mubr.f32.gmra.mrb[0].mxu0 %v1301
        %v1404 = vpop.f32.mrb[0].mxu0
        %v1405 = vadd.f32 0.0, %v1404
        %v1406 = vpop.f32.mrb[0].mxu0
        %1407 = vdwg.mxu0
        %v1408 = vrcp.pop %v1257
        %v1409 = vrcp.pop %v1260
        %v1410 = vrcp.pop %v1263
        %v1411 = vrcp.pop %v1266
        %v1412 = vrcp.pop %v1269
        %v1413 = vrcp.pop %v1272
        %v1414 = vrcp.pop %v1275
        %v1415 = vrcp.pop %v1278
        %v1416 = vmul.f32 %v1370, %v1408
        %v1417 = vmul.f32 %v1375, %v1409
        %v1418 = vmul.f32 %v1380, %v1410
        %v1419 = vmul.f32 %v1385, %v1411
        %v1420 = vmul.f32 %v1390, %v1412
        %v1421 = vmul.f32 %v1395, %v1413
        %v1422 = vmul.f32 %v1400, %v1414
        %v1423 = vmul.f32 %v1405, %v1415
        %v1425 = vsel %vm1053, %v1051, 0
        %v1428 = vsel %vm1053, %v1052, 0
        %1430 = vmatprep.subr.mxu0 0.0
        %1431 = vmatpush1.xpose.msra.mxu0 %v1079
        %1432 = vmatprep.subr.mxu0 0.0
        %1433 = vmatpush1.xpose.msra.mxu0 %v1082
        %1434 = vmatprep.subr.mxu0 0.0
        %1435 = vmatpush1.xpose.msra.mxu0 %v1085
        %1436 = vmatprep.subr.mxu0 0.0
        %1437 = vmatpush1.xpose.msra.mxu0 %v1088
        %1438 = vmatprep.subr.mxu0 0.0
        %1439 = vmatpush1.xpose.msra.mxu0 %v1091
        %1440 = vmatprep.subr.mxu0 0.0
        %1441 = vmatpush1.xpose.msra.mxu0 %v1094
        %1442 = vmatprep.subr.mxu0 0.0
        %1443 = vmatpush1.xpose.msra.mxu0 %v1097
        %1444 = vmatprep.subr.mxu0 0.0
        %1445 = vmatpush1.xpose.msra.mxu0 %v1100
        %1446 = vmatprep.subr.mxu0 0.0
        %1447 = vmatpush1.xpose.msra.mxu0 0.0
        %1448 = vmatprep.subr.mxu0 0.0
        %1449 = vmatpush1.xpose.msra.mxu0 0.0
        %1450 = vmatprep.subr.mxu0 0.0
        %1451 = vmatpush1.xpose.msra.mxu0 0.0
        %1452 = vmatprep.subr.mxu0 0.0
        %1453 = vmatpush1.xpose.msra.mxu0 0.0
        %1454 = vmatprep.subr.mxu0 0.0
        %1455 = vmatpush1.xpose.msra.mxu0 0.0
        %1456 = vmatprep.subr.mxu0 0.0
        %1457 = vmatpush1.xpose.msra.mxu0 0.0
        %1458 = vmatprep.subr.mxu0 0.0
        %1459 = vmatpush1.xpose.msra.mxu0 0.0
        %1460 = vmatprep.subr.mxu0 0.0
        %1461 = vmatpush1.xpose.msra.mxu0 0.0
        %1462 = vmatprep.subr.mxu0 0.0
        %1463 = vmatpush1.xpose.msra.mxu0 0.0
        %1464 = vmatprep.subr.mxu0 0.0
        %1465 = vmatpush1.xpose.msra.mxu0 0.0
        %1466 = vmatprep.subr.mxu0 0.0
        %1467 = vmatpush1.xpose.msra.mxu0 0.0
        %1468 = vmatprep.subr.mxu0 0.0
        %1469 = vmatpush1.xpose.msra.mxu0 0.0
        %1470 = vmatprep.subr.mxu0 0.0
        %1471 = vmatpush1.xpose.msra.mxu0 0.0
        %1472 = vmatprep.subr.mxu0 0.0
        %1473 = vmatpush1.xpose.msra.mxu0 0.0
        %1474 = vmatprep.subr.mxu0 0.0
        %1475 = vmatpush1.xpose.msra.mxu0 0.0
        %1476 = vmatprep.subr.mxu0 0.0
        %1477 = vmatpush1.xpose.msra.mxu0 0.0
        %1478 = vmatprep.subr.mxu0 0.0
        %1479 = vmatpush1.xpose.msra.mxu0 0.0
        %1480 = vmatprep.subr.mxu0 0.0
        %1481 = vmatpush1.xpose.msra.mxu0 0.0
        %1482 = vmatprep.subr.mxu0 0.0
        %1483 = vmatpush1.xpose.msra.mxu0 0.0
        %1484 = vmatprep.subr.mxu0 0.0
        %1485 = vmatpush1.xpose.msra.mxu0 0.0
        %1486 = vmatprep.subr.mxu0 0.0
        %1487 = vmatpush1.xpose.msra.mxu0 0.0
        %1488 = vmatprep.subr.mxu0 0.0
        %1489 = vmatpush1.xpose.msra.mxu0 0.0
        %1490 = vmatprep.subr.mxu0 0.0
        %1491 = vmatpush1.xpose.msra.mxu0 0.0
        %1492 = vmatprep.subr.mxu0 0.0
        %1493 = vmatpush1.xpose.msra.mxu0 0.0
        %1494 = vmatprep.mubr.f32.mxu0 0.0
        %1495 = vmatmul.mubr.f32.gmra.mrb[0].mxu0 %v1425
        %v1496 = vpop.f32.mrb[0].mxu0
        %v1497 = vadd.f32 %v1039, %v1496
        %v1498 = vpop.f32.mrb[0].mxu0
        %1499 = vmatprep.mubr.f32.mxu0 0.0
        %1500 = vmatmul.mubr.f32.gmra.mrb[0].mxu0 %v1428
        %v1501 = vpop.f32.mrb[0].mxu0
        %v1502 = vadd.f32 %v1040, %v1501
        %v1503 = vpop.f32.mrb[0].mxu0
        %1504 = vdwg.mxu0
        %v1505 = vmul.f32 %v1051, %v944
        %v1506 = vmul.f32 %v1052, %v950
        %v1507 = vsel %vm1053, %v1505, 0.0
        %1508 = vadd.xlane.f32.xlu0 %v1507
        %v1509 = vpop.xlane.xlu0 %1508
        %v1510 = vsel %vm1053, %v1506, 0.0
        %1511 = vadd.xlane.f32.xlu0 %v1510
        %v1512 = vpop.xlane.xlu0 %1511
        %v1513 = vsel %vm868, %v1497, -inf
        %1514 = vmax.xlane.f32.xlu0 %v1513
        %v1515 = vpop.xlane.xlu0 %1514
        %v1516 = vsel %vm868, %v1502, -inf
        %1517 = vmax.xlane.f32.xlu0 %v1516
        %v1518 = vpop.xlane.xlu0 %1517
        %v1519 = vmax.f32 %v1515, %v1509
        %v1520 = vmax.f32 %v1518, %v1512
        %v1521 = vsub.f32 %v1497, %v1519
        %v1522 = vsub.f32 %v1502, %v1520
        %v1523 = vmul.f32 %v1521, 1.442695
        %v1524 = vpow.pop %v1523
        %v1525 = vmul.f32 %v1522, 1.442695
        %v1526 = vpow.pop %v1525
        %v1527 = vsub.f32 %v1509, %v1519
        %v1528 = vsub.f32 %v1512, %v1520
        %v1529 = vmul.f32 %v1527, 1.442695
        %v1530 = vpow.pop %v1529
        %v1531 = vmul.f32 %v1528, 1.442695
        %v1532 = vpow.pop %v1531
        %v1533 = vsel %vm868, %v1524, 0.0
        %1534 = vadd.xlane.f32.xlu0 %v1533
        %v1535 = vpop.xlane.xlu0 %1534
        %v1536 = vsel %vm868, %v1526, 0.0
        %1537 = vadd.xlane.f32.xlu0 %v1536
        %v1538 = vpop.xlane.xlu0 %1537
        %v1539 = vadd.f32 %v1535, %v1530
        %v1540 = vadd.f32 %v1538, %v1532
        %v1541 = vmul.f32 %v1530, %v1019
        %v1542 = vmul.f32 %v1532, %v1024
        %v1544 = vsel %vm868, %v1524, 0
        %v1547 = vsel %vm868, %v1526, 0
        %1549 = vmatprep.subr.mxu0 0.0
        %1550 = vmatpush1.msra.mxu0 %v828
        %1551 = vmatprep.subr.mxu0 0.0
        %1552 = vmatpush1.msra.mxu0 %v833
        %1553 = vmatprep.subr.mxu0 0.0
        %1554 = vmatpush1.msra.mxu0 %v838
        %1555 = vmatprep.subr.mxu0 0.0
        %1556 = vmatpush1.msra.mxu0 %v843
        %1557 = vmatprep.subr.mxu0 0.0
        %1558 = vmatpush1.msra.mxu0 %v848
        %1559 = vmatprep.subr.mxu0 0.0
        %1560 = vmatpush1.msra.mxu0 %v853
        %1561 = vmatprep.subr.mxu0 0.0
        %1562 = vmatpush1.msra.mxu0 %v858
        %1563 = vmatprep.subr.mxu0 0.0
        %1564 = vmatpush1.msra.mxu0 %v863
        %1565 = vmatprep.subr.mxu0 0.0
        %1566 = vmatpush1.msra.mxu0 0.0
        %1567 = vmatprep.subr.mxu0 0.0
        %1568 = vmatpush1.msra.mxu0 0.0
        %1569 = vmatprep.subr.mxu0 0.0
        %1570 = vmatpush1.msra.mxu0 0.0
        %1571 = vmatprep.subr.mxu0 0.0
        %1572 = vmatpush1.msra.mxu0 0.0
        %1573 = vmatprep.subr.mxu0 0.0
        %1574 = vmatpush1.msra.mxu0 0.0
        %1575 = vmatprep.subr.mxu0 0.0
        %1576 = vmatpush1.msra.mxu0 0.0
        %1577 = vmatprep.subr.mxu0 0.0
        %1578 = vmatpush1.msra.mxu0 0.0
        %1579 = vmatprep.subr.mxu0 0.0
        %1580 = vmatpush1.msra.mxu0 0.0
        %1581 = vmatprep.subr.mxu0 0.0
        %1582 = vmatpush1.msra.mxu0 0.0
        %1583 = vmatprep.subr.mxu0 0.0
        %1584 = vmatpush1.msra.mxu0 0.0
        %1585 = vmatprep.subr.mxu0 0.0
        %1586 = vmatpush1.msra.mxu0 0.0
        %1587 = vmatprep.subr.mxu0 0.0
        %1588 = vmatpush1.msra.mxu0 0.0
        %1589 = vmatprep.subr.mxu0 0.0
        %1590 = vmatpush1.msra.mxu0 0.0
        %1591 = vmatprep.subr.mxu0 0.0
        %1592 = vmatpush1.msra.mxu0 0.0
        %1593 = vmatprep.subr.mxu0 0.0
        %1594 = vmatpush1.msra.mxu0 0.0
        %1595 = vmatprep.subr.mxu0 0.0
        %1596 = vmatpush1.msra.mxu0 0.0
        %1597 = vmatprep.subr.mxu0 0.0
        %1598 = vmatpush1.msra.mxu0 0.0
        %1599 = vmatprep.subr.mxu0 0.0
        %1600 = vmatpush1.msra.mxu0 0.0
        %1601 = vmatprep.subr.mxu0 0.0
        %1602 = vmatpush1.msra.mxu0 0.0
        %1603 = vmatprep.subr.mxu0 0.0
        %1604 = vmatpush1.msra.mxu0 0.0
        %1605 = vmatprep.subr.mxu0 0.0
        %1606 = vmatpush1.msra.mxu0 0.0
        %1607 = vmatprep.subr.mxu0 0.0
        %1608 = vmatpush1.msra.mxu0 0.0
        %1609 = vmatprep.subr.mxu0 0.0
        %1610 = vmatpush1.msra.mxu0 0.0
        %1611 = vmatprep.subr.mxu0 0.0
        %1612 = vmatpush1.msra.mxu0 0.0
        %1613 = vmatprep.mubr.f32.mxu0 0.0
        %1614 = vmatmul.mubr.f32.gmra.mrb[0].mxu0 %v1544
        %v1615 = vpop.f32.mrb[0].mxu0
        %v1616 = vadd.f32 %v1541, %v1615
        %v1617 = vpop.f32.mrb[0].mxu0
        %1618 = vmatprep.mubr.f32.mxu0 0.0
        %1619 = vmatmul.mubr.f32.gmra.mrb[0].mxu0 %v1547
        %v1620 = vpop.f32.mrb[0].mxu0
        %v1621 = vadd.f32 %v1542, %v1620
        %v1622 = vpop.f32.mrb[0].mxu0
        %1623 = vdwg.mxu0
        %v1624 = vrcp.pop %v1539
        %v1625 = vrcp.pop %v1540
        %v1626 = vmul.f32 %v1616, %v1624
        %v1627 = vmul.f32 %v1621, %v1625
        %v1629 = vsel %vm1053, %v944, 0
        %v1632 = vsel %vm1053, %v950, 0
        %1634 = vmatprep.subr.mxu0 0.0
        %1635 = vmatpush1.xpose.msra.mxu0 %v1629
        %1636 = vmatprep.subr.mxu0 0.0
        %1637 = vmatpush1.xpose.msra.mxu0 %v1632
        %1638 = vmatprep.subr.mxu0 0.0
        %1639 = vmatpush1.xpose.msra.mxu0 0.0
        %1640 = vmatprep.subr.mxu0 0.0
        %1641 = vmatpush1.xpose.msra.mxu0 0.0
        %1642 = vmatprep.subr.mxu0 0.0
        %1643 = vmatpush1.xpose.msra.mxu0 0.0
        %1644 = vmatprep.subr.mxu0 0.0
        %1645 = vmatpush1.xpose.msra.mxu0 0.0
        %1646 = vmatprep.subr.mxu0 0.0
        %1647 = vmatpush1.xpose.msra.mxu0 0.0
        %1648 = vmatprep.subr.mxu0 0.0
        %1649 = vmatpush1.xpose.msra.mxu0 0.0
        %1650 = vmatprep.subr.mxu0 0.0
        %1651 = vmatpush1.xpose.msra.mxu0 0.0
        %1652 = vmatprep.subr.mxu0 0.0
        %1653 = vmatpush1.xpose.msra.mxu0 0.0
        %1654 = vmatprep.subr.mxu0 0.0
        %1655 = vmatpush1.xpose.msra.mxu0 0.0
        %1656 = vmatprep.subr.mxu0 0.0
        %1657 = vmatpush1.xpose.msra.mxu0 0.0
        %1658 = vmatprep.subr.mxu0 0.0
        %1659 = vmatpush1.xpose.msra.mxu0 0.0
        %1660 = vmatprep.subr.mxu0 0.0
        %1661 = vmatpush1.xpose.msra.mxu0 0.0
        %1662 = vmatprep.subr.mxu0 0.0
        %1663 = vmatpush1.xpose.msra.mxu0 0.0
        %1664 = vmatprep.subr.mxu0 0.0
        %1665 = vmatpush1.xpose.msra.mxu0 0.0
        %1666 = vmatprep.subr.mxu0 0.0
        %1667 = vmatpush1.xpose.msra.mxu0 0.0
        %1668 = vmatprep.subr.mxu0 0.0
        %1669 = vmatpush1.xpose.msra.mxu0 0.0
        %1670 = vmatprep.subr.mxu0 0.0
        %1671 = vmatpush1.xpose.msra.mxu0 0.0
        %1672 = vmatprep.subr.mxu0 0.0
        %1673 = vmatpush1.xpose.msra.mxu0 0.0
        %1674 = vmatprep.subr.mxu0 0.0
        %1675 = vmatpush1.xpose.msra.mxu0 0.0
        %1676 = vmatprep.subr.mxu0 0.0
        %1677 = vmatpush1.xpose.msra.mxu0 0.0
        %1678 = vmatprep.subr.mxu0 0.0
        %1679 = vmatpush1.xpose.msra.mxu0 0.0
        %1680 = vmatprep.subr.mxu0 0.0
        %1681 = vmatpush1.xpose.msra.mxu0 0.0
        %1682 = vmatprep.subr.mxu0 0.0
        %1683 = vmatpush1.xpose.msra.mxu0 0.0
        %1684 = vmatprep.subr.mxu0 0.0
        %1685 = vmatpush1.xpose.msra.mxu0 0.0
        %1686 = vmatprep.subr.mxu0 0.0
        %1687 = vmatpush1.xpose.msra.mxu0 0.0
        %1688 = vmatprep.subr.mxu0 0.0
        %1689 = vmatpush1.xpose.msra.mxu0 0.0
        %1690 = vmatprep.subr.mxu0 0.0
        %1691 = vmatpush1.xpose.msra.mxu0 0.0
        %1692 = vmatprep.subr.mxu0 0.0
        %1693 = vmatpush1.xpose.msra.mxu0 0.0
        %1694 = vmatprep.subr.mxu0 0.0
        %1695 = vmatpush1.xpose.msra.mxu0 0.0
        %1696 = vmatprep.subr.mxu0 0.0
        %1697 = vmatpush1.xpose.msra.mxu0 0.0
        %1698 = vmatprep.mubr.f32.mxu0 0.0
        %1699 = vmatmul.mubr.f32.gmra.mrb[0].mxu0 %v1425
        %v1700 = vpop.f32.mrb[0].mxu0
        %v1701 = vadd.f32 %v1041, %v1700
        %v1702 = vpop.f32.mrb[0].mxu0
        %1703 = vmatprep.mubr.f32.mxu0 0.0
        %1704 = vmatmul.mubr.f32.gmra.mrb[0].mxu0 %v1428
        %v1705 = vpop.f32.mrb[0].mxu0
        %v1706 = vadd.f32 %v1042, %v1705
        %v1707 = vpop.f32.mrb[0].mxu0
        %1708 = vdwg.mxu0
        %vm1709 = vcmask 130048
        %v1710 = vsel %vm1709, %v1701, -inf
        %1711 = vmax.xlane.f32.xlu0 %v1710
        %v1712 = vpop.xlane.xlu0 %1711
        %v1713 = vsel %vm1709, %v1706, -inf
        %1714 = vmax.xlane.f32.xlu0 %v1713
        %v1715 = vpop.xlane.xlu0 %1714
        %v1716 = vsub.f32 %v1701, %v1712
        %v1717 = vsub.f32 %v1706, %v1715
        %v1718 = vmul.f32 %v1716, 1.442695
        %v1719 = vpow.pop %v1718
        %v1720 = vmul.f32 %v1717, 1.442695
        %v1721 = vpow.pop %v1720
        %v1722 = vsel %vm1709, %v1719, 0.0
        %1723 = vadd.xlane.f32.xlu0 %v1722
        %v1724 = vpop.xlane.xlu0 %1723
        %v1725 = vsel %vm1709, %v1721, 0.0
        %1726 = vadd.xlane.f32.xlu0 %v1725
        %v1727 = vpop.xlane.xlu0 %1726
        %v1729 = vsel %vm1709, %v1719, 0
        %v1732 = vsel %vm1709, %v1721, 0
        %1734 = vmatprep.subr.mxu0 0.0
        %1735 = vmatpush1.msra.mxu0 %v1626
        %1736 = vmatprep.subr.mxu0 0.0
        %1737 = vmatpush1.msra.mxu0 %v1627
        %1738 = vmatprep.subr.mxu0 0.0
        %1739 = vmatpush1.msra.mxu0 0.0
        %1740 = vmatprep.subr.mxu0 0.0
        %1741 = vmatpush1.msra.mxu0 0.0
        %1742 = vmatprep.subr.mxu0 0.0
        %1743 = vmatpush1.msra.mxu0 0.0
        %1744 = vmatprep.subr.mxu0 0.0
        %1745 = vmatpush1.msra.mxu0 0.0
        %1746 = vmatprep.subr.mxu0 0.0
        %1747 = vmatpush1.msra.mxu0 0.0
        %1748 = vmatprep.subr.mxu0 0.0
        %1749 = vmatpush1.msra.mxu0 0.0
        %1750 = vmatprep.subr.mxu0 0.0
        %1751 = vmatpush1.msra.mxu0 0.0
        %1752 = vmatprep.subr.mxu0 0.0
        %1753 = vmatpush1.msra.mxu0 0.0
        %1754 = vmatprep.subr.mxu0 0.0
        %1755 = vmatpush1.msra.mxu0 0.0
        %1756 = vmatprep.subr.mxu0 0.0
        %1757 = vmatpush1.msra.mxu0 0.0
        %1758 = vmatprep.subr.mxu0 0.0
        %1759 = vmatpush1.msra.mxu0 0.0
        %1760 = vmatprep.subr.mxu0 0.0
        %1761 = vmatpush1.msra.mxu0 0.0
        %1762 = vmatprep.subr.mxu0 0.0
        %1763 = vmatpush1.msra.mxu0 0.0
        %1764 = vmatprep.subr.mxu0 0.0
        %1765 = vmatpush1.msra.mxu0 0.0
        %1766 = vmatprep.subr.mxu0 0.0
        %1767 = vmatpush1.msra.mxu0 0.0
        %1768 = vmatprep.subr.mxu0 0.0
        %1769 = vmatpush1.msra.mxu0 0.0
        %1770 = vmatprep.subr.mxu0 0.0
        %1771 = vmatpush1.msra.mxu0 0.0
        %1772 = vmatprep.subr.mxu0 0.0
        %1773 = vmatpush1.msra.mxu0 0.0
        %1774 = vmatprep.subr.mxu0 0.0
        %1775 = vmatpush1.msra.mxu0 0.0
        %1776 = vmatprep.subr.mxu0 0.0
        %1777 = vmatpush1.msra.mxu0 0.0
        %1778 = vmatprep.subr.mxu0 0.0
        %1779 = vmatpush1.msra.mxu0 0.0
        %1780 = vmatprep.subr.mxu0 0.0
        %1781 = vmatpush1.msra.mxu0 0.0
        %1782 = vmatprep.subr.mxu0 0.0
        %1783 = vmatpush1.msra.mxu0 0.0
        %1784 = vmatprep.subr.mxu0 0.0
        %1785 = vmatpush1.msra.mxu0 0.0
        %1786 = vmatprep.subr.mxu0 0.0
        %1787 = vmatpush1.msra.mxu0 0.0
        %1788 = vmatprep.subr.mxu0 0.0
        %1789 = vmatpush1.msra.mxu0 0.0
        %1790 = vmatprep.subr.mxu0 0.0
        %1791 = vmatpush1.msra.mxu0 0.0
        %1792 = vmatprep.subr.mxu0 0.0
        %1793 = vmatpush1.msra.mxu0 0.0
        %1794 = vmatprep.subr.mxu0 0.0
        %1795 = vmatpush1.msra.mxu0 0.0
        %1796 = vmatprep.subr.mxu0 0.0
        %1797 = vmatpush1.msra.mxu0 0.0
        %1798 = vmatprep.mubr.f32.mxu0 0.0
        %1799 = vmatmul.mubr.f32.gmra.mrb[0].mxu0 %v1729
        %v1800 = vpop.f32.mrb[0].mxu0
        %v1801 = vadd.f32 0.0, %v1800
        %v1802 = vpop.f32.mrb[0].mxu0
        %1803 = vmatprep.mubr.f32.mxu0 0.0
        %1804 = vmatmul.mubr.f32.gmra.mrb[0].mxu0 %v1732
        %v1805 = vpop.f32.mrb[0].mxu0
        %v1806 = vadd.f32 0.0, %v1805
        %v1807 = vpop.f32.mrb[0].mxu0
        %1808 = vdwg.mxu0
        %v1809 = vrcp.pop %v1724
        %v1810 = vrcp.pop %v1727
        %v1811 = vmul.f32 %v1801, %v1809
        %v1812 = vmul.f32 %v1806, %v1810
        %1813 = vrot.lane.b32.xlu0 %v1043, 96
        %v1814 = vpop.permute.xlu0 %1813
        %1815 = vrot.lane.b32.xlu0 %v1044, 96
        %v1816 = vpop.permute.xlu0 %1815
        %1817 = vrot.lane.b32.xlu0 %v1045, 96
        %v1818 = vpop.permute.xlu0 %1817
        %1819 = vrot.lane.b32.xlu0 %v1046, 96
        %v1820 = vpop.permute.xlu0 %1819
        %1821 = vrot.lane.b32.xlu0 %v1047, 96
        %v1822 = vpop.permute.xlu0 %1821
        %1823 = vrot.lane.b32.xlu0 %v1048, 96
        %v1824 = vpop.permute.xlu0 %1823
        %1825 = vrot.lane.b32.xlu0 %v1049, 96
        %v1826 = vpop.permute.xlu0 %1825
        %1827 = vrot.lane.b32.xlu0 %v1050, 96
        %v1828 = vpop.permute.xlu0 %1827
        %1829 = vrot.lane.b32.xlu0 %v717, 96
        %v1830 = vpop.permute.xlu0 %1829
        %1831 = vrot.lane.b32.xlu0 %v723, 96
        %v1832 = vpop.permute.xlu0 %1831
        %1833 = vrot.lane.b32.xlu0 %v729, 96
        %v1834 = vpop.permute.xlu0 %1833
        %1835 = vrot.lane.b32.xlu0 %v735, 96
        %v1836 = vpop.permute.xlu0 %1835
        %1837 = vrot.lane.b32.xlu0 %v741, 96
        %v1838 = vpop.permute.xlu0 %1837
        %1839 = vrot.lane.b32.xlu0 %v747, 96
        %v1840 = vpop.permute.xlu0 %1839
        %1841 = vrot.lane.b32.xlu0 %v753, 96
        %v1842 = vpop.permute.xlu0 %1841
        %1843 = vrot.lane.b32.xlu0 %v759, 96
        %v1844 = vpop.permute.xlu0 %1843
        %v1845 = vsel %vm1053, %v1814, 0
        %v1847 = vsel %vm1053, %v1816, 0
        %v1849 = vsel %vm1053, %v1818, 0
        %v1851 = vsel %vm1053, %v1820, 0
        %v1853 = vsel %vm1053, %v1822, 0
        %v1855 = vsel %vm1053, %v1824, 0
        %v1857 = vsel %vm1053, %v1826, 0
        %v1859 = vsel %vm1053, %v1828, 0
        %v1861 = vsel %vm1053, %v1830, 0
        %v1863 = vsel %vm1053, %v1832, 0
        %v1865 = vsel %vm1053, %v1834, 0
        %v1867 = vsel %vm1053, %v1836, 0
        %v1869 = vsel %vm1053, %v1838, 0
        %v1871 = vsel %vm1053, %v1840, 0
        %v1873 = vsel %vm1053, %v1842, 0
        %v1875 = vsel %vm1053, %v1844, 0
        %1877 = vmatprep.subr.mxu0 0.0
        %1878 = vmatpush1.xpose.msra.mxu0 %v1861
        %1879 = vmatprep.subr.mxu0 0.0
        %1880 = vmatpush1.xpose.msra.mxu0 %v1863
        %1881 = vmatprep.subr.mxu0 0.0
        %1882 = vmatpush1.xpose.msra.mxu0 %v1865
        %1883 = vmatprep.subr.mxu0 0.0
        %1884 = vmatpush1.xpose.msra.mxu0 %v1867
        %1885 = vmatprep.subr.mxu0 0.0
        %1886 = vmatpush1.xpose.msra.mxu0 %v1869
        %1887 = vmatprep.subr.mxu0 0.0
        %1888 = vmatpush1.xpose.msra.mxu0 %v1871
        %1889 = vmatprep.subr.mxu0 0.0
        %1890 = vmatpush1.xpose.msra.mxu0 %v1873
        %1891 = vmatprep.subr.mxu0 0.0
        %1892 = vmatpush1.xpose.msra.mxu0 %v1875
        %1893 = vmatprep.subr.mxu0 0.0
        %1894 = vmatpush1.xpose.msra.mxu0 0.0
        %1895 = vmatprep.subr.mxu0 0.0
        %1896 = vmatpush1.xpose.msra.mxu0 0.0
        %1897 = vmatprep.subr.mxu0 0.0
        %1898 = vmatpush1.xpose.msra.mxu0 0.0
        %1899 = vmatprep.subr.mxu0 0.0
        %1900 = vmatpush1.xpose.msra.mxu0 0.0
        %1901 = vmatprep.subr.mxu0 0.0
        %1902 = vmatpush1.xpose.msra.mxu0 0.0
        %1903 = vmatprep.subr.mxu0 0.0
        %1904 = vmatpush1.xpose.msra.mxu0 0.0
        %1905 = vmatprep.subr.mxu0 0.0
        %1906 = vmatpush1.xpose.msra.mxu0 0.0
        %1907 = vmatprep.subr.mxu0 0.0
        %1908 = vmatpush1.xpose.msra.mxu0 0.0
        %1909 = vmatprep.subr.mxu0 0.0
        %1910 = vmatpush1.xpose.msra.mxu0 0.0
        %1911 = vmatprep.subr.mxu0 0.0
        %1912 = vmatpush1.xpose.msra.mxu0 0.0
        %1913 = vmatprep.subr.mxu0 0.0
        %1914 = vmatpush1.xpose.msra.mxu0 0.0
        %1915 = vmatprep.subr.mxu0 0.0
        %1916 = vmatpush1.xpose.msra.mxu0 0.0
        %1917 = vmatprep.subr.mxu0 0.0
        %1918 = vmatpush1.xpose.msra.mxu0 0.0
        %1919 = vmatprep.subr.mxu0 0.0
        %1920 = vmatpush1.xpose.msra.mxu0 0.0
        %1921 = vmatprep.subr.mxu0 0.0
        %1922 = vmatpush1.xpose.msra.mxu0 0.0
        %1923 = vmatprep.subr.mxu0 0.0
        %1924 = vmatpush1.xpose.msra.mxu0 0.0
        %1925 = vmatprep.subr.mxu0 0.0
        %1926 = vmatpush1.xpose.msra.mxu0 0.0
        %1927 = vmatprep.subr.mxu0 0.0
        %1928 = vmatpush1.xpose.msra.mxu0 0.0
        %1929 = vmatprep.subr.mxu0 0.0
        %1930 = vmatpush1.xpose.msra.mxu0 0.0
        %1931 = vmatprep.subr.mxu0 0.0
        %1932 = vmatpush1.xpose.msra.mxu0 0.0
        %1933 = vmatprep.subr.mxu0 0.0
        %1934 = vmatpush1.xpose.msra.mxu0 0.0
        %1935 = vmatprep.subr.mxu0 0.0
        %1936 = vmatpush1.xpose.msra.mxu0 0.0
        %1937 = vmatprep.subr.mxu0 0.0
        %1938 = vmatpush1.xpose.msra.mxu0 0.0
        %1939 = vmatprep.subr.mxu0 0.0
        %1940 = vmatpush1.xpose.msra.mxu0 0.0
        %1941 = vmatprep.mubr.f32.mxu0 0.0
        %1942 = vmatmul.mubr.f32.gmra.mrb[0].mxu0 %v1845
        %v1943 = vpop.f32.mrb[0].mxu0
        %v1944 = vadd.f32 %v1031, %v1943
        %v1945 = vpop.f32.mrb[0].mxu0
        %1946 = vmatprep.mubr.f32.mxu0 0.0
        %1947 = vmatmul.mubr.f32.gmra.mrb[0].mxu0 %v1847
        %v1948 = vpop.f32.mrb[0].mxu0
        %v1949 = vadd.f32 %v1032, %v1948
        %v1950 = vpop.f32.mrb[0].mxu0
        %1951 = vmatprep.mubr.f32.mxu0 0.0
        %1952 = vmatmul.mubr.f32.gmra.mrb[0].mxu0 %v1849
        %v1953 = vpop.f32.mrb[0].mxu0
        %v1954 = vadd.f32 %v1033, %v1953
        %v1955 = vpop.f32.mrb[0].mxu0
        %1956 = vmatprep.mubr.f32.mxu0 0.0
        %1957 = vmatmul.mubr.f32.gmra.mrb[0].mxu0 %v1851
        %v1958 = vpop.f32.mrb[0].mxu0
        %v1959 = vadd.f32 %v1034, %v1958
        %v1960 = vpop.f32.mrb[0].mxu0
        %1961 = vmatprep.mubr.f32.mxu0 0.0
        %1962 = vmatmul.mubr.f32.gmra.mrb[0].mxu0 %v1853
        %v1963 = vpop.f32.mrb[0].mxu0
        %v1964 = vadd.f32 %v1035, %v1963
        %v1965 = vpop.f32.mrb[0].mxu0
        %1966 = vmatprep.mubr.f32.mxu0 0.0
        %1967 = vmatmul.mubr.f32.gmra.mrb[0].mxu0 %v1855
        %v1968 = vpop.f32.mrb[0].mxu0
        %v1969 = vadd.f32 %v1036, %v1968
        %v1970 = vpop.f32.mrb[0].mxu0
        %1971 = vmatprep.mubr.f32.mxu0 0.0
        %1972 = vmatmul.mubr.f32.gmra.mrb[0].mxu0 %v1857
        %v1973 = vpop.f32.mrb[0].mxu0
        %v1974 = vadd.f32 %v1037, %v1973
        %v1975 = vpop.f32.mrb[0].mxu0
        %1976 = vmatprep.mubr.f32.mxu0 0.0
        %1977 = vmatmul.mubr.f32.gmra.mrb[0].mxu0 %v1859
        %v1978 = vpop.f32.mrb[0].mxu0
        %v1979 = vadd.f32 %v1038, %v1978
        %v1980 = vpop.f32.mrb[0].mxu0
        %1981 = vdwg.mxu0
        %v1982 = vsel %vm868, %v1944, -inf
        %1983 = vmax.xlane.f32.xlu0 %v1982
        %v1984 = vpop.xlane.xlu0 %1983
        %v1985 = vsel %vm868, %v1949, -inf
        %1986 = vmax.xlane.f32.xlu0 %v1985
        %v1987 = vpop.xlane.xlu0 %1986
        %v1988 = vsel %vm868, %v1954, -inf
        %1989 = vmax.xlane.f32.xlu0 %v1988
        %v1990 = vpop.xlane.xlu0 %1989
        %v1991 = vsel %vm868, %v1959, -inf
        %1992 = vmax.xlane.f32.xlu0 %v1991
        %v1993 = vpop.xlane.xlu0 %1992
        %v1994 = vsel %vm868, %v1964, -inf
        %1995 = vmax.xlane.f32.xlu0 %v1994
        %v1996 = vpop.xlane.xlu0 %1995
        %v1997 = vsel %vm868, %v1969, -inf
        %1998 = vmax.xlane.f32.xlu0 %v1997
        %v1999 = vpop.xlane.xlu0 %1998
        %v2000 = vsel %vm868, %v1974, -inf
        %2001 = vmax.xlane.f32.xlu0 %v2000
        %v2002 = vpop.xlane.xlu0 %2001
        %v2003 = vsel %vm868, %v1979, -inf
        %2004 = vmax.xlane.f32.xlu0 %v2003
        %v2005 = vpop.xlane.xlu0 %2004
        %v2006 = vsub.f32 %v1944, %v1984
        %v2007 = vsub.f32 %v1949, %v1987
        %v2008 = vsub.f32 %v1954, %v1990
        %v2009 = vsub.f32 %v1959, %v1993
        %v2010 = vsub.f32 %v1964, %v1996
        %v2011 = vsub.f32 %v1969, %v1999
        %v2012 = vsub.f32 %v1974, %v2002
        %v2013 = vsub.f32 %v1979, %v2005
        %v2014 = vmul.f32 %v2006, 1.442695
        %v2015 = vpow.pop %v2014
        %v2016 = vmul.f32 %v2007, 1.442695
        %v2017 = vpow.pop %v2016
        %v2018 = vmul.f32 %v2008, 1.442695
        %v2019 = vpow.pop %v2018
        %v2020 = vmul.f32 %v2009, 1.442695
        %v2021 = vpow.pop %v2020
        %v2022 = vmul.f32 %v2010, 1.442695
        %v2023 = vpow.pop %v2022
        %v2024 = vmul.f32 %v2011, 1.442695
        %v2025 = vpow.pop %v2024
        %v2026 = vmul.f32 %v2012, 1.442695
        %v2027 = vpow.pop %v2026
        %v2028 = vmul.f32 %v2013, 1.442695
        %v2029 = vpow.pop %v2028
        %v2030 = vsel %vm868, %v2015, 0.0
        %2031 = vadd.xlane.f32.xlu0 %v2030
        %v2032 = vpop.xlane.xlu0 %2031
        %v2033 = vsel %vm868, %v2017, 0.0
        %2034 = vadd.xlane.f32.xlu0 %v2033
        %v2035 = vpop.xlane.xlu0 %2034
        %v2036 = vsel %vm868, %v2019, 0.0
        %2037 = vadd.xlane.f32.xlu0 %v2036
        %v2038 = vpop.xlane.xlu0 %2037
        %v2039 = vsel %vm868, %v2021, 0.0
        %2040 = vadd.xlane.f32.xlu0 %v2039
        %v2041 = vpop.xlane.xlu0 %2040
        %v2042 = vsel %vm868, %v2023, 0.0
        %2043 = vadd.xlane.f32.xlu0 %v2042
        %v2044 = vpop.xlane.xlu0 %2043
        %v2045 = vsel %vm868, %v2025, 0.0
        %2046 = vadd.xlane.f32.xlu0 %v2045
        %v2047 = vpop.xlane.xlu0 %2046
        %v2048 = vsel %vm868, %v2027, 0.0
        %2049 = vadd.xlane.f32.xlu0 %v2048
        %v2050 = vpop.xlane.xlu0 %2049
        %v2051 = vsel %vm868, %v2029, 0.0
        %2052 = vadd.xlane.f32.xlu0 %v2051
        %v2053 = vpop.xlane.xlu0 %2052
        %2062 = vrot.lane.b32.xlu0 %v828, 96
        %v2063 = vpop.permute.xlu0 %2062
        %2064 = vrot.lane.b32.xlu0 %v833, 96
        %v2065 = vpop.permute.xlu0 %2064
        %2066 = vrot.lane.b32.xlu0 %v838, 96
        %v2067 = vpop.permute.xlu0 %2066
        %2068 = vrot.lane.b32.xlu0 %v843, 96
        %v2069 = vpop.permute.xlu0 %2068
        %2070 = vrot.lane.b32.xlu0 %v848, 96
        %v2071 = vpop.permute.xlu0 %2070
        %2072 = vrot.lane.b32.xlu0 %v853, 96
        %v2073 = vpop.permute.xlu0 %2072
        %2074 = vrot.lane.b32.xlu0 %v858, 96
        %v2075 = vpop.permute.xlu0 %2074
        %2076 = vrot.lane.b32.xlu0 %v863, 96
        %v2077 = vpop.permute.xlu0 %2076
        %v2087 = vsel %vm868, %v2015, 0
        %v2090 = vsel %vm868, %v2017, 0
        %v2093 = vsel %vm868, %v2019, 0
        %v2096 = vsel %vm868, %v2021, 0
        %v2099 = vsel %vm868, %v2023, 0
        %v2102 = vsel %vm868, %v2025, 0
        %v2105 = vsel %vm868, %v2027, 0
        %v2108 = vsel %vm868, %v2029, 0
        %2110 = vmatprep.subr.mxu0 0.0
        %2111 = vmatpush1.msra.mxu0 %v2063
        %2112 = vmatprep.subr.mxu0 0.0
        %2113 = vmatpush1.msra.mxu0 %v2065
        %2114 = vmatprep.subr.mxu0 0.0
        %2115 = vmatpush1.msra.mxu0 %v2067
        %2116 = vmatprep.subr.mxu0 0.0
        %2117 = vmatpush1.msra.mxu0 %v2069
        %2118 = vmatprep.subr.mxu0 0.0
        %2119 = vmatpush1.msra.mxu0 %v2071
        %2120 = vmatprep.subr.mxu0 0.0
        %2121 = vmatpush1.msra.mxu0 %v2073
        %2122 = vmatprep.subr.mxu0 0.0
        %2123 = vmatpush1.msra.mxu0 %v2075
        %2124 = vmatprep.subr.mxu0 0.0
        %2125 = vmatpush1.msra.mxu0 %v2077
        %2126 = vmatprep.subr.mxu0 0.0
        %2127 = vmatpush1.msra.mxu0 0.0
        %2128 = vmatprep.subr.mxu0 0.0
        %2129 = vmatpush1.msra.mxu0 0.0
        %2130 = vmatprep.subr.mxu0 0.0
        %2131 = vmatpush1.msra.mxu0 0.0
        %2132 = vmatprep.subr.mxu0 0.0
        %2133 = vmatpush1.msra.mxu0 0.0
        %2134 = vmatprep.subr.mxu0 0.0
        %2135 = vmatpush1.msra.mxu0 0.0
        %2136 = vmatprep.subr.mxu0 0.0
        %2137 = vmatpush1.msra.mxu0 0.0
        %2138 = vmatprep.subr.mxu0 0.0
        %2139 = vmatpush1.msra.mxu0 0.0
        %2140 = vmatprep.subr.mxu0 0.0
        %2141 = vmatpush1.msra.mxu0 0.0
        %2142 = vmatprep.subr.mxu0 0.0
        %2143 = vmatpush1.msra.mxu0 0.0
        %2144 = vmatprep.subr.mxu0 0.0
        %2145 = vmatpush1.msra.mxu0 0.0
        %2146 = vmatprep.subr.mxu0 0.0
        %2147 = vmatpush1.msra.mxu0 0.0
        %2148 = vmatprep.subr.mxu0 0.0
        %2149 = vmatpush1.msra.mxu0 0.0
        %2150 = vmatprep.subr.mxu0 0.0
        %2151 = vmatpush1.msra.mxu0 0.0
        %2152 = vmatprep.subr.mxu0 0.0
        %2153 = vmatpush1.msra.mxu0 0.0
        %2154 = vmatprep.subr.mxu0 0.0
        %2155 = vmatpush1.msra.mxu0 0.0
        %2156 = vmatprep.subr.mxu0 0.0
        %2157 = vmatpush1.msra.mxu0 0.0
        %2158 = vmatprep.subr.mxu0 0.0
        %2159 = vmatpush1.msra.mxu0 0.0
        %2160 = vmatprep.subr.mxu0 0.0
        %2161 = vmatpush1.msra.mxu0 0.0
        %2162 = vmatprep.subr.mxu0 0.0
        %2163 = vmatpush1.msra.mxu0 0.0
        %2164 = vmatprep.subr.mxu0 0.0
        %2165 = vmatpush1.msra.mxu0 0.0
        %2166 = vmatprep.subr.mxu0 0.0
        %2167 = vmatpush1.msra.mxu0 0.0
        %2168 = vmatprep.subr.mxu0 0.0
        %2169 = vmatpush1.msra.mxu0 0.0
        %2170 = vmatprep.subr.mxu0 0.0
        %2171 = vmatpush1.msra.mxu0 0.0
        %2172 = vmatprep.subr.mxu0 0.0
        %2173 = vmatpush1.msra.mxu0 0.0
        %2174 = vmatprep.mubr.f32.mxu0 0.0
        %2175 = vmatmul.mubr.f32.gmra.mrb[0].mxu0 %v2087
        %v2176 = vpop.f32.mrb[0].mxu0
        %v2177 = vadd.f32 0.0, %v2176
        %v2178 = vpop.f32.mrb[0].mxu0
        %2179 = vmatprep.mubr.f32.mxu0 0.0
        %2180 = vmatmul.mubr.f32.gmra.mrb[0].mxu0 %v2090
        %v2181 = vpop.f32.mrb[0].mxu0
        %v2182 = vadd.f32 0.0, %v2181
        %v2183 = vpop.f32.mrb[0].mxu0
        %2184 = vmatprep.mubr.f32.mxu0 0.0
        %2185 = vmatmul.mubr.f32.gmra.mrb[0].mxu0 %v2093
        %v2186 = vpop.f32.mrb[0].mxu0
        %v2187 = vadd.f32 0.0, %v2186
        %v2188 = vpop.f32.mrb[0].mxu0
        %2189 = vmatprep.mubr.f32.mxu0 0.0
        %2190 = vmatmul.mubr.f32.gmra.mrb[0].mxu0 %v2096
        %v2191 = vpop.f32.mrb[0].mxu0
        %v2192 = vadd.f32 0.0, %v2191
        %v2193 = vpop.f32.mrb[0].mxu0
        %2194 = vmatprep.mubr.f32.mxu0 0.0
        %2195 = vmatmul.mubr.f32.gmra.mrb[0].mxu0 %v2099
        %v2196 = vpop.f32.mrb[0].mxu0
        %v2197 = vadd.f32 0.0, %v2196
        %v2198 = vpop.f32.mrb[0].mxu0
        %2199 = vmatprep.mubr.f32.mxu0 0.0
        %2200 = vmatmul.mubr.f32.gmra.mrb[0].mxu0 %v2102
        %v2201 = vpop.f32.mrb[0].mxu0
        %v2202 = vadd.f32 0.0, %v2201
        %v2203 = vpop.f32.mrb[0].mxu0
        %2204 = vmatprep.mubr.f32.mxu0 0.0
        %2205 = vmatmul.mubr.f32.gmra.mrb[0].mxu0 %v2105
        %v2206 = vpop.f32.mrb[0].mxu0
        %v2207 = vadd.f32 0.0, %v2206
        %v2208 = vpop.f32.mrb[0].mxu0
        %2209 = vmatprep.mubr.f32.mxu0 0.0
        %2210 = vmatmul.mubr.f32.gmra.mrb[0].mxu0 %v2108
        %v2211 = vpop.f32.mrb[0].mxu0
        %v2212 = vadd.f32 0.0, %v2211
        %v2213 = vpop.f32.mrb[0].mxu0
        %2214 = vdwg.mxu0
        %v2215 = vrcp.pop %v2032
        %v2216 = vrcp.pop %v2035
        %v2217 = vrcp.pop %v2038
        %v2218 = vrcp.pop %v2041
        %v2219 = vrcp.pop %v2044
        %v2220 = vrcp.pop %v2047
        %v2221 = vrcp.pop %v2050
        %v2222 = vrcp.pop %v2053
        %v2223 = vmul.f32 %v2177, %v2215
        %v2224 = vmul.f32 %v2182, %v2216
        %v2225 = vmul.f32 %v2187, %v2217
        %v2226 = vmul.f32 %v2192, %v2218
        %v2227 = vmul.f32 %v2197, %v2219
        %v2228 = vmul.f32 %v2202, %v2220
        %v2229 = vmul.f32 %v2207, %v2221
        %v2230 = vmul.f32 %v2212, %v2222
        %2231 = vrot.lane.b32.xlu0 %v1051, 96
        %v2232 = vpop.permute.xlu0 %2231
        %2233 = vrot.lane.b32.xlu0 %v1052, 96
        %v2234 = vpop.permute.xlu0 %2233
        %v2235 = vsel %vm1053, %v2232, 0
        %v2237 = vsel %vm1053, %v2234, 0
        %2239 = vmatprep.subr.mxu0 0.0
        %2240 = vmatpush1.xpose.msra.mxu0 %v1861
        %2241 = vmatprep.subr.mxu0 0.0
        %2242 = vmatpush1.xpose.msra.mxu0 %v1863
        %2243 = vmatprep.subr.mxu0 0.0
        %2244 = vmatpush1.xpose.msra.mxu0 %v1865
        %2245 = vmatprep.subr.mxu0 0.0
        %2246 = vmatpush1.xpose.msra.mxu0 %v1867
        %2247 = vmatprep.subr.mxu0 0.0
        %2248 = vmatpush1.xpose.msra.mxu0 %v1869
        %2249 = vmatprep.subr.mxu0 0.0
        %2250 = vmatpush1.xpose.msra.mxu0 %v1871
        %2251 = vmatprep.subr.mxu0 0.0
        %2252 = vmatpush1.xpose.msra.mxu0 %v1873
        %2253 = vmatprep.subr.mxu0 0.0
        %2254 = vmatpush1.xpose.msra.mxu0 %v1875
        %2255 = vmatprep.subr.mxu0 0.0
        %2256 = vmatpush1.xpose.msra.mxu0 0.0
        %2257 = vmatprep.subr.mxu0 0.0
        %2258 = vmatpush1.xpose.msra.mxu0 0.0
        %2259 = vmatprep.subr.mxu0 0.0
        %2260 = vmatpush1.xpose.msra.mxu0 0.0
        %2261 = vmatprep.subr.mxu0 0.0
        %2262 = vmatpush1.xpose.msra.mxu0 0.0
        %2263 = vmatprep.subr.mxu0 0.0
        %2264 = vmatpush1.xpose.msra.mxu0 0.0
        %2265 = vmatprep.subr.mxu0 0.0
        %2266 = vmatpush1.xpose.msra.mxu0 0.0
        %2267 = vmatprep.subr.mxu0 0.0
        %2268 = vmatpush1.xpose.msra.mxu0 0.0
        %2269 = vmatprep.subr.mxu0 0.0
        %2270 = vmatpush1.xpose.msra.mxu0 0.0
        %2271 = vmatprep.subr.mxu0 0.0
        %2272 = vmatpush1.xpose.msra.mxu0 0.0
        %2273 = vmatprep.subr.mxu0 0.0
        %2274 = vmatpush1.xpose.msra.mxu0 0.0
        %2275 = vmatprep.subr.mxu0 0.0
        %2276 = vmatpush1.xpose.msra.mxu0 0.0
        %2277 = vmatprep.subr.mxu0 0.0
        %2278 = vmatpush1.xpose.msra.mxu0 0.0
        %2279 = vmatprep.subr.mxu0 0.0
        %2280 = vmatpush1.xpose.msra.mxu0 0.0
        %2281 = vmatprep.subr.mxu0 0.0
        %2282 = vmatpush1.xpose.msra.mxu0 0.0
        %2283 = vmatprep.subr.mxu0 0.0
        %2284 = vmatpush1.xpose.msra.mxu0 0.0
        %2285 = vmatprep.subr.mxu0 0.0
        %2286 = vmatpush1.xpose.msra.mxu0 0.0
        %2287 = vmatprep.subr.mxu0 0.0
        %2288 = vmatpush1.xpose.msra.mxu0 0.0
        %2289 = vmatprep.subr.mxu0 0.0
        %2290 = vmatpush1.xpose.msra.mxu0 0.0
        %2291 = vmatprep.subr.mxu0 0.0
        %2292 = vmatpush1.xpose.msra.mxu0 0.0
        %2293 = vmatprep.subr.mxu0 0.0
        %2294 = vmatpush1.xpose.msra.mxu0 0.0
        %2295 = vmatprep.subr.mxu0 0.0
        %2296 = vmatpush1.xpose.msra.mxu0 0.0
        %2297 = vmatprep.subr.mxu0 0.0
        %2298 = vmatpush1.xpose.msra.mxu0 0.0
        %2299 = vmatprep.subr.mxu0 0.0
        %2300 = vmatpush1.xpose.msra.mxu0 0.0
        %2301 = vmatprep.subr.mxu0 0.0
        %2302 = vmatpush1.xpose.msra.mxu0 0.0
        %2303 = vmatprep.mubr.f32.mxu0 0.0
        %2304 = vmatmul.mubr.f32.gmra.mrb[0].mxu0 %v2235
        %v2305 = vpop.f32.mrb[0].mxu0
        %v2306 = vadd.f32 %v1039, %v2305
        %v2307 = vpop.f32.mrb[0].mxu0
        %2308 = vmatprep.mubr.f32.mxu0 0.0
        %2309 = vmatmul.mubr.f32.gmra.mrb[0].mxu0 %v2237
        %v2310 = vpop.f32.mrb[0].mxu0
        %v2311 = vadd.f32 %v1040, %v2310
        %v2312 = vpop.f32.mrb[0].mxu0
        %2313 = vdwg.mxu0
        %2316 = vrot.lane.b32.xlu0 %v1505, 96
        %v2317 = vpop.permute.xlu0 %2316
        %2318 = vrot.lane.b32.xlu0 %v1506, 96
        %v2319 = vpop.permute.xlu0 %2318
        %v2322 = vsel %vm1053, %v2317, 0.0
        %2323 = vadd.xlane.f32.xlu0 %v2322
        %v2324 = vpop.xlane.xlu0 %2323
        %v2325 = vsel %vm1053, %v2319, 0.0
        %2326 = vadd.xlane.f32.xlu0 %v2325
        %v2327 = vpop.xlane.xlu0 %2326
        %v2328 = vsel %vm868, %v2306, -inf
        %2329 = vmax.xlane.f32.xlu0 %v2328
        %v2330 = vpop.xlane.xlu0 %2329
        %v2331 = vsel %vm868, %v2311, -inf
        %2332 = vmax.xlane.f32.xlu0 %v2331
        %v2333 = vpop.xlane.xlu0 %2332
        %v2334 = vmax.f32 %v2330, %v2324
        %v2335 = vmax.f32 %v2333, %v2327
        %v2336 = vsub.f32 %v2306, %v2334
        %v2337 = vsub.f32 %v2311, %v2335
        %v2338 = vmul.f32 %v2336, 1.442695
        %v2339 = vpow.pop %v2338
        %v2340 = vmul.f32 %v2337, 1.442695
        %v2341 = vpow.pop %v2340
        %v2342 = vsub.f32 %v2324, %v2334
        %v2343 = vsub.f32 %v2327, %v2335
        %v2344 = vmul.f32 %v2342, 1.442695
        %v2345 = vpow.pop %v2344
        %v2346 = vmul.f32 %v2343, 1.442695
        %v2347 = vpow.pop %v2346
        %v2348 = vsel %vm868, %v2339, 0.0
        %2349 = vadd.xlane.f32.xlu0 %v2348
        %v2350 = vpop.xlane.xlu0 %2349
        %v2351 = vsel %vm868, %v2341, 0.0
        %2352 = vadd.xlane.f32.xlu0 %v2351
        %v2353 = vpop.xlane.xlu0 %2352
        %v2354 = vadd.f32 %v2350, %v2345
        %v2355 = vadd.f32 %v2353, %v2347
        %v2356 = vmul.f32 %v2345, %v1019
        %v2357 = vmul.f32 %v2347, %v1024
        %2360 = vrot.lane.b32.xlu0 %v2356, 96
        %v2361 = vpop.permute.xlu0 %2360
        %2362 = vrot.lane.b32.xlu0 %v2357, 96
        %v2363 = vpop.permute.xlu0 %2362
        %v2367 = vsel %vm868, %v2339, 0
        %v2370 = vsel %vm868, %v2341, 0
        %2372 = vmatprep.subr.mxu0 0.0
        %2373 = vmatpush1.msra.mxu0 %v2063
        %2374 = vmatprep.subr.mxu0 0.0
        %2375 = vmatpush1.msra.mxu0 %v2065
        %2376 = vmatprep.subr.mxu0 0.0
        %2377 = vmatpush1.msra.mxu0 %v2067
        %2378 = vmatprep.subr.mxu0 0.0
        %2379 = vmatpush1.msra.mxu0 %v2069
        %2380 = vmatprep.subr.mxu0 0.0
        %2381 = vmatpush1.msra.mxu0 %v2071
        %2382 = vmatprep.subr.mxu0 0.0
        %2383 = vmatpush1.msra.mxu0 %v2073
        %2384 = vmatprep.subr.mxu0 0.0
        %2385 = vmatpush1.msra.mxu0 %v2075
        %2386 = vmatprep.subr.mxu0 0.0
        %2387 = vmatpush1.msra.mxu0 %v2077
        %2388 = vmatprep.subr.mxu0 0.0
        %2389 = vmatpush1.msra.mxu0 0.0
        %2390 = vmatprep.subr.mxu0 0.0
        %2391 = vmatpush1.msra.mxu0 0.0
        %2392 = vmatprep.subr.mxu0 0.0
        %2393 = vmatpush1.msra.mxu0 0.0
        %2394 = vmatprep.subr.mxu0 0.0
        %2395 = vmatpush1.msra.mxu0 0.0
        %2396 = vmatprep.subr.mxu0 0.0
        %2397 = vmatpush1.msra.mxu0 0.0
        %2398 = vmatprep.subr.mxu0 0.0
        %2399 = vmatpush1.msra.mxu0 0.0
        %2400 = vmatprep.subr.mxu0 0.0
        %2401 = vmatpush1.msra.mxu0 0.0
        %2402 = vmatprep.subr.mxu0 0.0
        %2403 = vmatpush1.msra.mxu0 0.0
        %2404 = vmatprep.subr.mxu0 0.0
        %2405 = vmatpush1.msra.mxu0 0.0
        %2406 = vmatprep.subr.mxu0 0.0
        %2407 = vmatpush1.msra.mxu0 0.0
        %2408 = vmatprep.subr.mxu0 0.0
        %2409 = vmatpush1.msra.mxu0 0.0
        %2410 = vmatprep.subr.mxu0 0.0
        %2411 = vmatpush1.msra.mxu0 0.0
        %2412 = vmatprep.subr.mxu0 0.0
        %2413 = vmatpush1.msra.mxu0 0.0
        %2414 = vmatprep.subr.mxu0 0.0
        %2415 = vmatpush1.msra.mxu0 0.0
        %2416 = vmatprep.subr.mxu0 0.0
        %2417 = vmatpush1.msra.mxu0 0.0
        %2418 = vmatprep.subr.mxu0 0.0
        %2419 = vmatpush1.msra.mxu0 0.0
        %2420 = vmatprep.subr.mxu0 0.0
        %2421 = vmatpush1.msra.mxu0 0.0
        %2422 = vmatprep.subr.mxu0 0.0
        %2423 = vmatpush1.msra.mxu0 0.0
        %2424 = vmatprep.subr.mxu0 0.0
        %2425 = vmatpush1.msra.mxu0 0.0
        %2426 = vmatprep.subr.mxu0 0.0
        %2427 = vmatpush1.msra.mxu0 0.0
        %2428 = vmatprep.subr.mxu0 0.0
        %2429 = vmatpush1.msra.mxu0 0.0
        %2430 = vmatprep.subr.mxu0 0.0
        %2431 = vmatpush1.msra.mxu0 0.0
        %2432 = vmatprep.subr.mxu0 0.0
        %2433 = vmatpush1.msra.mxu0 0.0
        %2434 = vmatprep.subr.mxu0 0.0
        %2435 = vmatpush1.msra.mxu0 0.0
        %2436 = vmatprep.mubr.f32.mxu0 0.0
        %2437 = vmatmul.mubr.f32.gmra.mrb[0].mxu0 %v2367
        %v2438 = vpop.f32.mrb[0].mxu0
        %v2439 = vadd.f32 %v2361, %v2438
        %v2440 = vpop.f32.mrb[0].mxu0
        %2441 = vmatprep.mubr.f32.mxu0 0.0
        %2442 = vmatmul.mubr.f32.gmra.mrb[0].mxu0 %v2370
        %v2443 = vpop.f32.mrb[0].mxu0
        %v2444 = vadd.f32 %v2363, %v2443
        %v2445 = vpop.f32.mrb[0].mxu0
        %2446 = vdwg.mxu0
        %v2447 = vrcp.pop %v2354
        %v2448 = vrcp.pop %v2355
        %v2449 = vmul.f32 %v2439, %v2447
        %v2450 = vmul.f32 %v2444, %v2448
        %2451 = vrot.lane.b32.xlu0 %v944, 96
        %v2452 = vpop.permute.xlu0 %2451
        %2453 = vrot.lane.b32.xlu0 %v950, 96
        %v2454 = vpop.permute.xlu0 %2453
        %v2455 = vsel %vm1053, %v2452, 0
        %v2457 = vsel %vm1053, %v2454, 0
        %2459 = vmatprep.subr.mxu0 0.0
        %2460 = vmatpush1.xpose.msra.mxu0 %v2455
        %2461 = vmatprep.subr.mxu0 0.0
        %2462 = vmatpush1.xpose.msra.mxu0 %v2457
        %2463 = vmatprep.subr.mxu0 0.0
        %2464 = vmatpush1.xpose.msra.mxu0 0.0
        %2465 = vmatprep.subr.mxu0 0.0
        %2466 = vmatpush1.xpose.msra.mxu0 0.0
        %2467 = vmatprep.subr.mxu0 0.0
        %2468 = vmatpush1.xpose.msra.mxu0 0.0
        %2469 = vmatprep.subr.mxu0 0.0
        %2470 = vmatpush1.xpose.msra.mxu0 0.0
        %2471 = vmatprep.subr.mxu0 0.0
        %2472 = vmatpush1.xpose.msra.mxu0 0.0
        %2473 = vmatprep.subr.mxu0 0.0
        %2474 = vmatpush1.xpose.msra.mxu0 0.0
        %2475 = vmatprep.subr.mxu0 0.0
        %2476 = vmatpush1.xpose.msra.mxu0 0.0
        %2477 = vmatprep.subr.mxu0 0.0
        %2478 = vmatpush1.xpose.msra.mxu0 0.0
        %2479 = vmatprep.subr.mxu0 0.0
        %2480 = vmatpush1.xpose.msra.mxu0 0.0
        %2481 = vmatprep.subr.mxu0 0.0
        %2482 = vmatpush1.xpose.msra.mxu0 0.0
        %2483 = vmatprep.subr.mxu0 0.0
        %2484 = vmatpush1.xpose.msra.mxu0 0.0
        %2485 = vmatprep.subr.mxu0 0.0
        %2486 = vmatpush1.xpose.msra.mxu0 0.0
        %2487 = vmatprep.subr.mxu0 0.0
        %2488 = vmatpush1.xpose.msra.mxu0 0.0
        %2489 = vmatprep.subr.mxu0 0.0
        %2490 = vmatpush1.xpose.msra.mxu0 0.0
        %2491 = vmatprep.subr.mxu0 0.0
        %2492 = vmatpush1.xpose.msra.mxu0 0.0
        %2493 = vmatprep.subr.mxu0 0.0
        %2494 = vmatpush1.xpose.msra.mxu0 0.0
        %2495 = vmatprep.subr.mxu0 0.0
        %2496 = vmatpush1.xpose.msra.mxu0 0.0
        %2497 = vmatprep.subr.mxu0 0.0
        %2498 = vmatpush1.xpose.msra.mxu0 0.0
        %2499 = vmatprep.subr.mxu0 0.0
        %2500 = vmatpush1.xpose.msra.mxu0 0.0
        %2501 = vmatprep.subr.mxu0 0.0
        %2502 = vmatpush1.xpose.msra.mxu0 0.0
        %2503 = vmatprep.subr.mxu0 0.0
        %2504 = vmatpush1.xpose.msra.mxu0 0.0
        %2505 = vmatprep.subr.mxu0 0.0
        %2506 = vmatpush1.xpose.msra.mxu0 0.0
        %2507 = vmatprep.subr.mxu0 0.0
        %2508 = vmatpush1.xpose.msra.mxu0 0.0
        %2509 = vmatprep.subr.mxu0 0.0
        %2510 = vmatpush1.xpose.msra.mxu0 0.0
        %2511 = vmatprep.subr.mxu0 0.0
        %2512 = vmatpush1.xpose.msra.mxu0 0.0
        %2513 = vmatprep.subr.mxu0 0.0
        %2514 = vmatpush1.xpose.msra.mxu0 0.0
        %2515 = vmatprep.subr.mxu0 0.0
        %2516 = vmatpush1.xpose.msra.mxu0 0.0
        %2517 = vmatprep.subr.mxu0 0.0
        %2518 = vmatpush1.xpose.msra.mxu0 0.0
        %2519 = vmatprep.subr.mxu0 0.0
        %2520 = vmatpush1.xpose.msra.mxu0 0.0
        %2521 = vmatprep.subr.mxu0 0.0
        %2522 = vmatpush1.xpose.msra.mxu0 0.0
        %2523 = vmatprep.mubr.f32.mxu0 0.0
        %2524 = vmatmul.mubr.f32.gmra.mrb[0].mxu0 %v2235
        %v2525 = vpop.f32.mrb[0].mxu0
        %v2526 = vadd.f32 %v1041, %v2525
        %v2527 = vpop.f32.mrb[0].mxu0
        %2528 = vmatprep.mubr.f32.mxu0 0.0
        %2529 = vmatmul.mubr.f32.gmra.mrb[0].mxu0 %v2237
        %v2530 = vpop.f32.mrb[0].mxu0
        %v2531 = vadd.f32 %v1042, %v2530
        %v2532 = vpop.f32.mrb[0].mxu0
        %2533 = vdwg.mxu0
        %v2534 = vsel %vm1709, %v2526, -inf
        %2535 = vmax.xlane.f32.xlu0 %v2534
        %v2536 = vpop.xlane.xlu0 %2535
        %v2537 = vsel %vm1709, %v2531, -inf
        %2538 = vmax.xlane.f32.xlu0 %v2537
        %v2539 = vpop.xlane.xlu0 %2538
        %v2540 = vsub.f32 %v2526, %v2536
        %v2541 = vsub.f32 %v2531, %v2539
        %v2542 = vmul.f32 %v2540, 1.442695
        %v2543 = vpow.pop %v2542
        %v2544 = vmul.f32 %v2541, 1.442695
        %v2545 = vpow.pop %v2544
        %v2546 = vsel %vm1709, %v2543, 0.0
        %2547 = vadd.xlane.f32.xlu0 %v2546
        %v2548 = vpop.xlane.xlu0 %2547
        %v2549 = vsel %vm1709, %v2545, 0.0
        %2550 = vadd.xlane.f32.xlu0 %v2549
        %v2551 = vpop.xlane.xlu0 %2550
        %v2553 = vsel %vm1709, %v2543, 0
        %v2556 = vsel %vm1709, %v2545, 0
        %2558 = vmatprep.subr.mxu0 0.0
        %2559 = vmatpush1.msra.mxu0 %v2449
        %2560 = vmatprep.subr.mxu0 0.0
        %2561 = vmatpush1.msra.mxu0 %v2450
        %2562 = vmatprep.subr.mxu0 0.0
        %2563 = vmatpush1.msra.mxu0 0.0
        %2564 = vmatprep.subr.mxu0 0.0
        %2565 = vmatpush1.msra.mxu0 0.0
        %2566 = vmatprep.subr.mxu0 0.0
        %2567 = vmatpush1.msra.mxu0 0.0
        %2568 = vmatprep.subr.mxu0 0.0
        %2569 = vmatpush1.msra.mxu0 0.0
        %2570 = vmatprep.subr.mxu0 0.0
        %2571 = vmatpush1.msra.mxu0 0.0
        %2572 = vmatprep.subr.mxu0 0.0
        %2573 = vmatpush1.msra.mxu0 0.0
        %2574 = vmatprep.subr.mxu0 0.0
        %2575 = vmatpush1.msra.mxu0 0.0
        %2576 = vmatprep.subr.mxu0 0.0
        %2577 = vmatpush1.msra.mxu0 0.0
        %2578 = vmatprep.subr.mxu0 0.0
        %2579 = vmatpush1.msra.mxu0 0.0
        %2580 = vmatprep.subr.mxu0 0.0
        %2581 = vmatpush1.msra.mxu0 0.0
        %2582 = vmatprep.subr.mxu0 0.0
        %2583 = vmatpush1.msra.mxu0 0.0
        %2584 = vmatprep.subr.mxu0 0.0
        %2585 = vmatpush1.msra.mxu0 0.0
        %2586 = vmatprep.subr.mxu0 0.0
        %2587 = vmatpush1.msra.mxu0 0.0
        %2588 = vmatprep.subr.mxu0 0.0
        %2589 = vmatpush1.msra.mxu0 0.0
        %2590 = vmatprep.subr.mxu0 0.0
        %2591 = vmatpush1.msra.mxu0 0.0
        %2592 = vmatprep.subr.mxu0 0.0
        %2593 = vmatpush1.msra.mxu0 0.0
        %2594 = vmatprep.subr.mxu0 0.0
        %2595 = vmatpush1.msra.mxu0 0.0
        %2596 = vmatprep.subr.mxu0 0.0
        %2597 = vmatpush1.msra.mxu0 0.0
        %2598 = vmatprep.subr.mxu0 0.0
        %2599 = vmatpush1.msra.mxu0 0.0
        %2600 = vmatprep.subr.mxu0 0.0
        %2601 = vmatpush1.msra.mxu0 0.0
        %2602 = vmatprep.subr.mxu0 0.0
        %2603 = vmatpush1.msra.mxu0 0.0
        %2604 = vmatprep.subr.mxu0 0.0
        %2605 = vmatpush1.msra.mxu0 0.0
        %2606 = vmatprep.subr.mxu0 0.0
        %2607 = vmatpush1.msra.mxu0 0.0
        %2608 = vmatprep.subr.mxu0 0.0
        %2609 = vmatpush1.msra.mxu0 0.0
        %2610 = vmatprep.subr.mxu0 0.0
        %2611 = vmatpush1.msra.mxu0 0.0
        %2612 = vmatprep.subr.mxu0 0.0
        %2613 = vmatpush1.msra.mxu0 0.0
        %2614 = vmatprep.subr.mxu0 0.0
        %2615 = vmatpush1.msra.mxu0 0.0
        %2616 = vmatprep.subr.mxu0 0.0
        %2617 = vmatpush1.msra.mxu0 0.0
        %2618 = vmatprep.subr.mxu0 0.0
        %2619 = vmatpush1.msra.mxu0 0.0
        %2620 = vmatprep.subr.mxu0 0.0
        %2621 = vmatpush1.msra.mxu0 0.0
        %2622 = vmatprep.mubr.f32.mxu0 0.0
        %2623 = vmatmul.mubr.f32.gmra.mrb[0].mxu0 %v2553
        %v2624 = vpop.f32.mrb[0].mxu0
        %v2625 = vadd.f32 0.0, %v2624
        %v2626 = vpop.f32.mrb[0].mxu0
        %2627 = vmatprep.mubr.f32.mxu0 0.0
        %2628 = vmatmul.mubr.f32.gmra.mrb[0].mxu0 %v2556
        %v2629 = vpop.f32.mrb[0].mxu0
        %v2630 = vadd.f32 0.0, %v2629
        %v2631 = vpop.f32.mrb[0].mxu0
        %2632 = vdwg.mxu0
        %v2633 = vrcp.pop %v2548
        %v2634 = vrcp.pop %v2551
        %v2635 = vmul.f32 %v2625, %v2633
        %v2636 = vmul.f32 %v2630, %v2634
        %2637 = vrot.lane.b32.xlu0 %v1043, 64
        %v2638 = vpop.permute.xlu0 %2637
        %2639 = vrot.lane.b32.xlu0 %v1044, 64
        %v2640 = vpop.permute.xlu0 %2639
        %2641 = vrot.lane.b32.xlu0 %v1045, 64
        %v2642 = vpop.permute.xlu0 %2641
        %2643 = vrot.lane.b32.xlu0 %v1046, 64
        %v2644 = vpop.permute.xlu0 %2643
        %2645 = vrot.lane.b32.xlu0 %v1047, 64
        %v2646 = vpop.permute.xlu0 %2645
        %2647 = vrot.lane.b32.xlu0 %v1048, 64
        %v2648 = vpop.permute.xlu0 %2647
        %2649 = vrot.lane.b32.xlu0 %v1049, 64
        %v2650 = vpop.permute.xlu0 %2649
        %2651 = vrot.lane.b32.xlu0 %v1050, 64
        %v2652 = vpop.permute.xlu0 %2651
        %2653 = vrot.lane.b32.xlu0 %v717, 64
        %v2654 = vpop.permute.xlu0 %2653
        %2655 = vrot.lane.b32.xlu0 %v723, 64
        %v2656 = vpop.permute.xlu0 %2655
        %2657 = vrot.lane.b32.xlu0 %v729, 64
        %v2658 = vpop.permute.xlu0 %2657
        %2659 = vrot.lane.b32.xlu0 %v735, 64
        %v2660 = vpop.permute.xlu0 %2659
        %2661 = vrot.lane.b32.xlu0 %v741, 64
        %v2662 = vpop.permute.xlu0 %2661
        %2663 = vrot.lane.b32.xlu0 %v747, 64
        %v2664 = vpop.permute.xlu0 %2663
        %2665 = vrot.lane.b32.xlu0 %v753, 64
        %v2666 = vpop.permute.xlu0 %2665
        %2667 = vrot.lane.b32.xlu0 %v759, 64
        %v2668 = vpop.permute.xlu0 %2667
        %v2669 = vsel %vm1053, %v2638, 0
        %v2671 = vsel %vm1053, %v2640, 0
        %v2673 = vsel %vm1053, %v2642, 0
        %v2675 = vsel %vm1053, %v2644, 0
        %v2677 = vsel %vm1053, %v2646, 0
        %v2679 = vsel %vm1053, %v2648, 0
        %v2681 = vsel %vm1053, %v2650, 0
        %v2683 = vsel %vm1053, %v2652, 0
        %v2685 = vsel %vm1053, %v2654, 0
        %v2687 = vsel %vm1053, %v2656, 0
        %v2689 = vsel %vm1053, %v2658, 0
        %v2691 = vsel %vm1053, %v2660, 0
        %v2693 = vsel %vm1053, %v2662, 0
        %v2695 = vsel %vm1053, %v2664, 0
        %v2697 = vsel %vm1053, %v2666, 0
        %v2699 = vsel %vm1053, %v2668, 0
        %2701 = vmatprep.subr.mxu0 0.0
        %2702 = vmatpush1.xpose.msra.mxu0 %v2685
        %2703 = vmatprep.subr.mxu0 0.0
        %2704 = vmatpush1.xpose.msra.mxu0 %v2687
        %2705 = vmatprep.subr.mxu0 0.0
        %2706 = vmatpush1.xpose.msra.mxu0 %v2689
        %2707 = vmatprep.subr.mxu0 0.0
        %2708 = vmatpush1.xpose.msra.mxu0 %v2691
        %2709 = vmatprep.subr.mxu0 0.0
        %2710 = vmatpush1.xpose.msra.mxu0 %v2693
        %2711 = vmatprep.subr.mxu0 0.0
        %2712 = vmatpush1.xpose.msra.mxu0 %v2695
        %2713 = vmatprep.subr.mxu0 0.0
        %2714 = vmatpush1.xpose.msra.mxu0 %v2697
        %2715 = vmatprep.subr.mxu0 0.0
        %2716 = vmatpush1.xpose.msra.mxu0 %v2699
        %2717 = vmatprep.subr.mxu0 0.0
        %2718 = vmatpush1.xpose.msra.mxu0 0.0
        %2719 = vmatprep.subr.mxu0 0.0
        %2720 = vmatpush1.xpose.msra.mxu0 0.0
        %2721 = vmatprep.subr.mxu0 0.0
        %2722 = vmatpush1.xpose.msra.mxu0 0.0
        %2723 = vmatprep.subr.mxu0 0.0
        %2724 = vmatpush1.xpose.msra.mxu0 0.0
        %2725 = vmatprep.subr.mxu0 0.0
        %2726 = vmatpush1.xpose.msra.mxu0 0.0
        %2727 = vmatprep.subr.mxu0 0.0
        %2728 = vmatpush1.xpose.msra.mxu0 0.0
        %2729 = vmatprep.subr.mxu0 0.0
        %2730 = vmatpush1.xpose.msra.mxu0 0.0
        %2731 = vmatprep.subr.mxu0 0.0
        %2732 = vmatpush1.xpose.msra.mxu0 0.0
        %2733 = vmatprep.subr.mxu0 0.0
        %2734 = vmatpush1.xpose.msra.mxu0 0.0
        %2735 = vmatprep.subr.mxu0 0.0
        %2736 = vmatpush1.xpose.msra.mxu0 0.0
        %2737 = vmatprep.subr.mxu0 0.0
        %2738 = vmatpush1.xpose.msra.mxu0 0.0
        %2739 = vmatprep.subr.mxu0 0.0
        %2740 = vmatpush1.xpose.msra.mxu0 0.0
        %2741 = vmatprep.subr.mxu0 0.0
        %2742 = vmatpush1.xpose.msra.mxu0 0.0
        %2743 = vmatprep.subr.mxu0 0.0
        %2744 = vmatpush1.xpose.msra.mxu0 0.0
        %2745 = vmatprep.subr.mxu0 0.0
        %2746 = vmatpush1.xpose.msra.mxu0 0.0
        %2747 = vmatprep.subr.mxu0 0.0
        %2748 = vmatpush1.xpose.msra.mxu0 0.0
        %2749 = vmatprep.subr.mxu0 0.0
        %2750 = vmatpush1.xpose.msra.mxu0 0.0
        %2751 = vmatprep.subr.mxu0 0.0
        %2752 = vmatpush1.xpose.msra.mxu0 0.0
        %2753 = vmatprep.subr.mxu0 0.0
        %2754 = vmatpush1.xpose.msra.mxu0 0.0
        %2755 = vmatprep.subr.mxu0 0.0
        %2756 = vmatpush1.xpose.msra.mxu0 0.0
        %2757 = vmatprep.subr.mxu0 0.0
        %2758 = vmatpush1.xpose.msra.mxu0 0.0
        %2759 = vmatprep.subr.mxu0 0.0
        %2760 = vmatpush1.xpose.msra.mxu0 0.0
        %2761 = vmatprep.subr.mxu0 0.0
        %2762 = vmatpush1.xpose.msra.mxu0 0.0
        %2763 = vmatprep.subr.mxu0 0.0
        %2764 = vmatpush1.xpose.msra.mxu0 0.0
        %2765 = vmatprep.mubr.f32.mxu0 0.0
        %2766 = vmatmul.mubr.f32.gmra.mrb[0].mxu0 %v2669
        %v2767 = vpop.f32.mrb[0].mxu0
        %v2768 = vadd.f32 %v1031, %v2767
        %v2769 = vpop.f32.mrb[0].mxu0
        %2770 = vmatprep.mubr.f32.mxu0 0.0
        %2771 = vmatmul.mubr.f32.gmra.mrb[0].mxu0 %v2671
        %v2772 = vpop.f32.mrb[0].mxu0
        %v2773 = vadd.f32 %v1032, %v2772
        %v2774 = vpop.f32.mrb[0].mxu0
        %2775 = vmatprep.mubr.f32.mxu0 0.0
        %2776 = vmatmul.mubr.f32.gmra.mrb[0].mxu0 %v2673
        %v2777 = vpop.f32.mrb[0].mxu0
        %v2778 = vadd.f32 %v1033, %v2777
        %v2779 = vpop.f32.mrb[0].mxu0
        %2780 = vmatprep.mubr.f32.mxu0 0.0
        %2781 = vmatmul.mubr.f32.gmra.mrb[0].mxu0 %v2675
        %v2782 = vpop.f32.mrb[0].mxu0
        %v2783 = vadd.f32 %v1034, %v2782
        %v2784 = vpop.f32.mrb[0].mxu0
        %2785 = vmatprep.mubr.f32.mxu0 0.0
        %2786 = vmatmul.mubr.f32.gmra.mrb[0].mxu0 %v2677
        %v2787 = vpop.f32.mrb[0].mxu0
        %v2788 = vadd.f32 %v1035, %v2787
        %v2789 = vpop.f32.mrb[0].mxu0
        %2790 = vmatprep.mubr.f32.mxu0 0.0
        %2791 = vmatmul.mubr.f32.gmra.mrb[0].mxu0 %v2679
        %v2792 = vpop.f32.mrb[0].mxu0
        %v2793 = vadd.f32 %v1036, %v2792
        %v2794 = vpop.f32.mrb[0].mxu0
        %2795 = vmatprep.mubr.f32.mxu0 0.0
        %2796 = vmatmul.mubr.f32.gmra.mrb[0].mxu0 %v2681
        %v2797 = vpop.f32.mrb[0].mxu0
        %v2798 = vadd.f32 %v1037, %v2797
        %v2799 = vpop.f32.mrb[0].mxu0
        %2800 = vmatprep.mubr.f32.mxu0 0.0
        %2801 = vmatmul.mubr.f32.gmra.mrb[0].mxu0 %v2683
        %v2802 = vpop.f32.mrb[0].mxu0
        %v2803 = vadd.f32 %v1038, %v2802
        %v2804 = vpop.f32.mrb[0].mxu0
        %2805 = vdwg.mxu0
        %v2806 = vsel %vm868, %v2768, -inf
        %2807 = vmax.xlane.f32.xlu0 %v2806
        %v2808 = vpop.xlane.xlu0 %2807
        %v2809 = vsel %vm868, %v2773, -inf
        %2810 = vmax.xlane.f32.xlu0 %v2809
        %v2811 = vpop.xlane.xlu0 %2810
        %v2812 = vsel %vm868, %v2778, -inf
        %2813 = vmax.xlane.f32.xlu0 %v2812
        %v2814 = vpop.xlane.xlu0 %2813
        %v2815 = vsel %vm868, %v2783, -inf
        %2816 = vmax.xlane.f32.xlu0 %v2815
        %v2817 = vpop.xlane.xlu0 %2816
        %v2818 = vsel %vm868, %v2788, -inf
        %2819 = vmax.xlane.f32.xlu0 %v2818
        %v2820 = vpop.xlane.xlu0 %2819
        %v2821 = vsel %vm868, %v2793, -inf
        %2822 = vmax.xlane.f32.xlu0 %v2821
        %v2823 = vpop.xlane.xlu0 %2822
        %v2824 = vsel %vm868, %v2798, -inf
        %2825 = vmax.xlane.f32.xlu0 %v2824
        %v2826 = vpop.xlane.xlu0 %2825
        %v2827 = vsel %vm868, %v2803, -inf
        %2828 = vmax.xlane.f32.xlu0 %v2827
        %v2829 = vpop.xlane.xlu0 %2828
        %v2830 = vsub.f32 %v2768, %v2808
        %v2831 = vsub.f32 %v2773, %v2811
        %v2832 = vsub.f32 %v2778, %v2814
        %v2833 = vsub.f32 %v2783, %v2817
        %v2834 = vsub.f32 %v2788, %v2820
        %v2835 = vsub.f32 %v2793, %v2823
        %v2836 = vsub.f32 %v2798, %v2826
        %v2837 = vsub.f32 %v2803, %v2829
        %v2838 = vmul.f32 %v2830, 1.442695
        %v2839 = vpow.pop %v2838
        %v2840 = vmul.f32 %v2831, 1.442695
        %v2841 = vpow.pop %v2840
        %v2842 = vmul.f32 %v2832, 1.442695
        %v2843 = vpow.pop %v2842
        %v2844 = vmul.f32 %v2833, 1.442695
        %v2845 = vpow.pop %v2844
        %v2846 = vmul.f32 %v2834, 1.442695
        %v2847 = vpow.pop %v2846
        %v2848 = vmul.f32 %v2835, 1.442695
        %v2849 = vpow.pop %v2848
        %v2850 = vmul.f32 %v2836, 1.442695
        %v2851 = vpow.pop %v2850
        %v2852 = vmul.f32 %v2837, 1.442695
        %v2853 = vpow.pop %v2852
        %v2854 = vsel %vm868, %v2839, 0.0
        %2855 = vadd.xlane.f32.xlu0 %v2854
        %v2856 = vpop.xlane.xlu0 %2855
        %v2857 = vsel %vm868, %v2841, 0.0
        %2858 = vadd.xlane.f32.xlu0 %v2857
        %v2859 = vpop.xlane.xlu0 %2858
        %v2860 = vsel %vm868, %v2843, 0.0
        %2861 = vadd.xlane.f32.xlu0 %v2860
        %v2862 = vpop.xlane.xlu0 %2861
        %v2863 = vsel %vm868, %v2845, 0.0
        %2864 = vadd.xlane.f32.xlu0 %v2863
        %v2865 = vpop.xlane.xlu0 %2864
        %v2866 = vsel %vm868, %v2847, 0.0
        %2867 = vadd.xlane.f32.xlu0 %v2866
        %v2868 = vpop.xlane.xlu0 %2867
        %v2869 = vsel %vm868, %v2849, 0.0
        %2870 = vadd.xlane.f32.xlu0 %v2869
        %v2871 = vpop.xlane.xlu0 %2870
        %v2872 = vsel %vm868, %v2851, 0.0
        %2873 = vadd.xlane.f32.xlu0 %v2872
        %v2874 = vpop.xlane.xlu0 %2873
        %v2875 = vsel %vm868, %v2853, 0.0
        %2876 = vadd.xlane.f32.xlu0 %v2875
        %v2877 = vpop.xlane.xlu0 %2876
        %2878 = vrot.lane.b32.xlu0 %v828, 64
        %v2879 = vpop.permute.xlu0 %2878
        %2880 = vrot.lane.b32.xlu0 %v833, 64
        %v2881 = vpop.permute.xlu0 %2880
        %2882 = vrot.lane.b32.xlu0 %v838, 64
        %v2883 = vpop.permute.xlu0 %2882
        %2884 = vrot.lane.b32.xlu0 %v843, 64
        %v2885 = vpop.permute.xlu0 %2884
        %2886 = vrot.lane.b32.xlu0 %v848, 64
        %v2887 = vpop.permute.xlu0 %2886
        %2888 = vrot.lane.b32.xlu0 %v853, 64
        %v2889 = vpop.permute.xlu0 %2888
        %2890 = vrot.lane.b32.xlu0 %v858, 64
        %v2891 = vpop.permute.xlu0 %2890
        %2892 = vrot.lane.b32.xlu0 %v863, 64
        %v2893 = vpop.permute.xlu0 %2892
        %v2903 = vsel %vm868, %v2839, 0
        %v2906 = vsel %vm868, %v2841, 0
        %v2909 = vsel %vm868, %v2843, 0
        %v2912 = vsel %vm868, %v2845, 0
        %v2915 = vsel %vm868, %v2847, 0
        %v2918 = vsel %vm868, %v2849, 0
        %v2921 = vsel %vm868, %v2851, 0
        %v2924 = vsel %vm868, %v2853, 0
        %2926 = vmatprep.subr.mxu0 0.0
        %2927 = vmatpush1.msra.mxu0 %v2879
        %2928 = vmatprep.subr.mxu0 0.0
        %2929 = vmatpush1.msra.mxu0 %v2881
        %2930 = vmatprep.subr.mxu0 0.0
        %2931 = vmatpush1.msra.mxu0 %v2883
        %2932 = vmatprep.subr.mxu0 0.0
        %2933 = vmatpush1.msra.mxu0 %v2885
        %2934 = vmatprep.subr.mxu0 0.0
        %2935 = vmatpush1.msra.mxu0 %v2887
        %2936 = vmatprep.subr.mxu0 0.0
        %2937 = vmatpush1.msra.mxu0 %v2889
        %2938 = vmatprep.subr.mxu0 0.0
        %2939 = vmatpush1.msra.mxu0 %v2891
        %2940 = vmatprep.subr.mxu0 0.0
        %2941 = vmatpush1.msra.mxu0 %v2893
        %2942 = vmatprep.subr.mxu0 0.0
        %2943 = vmatpush1.msra.mxu0 0.0
        %2944 = vmatprep.subr.mxu0 0.0
        %2945 = vmatpush1.msra.mxu0 0.0
        %2946 = vmatprep.subr.mxu0 0.0
        %2947 = vmatpush1.msra.mxu0 0.0
        %2948 = vmatprep.subr.mxu0 0.0
        %2949 = vmatpush1.msra.mxu0 0.0
        %2950 = vmatprep.subr.mxu0 0.0
        %2951 = vmatpush1.msra.mxu0 0.0
        %2952 = vmatprep.subr.mxu0 0.0
        %2953 = vmatpush1.msra.mxu0 0.0
        %2954 = vmatprep.subr.mxu0 0.0
        %2955 = vmatpush1.msra.mxu0 0.0
        %2956 = vmatprep.subr.mxu0 0.0
        %2957 = vmatpush1.msra.mxu0 0.0
        %2958 = vmatprep.subr.mxu0 0.0
        %2959 = vmatpush1.msra.mxu0 0.0
        %2960 = vmatprep.subr.mxu0 0.0
        %2961 = vmatpush1.msra.mxu0 0.0
        %2962 = vmatprep.subr.mxu0 0.0
        %2963 = vmatpush1.msra.mxu0 0.0
        %2964 = vmatprep.subr.mxu0 0.0
        %2965 = vmatpush1.msra.mxu0 0.0
        %2966 = vmatprep.subr.mxu0 0.0
        %2967 = vmatpush1.msra.mxu0 0.0
        %2968 = vmatprep.subr.mxu0 0.0
        %2969 = vmatpush1.msra.mxu0 0.0
        %2970 = vmatprep.subr.mxu0 0.0
        %2971 = vmatpush1.msra.mxu0 0.0
        %2972 = vmatprep.subr.mxu0 0.0
        %2973 = vmatpush1.msra.mxu0 0.0
        %2974 = vmatprep.subr.mxu0 0.0
        %2975 = vmatpush1.msra.mxu0 0.0
        %2976 = vmatprep.subr.mxu0 0.0
        %2977 = vmatpush1.msra.mxu0 0.0
        %2978 = vmatprep.subr.mxu0 0.0
        %2979 = vmatpush1.msra.mxu0 0.0
        %2980 = vmatprep.subr.mxu0 0.0
        %2981 = vmatpush1.msra.mxu0 0.0
        %2982 = vmatprep.subr.mxu0 0.0
        %2983 = vmatpush1.msra.mxu0 0.0
        %2984 = vmatprep.subr.mxu0 0.0
        %2985 = vmatpush1.msra.mxu0 0.0
        %2986 = vmatprep.subr.mxu0 0.0
        %2987 = vmatpush1.msra.mxu0 0.0
        %2988 = vmatprep.subr.mxu0 0.0
        %2989 = vmatpush1.msra.mxu0 0.0
        %2990 = vmatprep.mubr.f32.mxu0 0.0
        %2991 = vmatmul.mubr.f32.gmra.mrb[0].mxu0 %v2903
        %v2992 = vpop.f32.mrb[0].mxu0
        %v2993 = vadd.f32 0.0, %v2992
        %v2994 = vpop.f32.mrb[0].mxu0
        %2995 = vmatprep.mubr.f32.mxu0 0.0
        %2996 = vmatmul.mubr.f32.gmra.mrb[0].mxu0 %v2906
        %v2997 = vpop.f32.mrb[0].mxu0
        %v2998 = vadd.f32 0.0, %v2997
        %v2999 = vpop.f32.mrb[0].mxu0
        %3000 = vmatprep.mubr.f32.mxu0 0.0
        %3001 = vmatmul.mubr.f32.gmra.mrb[0].mxu0 %v2909
        %v3002 = vpop.f32.mrb[0].mxu0
        %v3003 = vadd.f32 0.0, %v3002
        %v3004 = vpop.f32.mrb[0].mxu0
        %3005 = vmatprep.mubr.f32.mxu0 0.0
        %3006 = vmatmul.mubr.f32.gmra.mrb[0].mxu0 %v2912
        %v3007 = vpop.f32.mrb[0].mxu0
        %v3008 = vadd.f32 0.0, %v3007
        %v3009 = vpop.f32.mrb[0].mxu0
        %3010 = vmatprep.mubr.f32.mxu0 0.0
        %3011 = vmatmul.mubr.f32.gmra.mrb[0].mxu0 %v2915
        %v3012 = vpop.f32.mrb[0].mxu0
        %v3013 = vadd.f32 0.0, %v3012
        %v3014 = vpop.f32.mrb[0].mxu0
        %3015 = vmatprep.mubr.f32.mxu0 0.0
        %3016 = vmatmul.mubr.f32.gmra.mrb[0].mxu0 %v2918
        %v3017 = vpop.f32.mrb[0].mxu0
        %v3018 = vadd.f32 0.0, %v3017
        %v3019 = vpop.f32.mrb[0].mxu0
        %3020 = vmatprep.mubr.f32.mxu0 0.0
        %3021 = vmatmul.mubr.f32.gmra.mrb[0].mxu0 %v2921
        %v3022 = vpop.f32.mrb[0].mxu0
        %v3023 = vadd.f32 0.0, %v3022
        %v3024 = vpop.f32.mrb[0].mxu0
        %3025 = vmatprep.mubr.f32.mxu0 0.0
        %3026 = vmatmul.mubr.f32.gmra.mrb[0].mxu0 %v2924
        %v3027 = vpop.f32.mrb[0].mxu0
        %v3028 = vadd.f32 0.0, %v3027
        %v3029 = vpop.f32.mrb[0].mxu0
        %3030 = vdwg.mxu0
        %v3031 = vrcp.pop %v2856
        %v3032 = vrcp.pop %v2859
        %v3033 = vrcp.pop %v2862
        %v3034 = vrcp.pop %v2865
        %v3035 = vrcp.pop %v2868
        %v3036 = vrcp.pop %v2871
        %v3037 = vrcp.pop %v2874
        %v3038 = vrcp.pop %v2877
        %v3039 = vmul.f32 %v2993, %v3031
        %v3040 = vmul.f32 %v2998, %v3032
        %v3041 = vmul.f32 %v3003, %v3033
        %v3042 = vmul.f32 %v3008, %v3034
        %v3043 = vmul.f32 %v3013, %v3035
        %v3044 = vmul.f32 %v3018, %v3036
        %v3045 = vmul.f32 %v3023, %v3037
        %v3046 = vmul.f32 %v3028, %v3038
        %3047 = vrot.lane.b32.xlu0 %v1051, 64
        %v3048 = vpop.permute.xlu0 %3047
        %3049 = vrot.lane.b32.xlu0 %v1052, 64
        %v3050 = vpop.permute.xlu0 %3049
        %v3051 = vsel %vm1053, %v3048, 0
        %v3053 = vsel %vm1053, %v3050, 0
        %3055 = vmatprep.subr.mxu0 0.0
        %3056 = vmatpush1.xpose.msra.mxu0 %v2685
        %3057 = vmatprep.subr.mxu0 0.0
        %3058 = vmatpush1.xpose.msra.mxu0 %v2687
        %3059 = vmatprep.subr.mxu0 0.0
        %3060 = vmatpush1.xpose.msra.mxu0 %v2689
        %3061 = vmatprep.subr.mxu0 0.0
        %3062 = vmatpush1.xpose.msra.mxu0 %v2691
        %3063 = vmatprep.subr.mxu0 0.0
        %3064 = vmatpush1.xpose.msra.mxu0 %v2693
        %3065 = vmatprep.subr.mxu0 0.0
        %3066 = vmatpush1.xpose.msra.mxu0 %v2695
        %3067 = vmatprep.subr.mxu0 0.0
        %3068 = vmatpush1.xpose.msra.mxu0 %v2697
        %3069 = vmatprep.subr.mxu0 0.0
        %3070 = vmatpush1.xpose.msra.mxu0 %v2699
        %3071 = vmatprep.subr.mxu0 0.0
        %3072 = vmatpush1.xpose.msra.mxu0 0.0
        %3073 = vmatprep.subr.mxu0 0.0
        %3074 = vmatpush1.xpose.msra.mxu0 0.0
        %3075 = vmatprep.subr.mxu0 0.0
        %3076 = vmatpush1.xpose.msra.mxu0 0.0
        %3077 = vmatprep.subr.mxu0 0.0
        %3078 = vmatpush1.xpose.msra.mxu0 0.0
        %3079 = vmatprep.subr.mxu0 0.0
        %3080 = vmatpush1.xpose.msra.mxu0 0.0
        %3081 = vmatprep.subr.mxu0 0.0
        %3082 = vmatpush1.xpose.msra.mxu0 0.0
        %3083 = vmatprep.subr.mxu0 0.0
        %3084 = vmatpush1.xpose.msra.mxu0 0.0
        %3085 = vmatprep.subr.mxu0 0.0
        %3086 = vmatpush1.xpose.msra.mxu0 0.0
        %3087 = vmatprep.subr.mxu0 0.0
        %3088 = vmatpush1.xpose.msra.mxu0 0.0
        %3089 = vmatprep.subr.mxu0 0.0
        %3090 = vmatpush1.xpose.msra.mxu0 0.0
        %3091 = vmatprep.subr.mxu0 0.0
        %3092 = vmatpush1.xpose.msra.mxu0 0.0
        %3093 = vmatprep.subr.mxu0 0.0
        %3094 = vmatpush1.xpose.msra.mxu0 0.0
        %3095 = vmatprep.subr.mxu0 0.0
        %3096 = vmatpush1.xpose.msra.mxu0 0.0
        %3097 = vmatprep.subr.mxu0 0.0
        %3098 = vmatpush1.xpose.msra.mxu0 0.0
        %3099 = vmatprep.subr.mxu0 0.0
        %3100 = vmatpush1.xpose.msra.mxu0 0.0
        %3101 = vmatprep.subr.mxu0 0.0
        %3102 = vmatpush1.xpose.msra.mxu0 0.0
        %3103 = vmatprep.subr.mxu0 0.0
        %3104 = vmatpush1.xpose.msra.mxu0 0.0
        %3105 = vmatprep.subr.mxu0 0.0
        %3106 = vmatpush1.xpose.msra.mxu0 0.0
        %3107 = vmatprep.subr.mxu0 0.0
        %3108 = vmatpush1.xpose.msra.mxu0 0.0
        %3109 = vmatprep.subr.mxu0 0.0
        %3110 = vmatpush1.xpose.msra.mxu0 0.0
        %3111 = vmatprep.subr.mxu0 0.0
        %3112 = vmatpush1.xpose.msra.mxu0 0.0
        %3113 = vmatprep.subr.mxu0 0.0
        %3114 = vmatpush1.xpose.msra.mxu0 0.0
        %3115 = vmatprep.subr.mxu0 0.0
        %3116 = vmatpush1.xpose.msra.mxu0 0.0
        %3117 = vmatprep.subr.mxu0 0.0
        %3118 = vmatpush1.xpose.msra.mxu0 0.0
        %3119 = vmatprep.mubr.f32.mxu0 0.0
        %3120 = vmatmul.mubr.f32.gmra.mrb[0].mxu0 %v3051
        %v3121 = vpop.f32.mrb[0].mxu0
        %v3122 = vadd.f32 %v1039, %v3121
        %v3123 = vpop.f32.mrb[0].mxu0
        %3124 = vmatprep.mubr.f32.mxu0 0.0
        %3125 = vmatmul.mubr.f32.gmra.mrb[0].mxu0 %v3053
        %v3126 = vpop.f32.mrb[0].mxu0
        %v3127 = vadd.f32 %v1040, %v3126
        %v3128 = vpop.f32.mrb[0].mxu0
        %3129 = vdwg.mxu0
        %3130 = vrot.lane.b32.xlu0 %v1505, 64
        %v3131 = vpop.permute.xlu0 %3130
        %3132 = vrot.lane.b32.xlu0 %v1506, 64
        %v3133 = vpop.permute.xlu0 %3132
        %v3136 = vsel %vm1053, %v3131, 0.0
        %3137 = vadd.xlane.f32.xlu0 %v3136
        %v3138 = vpop.xlane.xlu0 %3137
        %v3139 = vsel %vm1053, %v3133, 0.0
        %3140 = vadd.xlane.f32.xlu0 %v3139
        %v3141 = vpop.xlane.xlu0 %3140
        %v3142 = vsel %vm868, %v3122, -inf
        %3143 = vmax.xlane.f32.xlu0 %v3142
        %v3144 = vpop.xlane.xlu0 %3143
        %v3145 = vsel %vm868, %v3127, -inf
        %3146 = vmax.xlane.f32.xlu0 %v3145
        %v3147 = vpop.xlane.xlu0 %3146
        %v3148 = vmax.f32 %v3144, %v3138
        %v3149 = vmax.f32 %v3147, %v3141
        %v3150 = vsub.f32 %v3122, %v3148
        %v3151 = vsub.f32 %v3127, %v3149
        %v3152 = vmul.f32 %v3150, 1.442695
        %v3153 = vpow.pop %v3152
        %v3154 = vmul.f32 %v3151, 1.442695
        %v3155 = vpow.pop %v3154
        %v3156 = vsub.f32 %v3138, %v3148
        %v3157 = vsub.f32 %v3141, %v3149
        %v3158 = vmul.f32 %v3156, 1.442695
        %v3159 = vpow.pop %v3158
        %v3160 = vmul.f32 %v3157, 1.442695
        %v3161 = vpow.pop %v3160
        %v3162 = vsel %vm868, %v3153, 0.0
        %3163 = vadd.xlane.f32.xlu0 %v3162
        %v3164 = vpop.xlane.xlu0 %3163
        %v3165 = vsel %vm868, %v3155, 0.0
        %3166 = vadd.xlane.f32.xlu0 %v3165
        %v3167 = vpop.xlane.xlu0 %3166
        %v3168 = vadd.f32 %v3164, %v3159
        %v3169 = vadd.f32 %v3167, %v3161
        %v3170 = vmul.f32 %v3159, %v1019
        %v3171 = vmul.f32 %v3161, %v1024
        %3174 = vrot.lane.b32.xlu0 %v3170, 64
        %v3175 = vpop.permute.xlu0 %3174
        %3176 = vrot.lane.b32.xlu0 %v3171, 64
        %v3177 = vpop.permute.xlu0 %3176
        %v3181 = vsel %vm868, %v3153, 0
        %v3184 = vsel %vm868, %v3155, 0
        %3186 = vmatprep.subr.mxu0 0.0
        %3187 = vmatpush1.msra.mxu0 %v2879
        %3188 = vmatprep.subr.mxu0 0.0
        %3189 = vmatpush1.msra.mxu0 %v2881
        %3190 = vmatprep.subr.mxu0 0.0
        %3191 = vmatpush1.msra.mxu0 %v2883
        %3192 = vmatprep.subr.mxu0 0.0
        %3193 = vmatpush1.msra.mxu0 %v2885
        %3194 = vmatprep.subr.mxu0 0.0
        %3195 = vmatpush1.msra.mxu0 %v2887
        %3196 = vmatprep.subr.mxu0 0.0
        %3197 = vmatpush1.msra.mxu0 %v2889
        %3198 = vmatprep.subr.mxu0 0.0
        %3199 = vmatpush1.msra.mxu0 %v2891
        %3200 = vmatprep.subr.mxu0 0.0
        %3201 = vmatpush1.msra.mxu0 %v2893
        %3202 = vmatprep.subr.mxu0 0.0
        %3203 = vmatpush1.msra.mxu0 0.0
        %3204 = vmatprep.subr.mxu0 0.0
        %3205 = vmatpush1.msra.mxu0 0.0
        %3206 = vmatprep.subr.mxu0 0.0
        %3207 = vmatpush1.msra.mxu0 0.0
        %3208 = vmatprep.subr.mxu0 0.0
        %3209 = vmatpush1.msra.mxu0 0.0
        %3210 = vmatprep.subr.mxu0 0.0
        %3211 = vmatpush1.msra.mxu0 0.0
        %3212 = vmatprep.subr.mxu0 0.0
        %3213 = vmatpush1.msra.mxu0 0.0
        %3214 = vmatprep.subr.mxu0 0.0
        %3215 = vmatpush1.msra.mxu0 0.0
        %3216 = vmatprep.subr.mxu0 0.0
        %3217 = vmatpush1.msra.mxu0 0.0
        %3218 = vmatprep.subr.mxu0 0.0
        %3219 = vmatpush1.msra.mxu0 0.0
        %3220 = vmatprep.subr.mxu0 0.0
        %3221 = vmatpush1.msra.mxu0 0.0
        %3222 = vmatprep.subr.mxu0 0.0
        %3223 = vmatpush1.msra.mxu0 0.0
        %3224 = vmatprep.subr.mxu0 0.0
        %3225 = vmatpush1.msra.mxu0 0.0
        %3226 = vmatprep.subr.mxu0 0.0
        %3227 = vmatpush1.msra.mxu0 0.0
        %3228 = vmatprep.subr.mxu0 0.0
        %3229 = vmatpush1.msra.mxu0 0.0
        %3230 = vmatprep.subr.mxu0 0.0
        %3231 = vmatpush1.msra.mxu0 0.0
        %3232 = vmatprep.subr.mxu0 0.0
        %3233 = vmatpush1.msra.mxu0 0.0
        %3234 = vmatprep.subr.mxu0 0.0
        %3235 = vmatpush1.msra.mxu0 0.0
        %3236 = vmatprep.subr.mxu0 0.0
        %3237 = vmatpush1.msra.mxu0 0.0
        %3238 = vmatprep.subr.mxu0 0.0
        %3239 = vmatpush1.msra.mxu0 0.0
        %3240 = vmatprep.subr.mxu0 0.0
        %3241 = vmatpush1.msra.mxu0 0.0
        %3242 = vmatprep.subr.mxu0 0.0
        %3243 = vmatpush1.msra.mxu0 0.0
        %3244 = vmatprep.subr.mxu0 0.0
        %3245 = vmatpush1.msra.mxu0 0.0
        %3246 = vmatprep.subr.mxu0 0.0
        %3247 = vmatpush1.msra.mxu0 0.0
        %3248 = vmatprep.subr.mxu0 0.0
        %3249 = vmatpush1.msra.mxu0 0.0
        %3250 = vmatprep.mubr.f32.mxu0 0.0
        %3251 = vmatmul.mubr.f32.gmra.mrb[0].mxu0 %v3181
        %v3252 = vpop.f32.mrb[0].mxu0
        %v3253 = vadd.f32 %v3175, %v3252
        %v3254 = vpop.f32.mrb[0].mxu0
        %3255 = vmatprep.mubr.f32.mxu0 0.0
        %3256 = vmatmul.mubr.f32.gmra.mrb[0].mxu0 %v3184
        %v3257 = vpop.f32.mrb[0].mxu0
        %v3258 = vadd.f32 %v3177, %v3257
        %v3259 = vpop.f32.mrb[0].mxu0
        %3260 = vdwg.mxu0
        %v3261 = vrcp.pop %v3168
        %v3262 = vrcp.pop %v3169
        %v3263 = vmul.f32 %v3253, %v3261
        %v3264 = vmul.f32 %v3258, %v3262
        %3265 = vrot.lane.b32.xlu0 %v944, 64
        %v3266 = vpop.permute.xlu0 %3265
        %3267 = vrot.lane.b32.xlu0 %v950, 64
        %v3268 = vpop.permute.xlu0 %3267
        %v3269 = vsel %vm1053, %v3266, 0
        %v3271 = vsel %vm1053, %v3268, 0
        %3273 = vmatprep.subr.mxu0 0.0
        %3274 = vmatpush1.xpose.msra.mxu0 %v3269
        %3275 = vmatprep.subr.mxu0 0.0
        %3276 = vmatpush1.xpose.msra.mxu0 %v3271
        %3277 = vmatprep.subr.mxu0 0.0
        %3278 = vmatpush1.xpose.msra.mxu0 0.0
        %3279 = vmatprep.subr.mxu0 0.0
        %3280 = vmatpush1.xpose.msra.mxu0 0.0
        %3281 = vmatprep.subr.mxu0 0.0
        %3282 = vmatpush1.xpose.msra.mxu0 0.0
        %3283 = vmatprep.subr.mxu0 0.0
        %3284 = vmatpush1.xpose.msra.mxu0 0.0
        %3285 = vmatprep.subr.mxu0 0.0
        %3286 = vmatpush1.xpose.msra.mxu0 0.0
        %3287 = vmatprep.subr.mxu0 0.0
        %3288 = vmatpush1.xpose.msra.mxu0 0.0
        %3289 = vmatprep.subr.mxu0 0.0
        %3290 = vmatpush1.xpose.msra.mxu0 0.0
        %3291 = vmatprep.subr.mxu0 0.0
        %3292 = vmatpush1.xpose.msra.mxu0 0.0
        %3293 = vmatprep.subr.mxu0 0.0
        %3294 = vmatpush1.xpose.msra.mxu0 0.0
        %3295 = vmatprep.subr.mxu0 0.0
        %3296 = vmatpush1.xpose.msra.mxu0 0.0
        %3297 = vmatprep.subr.mxu0 0.0
        %3298 = vmatpush1.xpose.msra.mxu0 0.0
        %3299 = vmatprep.subr.mxu0 0.0
        %3300 = vmatpush1.xpose.msra.mxu0 0.0
        %3301 = vmatprep.subr.mxu0 0.0
        %3302 = vmatpush1.xpose.msra.mxu0 0.0
        %3303 = vmatprep.subr.mxu0 0.0
        %3304 = vmatpush1.xpose.msra.mxu0 0.0
        %3305 = vmatprep.subr.mxu0 0.0
        %3306 = vmatpush1.xpose.msra.mxu0 0.0
        %3307 = vmatprep.subr.mxu0 0.0
        %3308 = vmatpush1.xpose.msra.mxu0 0.0
        %3309 = vmatprep.subr.mxu0 0.0
        %3310 = vmatpush1.xpose.msra.mxu0 0.0
        %3311 = vmatprep.subr.mxu0 0.0
        %3312 = vmatpush1.xpose.msra.mxu0 0.0
        %3313 = vmatprep.subr.mxu0 0.0
        %3314 = vmatpush1.xpose.msra.mxu0 0.0
        %3315 = vmatprep.subr.mxu0 0.0
        %3316 = vmatpush1.xpose.msra.mxu0 0.0
        %3317 = vmatprep.subr.mxu0 0.0
        %3318 = vmatpush1.xpose.msra.mxu0 0.0
        %3319 = vmatprep.subr.mxu0 0.0
        %3320 = vmatpush1.xpose.msra.mxu0 0.0
        %3321 = vmatprep.subr.mxu0 0.0
        %3322 = vmatpush1.xpose.msra.mxu0 0.0
        %3323 = vmatprep.subr.mxu0 0.0
        %3324 = vmatpush1.xpose.msra.mxu0 0.0
        %3325 = vmatprep.subr.mxu0 0.0
        %3326 = vmatpush1.xpose.msra.mxu0 0.0
        %3327 = vmatprep.subr.mxu0 0.0
        %3328 = vmatpush1.xpose.msra.mxu0 0.0
        %3329 = vmatprep.subr.mxu0 0.0
        %3330 = vmatpush1.xpose.msra.mxu0 0.0
        %3331 = vmatprep.subr.mxu0 0.0
        %3332 = vmatpush1.xpose.msra.mxu0 0.0
        %3333 = vmatprep.subr.mxu0 0.0
        %3334 = vmatpush1.xpose.msra.mxu0 0.0
        %3335 = vmatprep.subr.mxu0 0.0
        %3336 = vmatpush1.xpose.msra.mxu0 0.0
        %3337 = vmatprep.mubr.f32.mxu0 0.0
        %3338 = vmatmul.mubr.f32.gmra.mrb[0].mxu0 %v3051
        %v3339 = vpop.f32.mrb[0].mxu0
        %v3340 = vadd.f32 %v1041, %v3339
        %v3341 = vpop.f32.mrb[0].mxu0
        %3342 = vmatprep.mubr.f32.mxu0 0.0
        %3343 = vmatmul.mubr.f32.gmra.mrb[0].mxu0 %v3053
        %v3344 = vpop.f32.mrb[0].mxu0
        %v3345 = vadd.f32 %v1042, %v3344
        %v3346 = vpop.f32.mrb[0].mxu0
        %3347 = vdwg.mxu0
        %v3348 = vsel %vm1709, %v3340, -inf
        %3349 = vmax.xlane.f32.xlu0 %v3348
        %v3350 = vpop.xlane.xlu0 %3349
        %v3351 = vsel %vm1709, %v3345, -inf
        %3352 = vmax.xlane.f32.xlu0 %v3351
        %v3353 = vpop.xlane.xlu0 %3352
        %v3354 = vsub.f32 %v3340, %v3350
        %v3355 = vsub.f32 %v3345, %v3353
        %v3356 = vmul.f32 %v3354, 1.442695
        %v3357 = vpow.pop %v3356
        %v3358 = vmul.f32 %v3355, 1.442695
        %v3359 = vpow.pop %v3358
        %v3360 = vsel %vm1709, %v3357, 0.0
        %3361 = vadd.xlane.f32.xlu0 %v3360
        %v3362 = vpop.xlane.xlu0 %3361
        %v3363 = vsel %vm1709, %v3359, 0.0
        %3364 = vadd.xlane.f32.xlu0 %v3363
        %v3365 = vpop.xlane.xlu0 %3364
        %v3367 = vsel %vm1709, %v3357, 0
        %v3370 = vsel %vm1709, %v3359, 0
        %3372 = vmatprep.subr.mxu0 0.0
        %3373 = vmatpush1.msra.mxu0 %v3263
        %3374 = vmatprep.subr.mxu0 0.0
        %3375 = vmatpush1.msra.mxu0 %v3264
        %3376 = vmatprep.subr.mxu0 0.0
        %3377 = vmatpush1.msra.mxu0 0.0
        %3378 = vmatprep.subr.mxu0 0.0
        %3379 = vmatpush1.msra.mxu0 0.0
        %3380 = vmatprep.subr.mxu0 0.0
        %3381 = vmatpush1.msra.mxu0 0.0
        %3382 = vmatprep.subr.mxu0 0.0
        %3383 = vmatpush1.msra.mxu0 0.0
        %3384 = vmatprep.subr.mxu0 0.0
        %3385 = vmatpush1.msra.mxu0 0.0
        %3386 = vmatprep.subr.mxu0 0.0
        %3387 = vmatpush1.msra.mxu0 0.0
        %3388 = vmatprep.subr.mxu0 0.0
        %3389 = vmatpush1.msra.mxu0 0.0
        %3390 = vmatprep.subr.mxu0 0.0
        %3391 = vmatpush1.msra.mxu0 0.0
        %3392 = vmatprep.subr.mxu0 0.0
        %3393 = vmatpush1.msra.mxu0 0.0
        %3394 = vmatprep.subr.mxu0 0.0
        %3395 = vmatpush1.msra.mxu0 0.0
        %3396 = vmatprep.subr.mxu0 0.0
        %3397 = vmatpush1.msra.mxu0 0.0
        %3398 = vmatprep.subr.mxu0 0.0
        %3399 = vmatpush1.msra.mxu0 0.0
        %3400 = vmatprep.subr.mxu0 0.0
        %3401 = vmatpush1.msra.mxu0 0.0
        %3402 = vmatprep.subr.mxu0 0.0
        %3403 = vmatpush1.msra.mxu0 0.0
        %3404 = vmatprep.subr.mxu0 0.0
        %3405 = vmatpush1.msra.mxu0 0.0
        %3406 = vmatprep.subr.mxu0 0.0
        %3407 = vmatpush1.msra.mxu0 0.0
        %3408 = vmatprep.subr.mxu0 0.0
        %3409 = vmatpush1.msra.mxu0 0.0
        %3410 = vmatprep.subr.mxu0 0.0
        %3411 = vmatpush1.msra.mxu0 0.0
        %3412 = vmatprep.subr.mxu0 0.0
        %3413 = vmatpush1.msra.mxu0 0.0
        %3414 = vmatprep.subr.mxu0 0.0
        %3415 = vmatpush1.msra.mxu0 0.0
        %3416 = vmatprep.subr.mxu0 0.0
        %3417 = vmatpush1.msra.mxu0 0.0
        %3418 = vmatprep.subr.mxu0 0.0
        %3419 = vmatpush1.msra.mxu0 0.0
        %3420 = vmatprep.subr.mxu0 0.0
        %3421 = vmatpush1.msra.mxu0 0.0
        %3422 = vmatprep.subr.mxu0 0.0
        %3423 = vmatpush1.msra.mxu0 0.0
        %3424 = vmatprep.subr.mxu0 0.0
        %3425 = vmatpush1.msra.mxu0 0.0
        %3426 = vmatprep.subr.mxu0 0.0
        %3427 = vmatpush1.msra.mxu0 0.0
        %3428 = vmatprep.subr.mxu0 0.0
        %3429 = vmatpush1.msra.mxu0 0.0
        %3430 = vmatprep.subr.mxu0 0.0
        %3431 = vmatpush1.msra.mxu0 0.0
        %3432 = vmatprep.subr.mxu0 0.0
        %3433 = vmatpush1.msra.mxu0 0.0
        %3434 = vmatprep.subr.mxu0 0.0
        %3435 = vmatpush1.msra.mxu0 0.0
        %3436 = vmatprep.mubr.f32.mxu0 0.0
        %3437 = vmatmul.mubr.f32.gmra.mrb[0].mxu0 %v3367
        %v3438 = vpop.f32.mrb[0].mxu0
        %v3439 = vadd.f32 0.0, %v3438
        %v3440 = vpop.f32.mrb[0].mxu0
        %3441 = vmatprep.mubr.f32.mxu0 0.0
        %3442 = vmatmul.mubr.f32.gmra.mrb[0].mxu0 %v3370
        %v3443 = vpop.f32.mrb[0].mxu0
        %v3444 = vadd.f32 0.0, %v3443
        %v3445 = vpop.f32.mrb[0].mxu0
        %3446 = vdwg.mxu0
        %v3447 = vrcp.pop %v3362
        %v3448 = vrcp.pop %v3365
        %v3449 = vmul.f32 %v3439, %v3447
        %v3450 = vmul.f32 %v3444, %v3448
        %3451 = vrot.lane.b32.xlu0 %v1043, 32
        %v3452 = vpop.permute.xlu0 %3451
        %3453 = vrot.lane.b32.xlu0 %v1044, 32
        %v3454 = vpop.permute.xlu0 %3453
        %3455 = vrot.lane.b32.xlu0 %v1045, 32
        %v3456 = vpop.permute.xlu0 %3455
        %3457 = vrot.lane.b32.xlu0 %v1046, 32
        %v3458 = vpop.permute.xlu0 %3457
        %3459 = vrot.lane.b32.xlu0 %v1047, 32
        %v3460 = vpop.permute.xlu0 %3459
        %3461 = vrot.lane.b32.xlu0 %v1048, 32
        %v3462 = vpop.permute.xlu0 %3461
        %3463 = vrot.lane.b32.xlu0 %v1049, 32
        %v3464 = vpop.permute.xlu0 %3463
        %3465 = vrot.lane.b32.xlu0 %v1050, 32
        %v3466 = vpop.permute.xlu0 %3465
        %3467 = vrot.lane.b32.xlu0 %v717, 32
        %v3468 = vpop.permute.xlu0 %3467
        %3469 = vrot.lane.b32.xlu0 %v723, 32
        %v3470 = vpop.permute.xlu0 %3469
        %3471 = vrot.lane.b32.xlu0 %v729, 32
        %v3472 = vpop.permute.xlu0 %3471
        %3473 = vrot.lane.b32.xlu0 %v735, 32
        %v3474 = vpop.permute.xlu0 %3473
        %3475 = vrot.lane.b32.xlu0 %v741, 32
        %v3476 = vpop.permute.xlu0 %3475
        %3477 = vrot.lane.b32.xlu0 %v747, 32
        %v3478 = vpop.permute.xlu0 %3477
        %3479 = vrot.lane.b32.xlu0 %v753, 32
        %v3480 = vpop.permute.xlu0 %3479
        %3481 = vrot.lane.b32.xlu0 %v759, 32
        %v3482 = vpop.permute.xlu0 %3481
        %v3483 = vsel %vm1053, %v3452, 0
        %v3485 = vsel %vm1053, %v3454, 0
        %v3487 = vsel %vm1053, %v3456, 0
        %v3489 = vsel %vm1053, %v3458, 0
        %v3491 = vsel %vm1053, %v3460, 0
        %v3493 = vsel %vm1053, %v3462, 0
        %v3495 = vsel %vm1053, %v3464, 0
        %v3497 = vsel %vm1053, %v3466, 0
        %v3499 = vsel %vm1053, %v3468, 0
        %v3501 = vsel %vm1053, %v3470, 0
        %v3503 = vsel %vm1053, %v3472, 0
        %v3505 = vsel %vm1053, %v3474, 0
        %v3507 = vsel %vm1053, %v3476, 0
        %v3509 = vsel %vm1053, %v3478, 0
        %v3511 = vsel %vm1053, %v3480, 0
        %v3513 = vsel %vm1053, %v3482, 0
        %3515 = vmatprep.subr.mxu0 0.0
        %3516 = vmatpush1.xpose.msra.mxu0 %v3499
        %3517 = vmatprep.subr.mxu0 0.0
        %3518 = vmatpush1.xpose.msra.mxu0 %v3501
        %3519 = vmatprep.subr.mxu0 0.0
        %3520 = vmatpush1.xpose.msra.mxu0 %v3503
        %3521 = vmatprep.subr.mxu0 0.0
        %3522 = vmatpush1.xpose.msra.mxu0 %v3505
        %3523 = vmatprep.subr.mxu0 0.0
        %3524 = vmatpush1.xpose.msra.mxu0 %v3507
        %3525 = vmatprep.subr.mxu0 0.0
        %3526 = vmatpush1.xpose.msra.mxu0 %v3509
        %3527 = vmatprep.subr.mxu0 0.0
        %3528 = vmatpush1.xpose.msra.mxu0 %v3511
        %3529 = vmatprep.subr.mxu0 0.0
        %3530 = vmatpush1.xpose.msra.mxu0 %v3513
        %3531 = vmatprep.subr.mxu0 0.0
        %3532 = vmatpush1.xpose.msra.mxu0 0.0
        %3533 = vmatprep.subr.mxu0 0.0
        %3534 = vmatpush1.xpose.msra.mxu0 0.0
        %3535 = vmatprep.subr.mxu0 0.0
        %3536 = vmatpush1.xpose.msra.mxu0 0.0
        %3537 = vmatprep.subr.mxu0 0.0
        %3538 = vmatpush1.xpose.msra.mxu0 0.0
        %3539 = vmatprep.subr.mxu0 0.0
        %3540 = vmatpush1.xpose.msra.mxu0 0.0
        %3541 = vmatprep.subr.mxu0 0.0
        %3542 = vmatpush1.xpose.msra.mxu0 0.0
        %3543 = vmatprep.subr.mxu0 0.0
        %3544 = vmatpush1.xpose.msra.mxu0 0.0
        %3545 = vmatprep.subr.mxu0 0.0
        %3546 = vmatpush1.xpose.msra.mxu0 0.0
        %3547 = vmatprep.subr.mxu0 0.0
        %3548 = vmatpush1.xpose.msra.mxu0 0.0
        %3549 = vmatprep.subr.mxu0 0.0
        %3550 = vmatpush1.xpose.msra.mxu0 0.0
        %3551 = vmatprep.subr.mxu0 0.0
        %3552 = vmatpush1.xpose.msra.mxu0 0.0
        %3553 = vmatprep.subr.mxu0 0.0
        %3554 = vmatpush1.xpose.msra.mxu0 0.0
        %3555 = vmatprep.subr.mxu0 0.0
        %3556 = vmatpush1.xpose.msra.mxu0 0.0
        %3557 = vmatprep.subr.mxu0 0.0
        %3558 = vmatpush1.xpose.msra.mxu0 0.0
        %3559 = vmatprep.subr.mxu0 0.0
        %3560 = vmatpush1.xpose.msra.mxu0 0.0
        %3561 = vmatprep.subr.mxu0 0.0
        %3562 = vmatpush1.xpose.msra.mxu0 0.0
        %3563 = vmatprep.subr.mxu0 0.0
        %3564 = vmatpush1.xpose.msra.mxu0 0.0
        %3565 = vmatprep.subr.mxu0 0.0
        %3566 = vmatpush1.xpose.msra.mxu0 0.0
        %3567 = vmatprep.subr.mxu0 0.0
        %3568 = vmatpush1.xpose.msra.mxu0 0.0
        %3569 = vmatprep.subr.mxu0 0.0
        %3570 = vmatpush1.xpose.msra.mxu0 0.0
        %3571 = vmatprep.subr.mxu0 0.0
        %3572 = vmatpush1.xpose.msra.mxu0 0.0
        %3573 = vmatprep.subr.mxu0 0.0
        %3574 = vmatpush1.xpose.msra.mxu0 0.0
        %3575 = vmatprep.subr.mxu0 0.0
        %3576 = vmatpush1.xpose.msra.mxu0 0.0
        %3577 = vmatprep.subr.mxu0 0.0
        %3578 = vmatpush1.xpose.msra.mxu0 0.0
        %3579 = vmatprep.mubr.f32.mxu0 0.0
        %3580 = vmatmul.mubr.f32.gmra.mrb[0].mxu0 %v3483
        %v3581 = vpop.f32.mrb[0].mxu0
        %v3582 = vadd.f32 %v1031, %v3581
        %v3583 = vpop.f32.mrb[0].mxu0
        %3584 = vmatprep.mubr.f32.mxu0 0.0
        %3585 = vmatmul.mubr.f32.gmra.mrb[0].mxu0 %v3485
        %v3586 = vpop.f32.mrb[0].mxu0
        %v3587 = vadd.f32 %v1032, %v3586
        %v3588 = vpop.f32.mrb[0].mxu0
        %3589 = vmatprep.mubr.f32.mxu0 0.0
        %3590 = vmatmul.mubr.f32.gmra.mrb[0].mxu0 %v3487
        %v3591 = vpop.f32.mrb[0].mxu0
        %v3592 = vadd.f32 %v1033, %v3591
        %v3593 = vpop.f32.mrb[0].mxu0
        %3594 = vmatprep.mubr.f32.mxu0 0.0
        %3595 = vmatmul.mubr.f32.gmra.mrb[0].mxu0 %v3489
        %v3596 = vpop.f32.mrb[0].mxu0
        %v3597 = vadd.f32 %v1034, %v3596
        %v3598 = vpop.f32.mrb[0].mxu0
        %3599 = vmatprep.mubr.f32.mxu0 0.0
        %3600 = vmatmul.mubr.f32.gmra.mrb[0].mxu0 %v3491
        %v3601 = vpop.f32.mrb[0].mxu0
        %v3602 = vadd.f32 %v1035, %v3601
        %v3603 = vpop.f32.mrb[0].mxu0
        %3604 = vmatprep.mubr.f32.mxu0 0.0
        %3605 = vmatmul.mubr.f32.gmra.mrb[0].mxu0 %v3493
        %v3606 = vpop.f32.mrb[0].mxu0
        %v3607 = vadd.f32 %v1036, %v3606
        %v3608 = vpop.f32.mrb[0].mxu0
        %3609 = vmatprep.mubr.f32.mxu0 0.0
        %3610 = vmatmul.mubr.f32.gmra.mrb[0].mxu0 %v3495
        %v3611 = vpop.f32.mrb[0].mxu0
        %v3612 = vadd.f32 %v1037, %v3611
        %v3613 = vpop.f32.mrb[0].mxu0
        %3614 = vmatprep.mubr.f32.mxu0 0.0
        %3615 = vmatmul.mubr.f32.gmra.mrb[0].mxu0 %v3497
        %v3616 = vpop.f32.mrb[0].mxu0
        %v3617 = vadd.f32 %v1038, %v3616
        %v3618 = vpop.f32.mrb[0].mxu0
        %3619 = vdwg.mxu0
        %v3620 = vsel %vm868, %v3582, -inf
        %3621 = vmax.xlane.f32.xlu0 %v3620
        %v3622 = vpop.xlane.xlu0 %3621
        %v3623 = vsel %vm868, %v3587, -inf
        %3624 = vmax.xlane.f32.xlu0 %v3623
        %v3625 = vpop.xlane.xlu0 %3624
        %v3626 = vsel %vm868, %v3592, -inf
        %3627 = vmax.xlane.f32.xlu0 %v3626
        %v3628 = vpop.xlane.xlu0 %3627
        %v3629 = vsel %vm868, %v3597, -inf
        %3630 = vmax.xlane.f32.xlu0 %v3629
        %v3631 = vpop.xlane.xlu0 %3630
        %v3632 = vsel %vm868, %v3602, -inf
        %3633 = vmax.xlane.f32.xlu0 %v3632
        %v3634 = vpop.xlane.xlu0 %3633
        %v3635 = vsel %vm868, %v3607, -inf
        %3636 = vmax.xlane.f32.xlu0 %v3635
        %v3637 = vpop.xlane.xlu0 %3636
        %v3638 = vsel %vm868, %v3612, -inf
        %3639 = vmax.xlane.f32.xlu0 %v3638
        %v3640 = vpop.xlane.xlu0 %3639
        %v3641 = vsel %vm868, %v3617, -inf
        %3642 = vmax.xlane.f32.xlu0 %v3641
        %v3643 = vpop.xlane.xlu0 %3642
        %v3644 = vsub.f32 %v3582, %v3622
        %v3645 = vsub.f32 %v3587, %v3625
        %v3646 = vsub.f32 %v3592, %v3628
        %v3647 = vsub.f32 %v3597, %v3631
        %v3648 = vsub.f32 %v3602, %v3634
        %v3649 = vsub.f32 %v3607, %v3637
        %v3650 = vsub.f32 %v3612, %v3640
        %v3651 = vsub.f32 %v3617, %v3643
        %v3652 = vmul.f32 %v3644, 1.442695
        %v3653 = vpow.pop %v3652
        %v3654 = vmul.f32 %v3645, 1.442695
        %v3655 = vpow.pop %v3654
        %v3656 = vmul.f32 %v3646, 1.442695
        %v3657 = vpow.pop %v3656
        %v3658 = vmul.f32 %v3647, 1.442695
        %v3659 = vpow.pop %v3658
        %v3660 = vmul.f32 %v3648, 1.442695
        %v3661 = vpow.pop %v3660
        %v3662 = vmul.f32 %v3649, 1.442695
        %v3663 = vpow.pop %v3662
        %v3664 = vmul.f32 %v3650, 1.442695
        %v3665 = vpow.pop %v3664
        %v3666 = vmul.f32 %v3651, 1.442695
        %v3667 = vpow.pop %v3666
        %v3668 = vsel %vm868, %v3653, 0.0
        %3669 = vadd.xlane.f32.xlu0 %v3668
        %v3670 = vpop.xlane.xlu0 %3669
        %v3671 = vsel %vm868, %v3655, 0.0
        %3672 = vadd.xlane.f32.xlu0 %v3671
        %v3673 = vpop.xlane.xlu0 %3672
        %v3674 = vsel %vm868, %v3657, 0.0
        %3675 = vadd.xlane.f32.xlu0 %v3674
        %v3676 = vpop.xlane.xlu0 %3675
        %v3677 = vsel %vm868, %v3659, 0.0
        %3678 = vadd.xlane.f32.xlu0 %v3677
        %v3679 = vpop.xlane.xlu0 %3678
        %v3680 = vsel %vm868, %v3661, 0.0
        %3681 = vadd.xlane.f32.xlu0 %v3680
        %v3682 = vpop.xlane.xlu0 %3681
        %v3683 = vsel %vm868, %v3663, 0.0
        %3684 = vadd.xlane.f32.xlu0 %v3683
        %v3685 = vpop.xlane.xlu0 %3684
        %v3686 = vsel %vm868, %v3665, 0.0
        %3687 = vadd.xlane.f32.xlu0 %v3686
        %v3688 = vpop.xlane.xlu0 %3687
        %v3689 = vsel %vm868, %v3667, 0.0
        %3690 = vadd.xlane.f32.xlu0 %v3689
        %v3691 = vpop.xlane.xlu0 %3690
        %3692 = vrot.lane.b32.xlu0 %v828, 32
        %v3693 = vpop.permute.xlu0 %3692
        %3694 = vrot.lane.b32.xlu0 %v833, 32
        %v3695 = vpop.permute.xlu0 %3694
        %3696 = vrot.lane.b32.xlu0 %v838, 32
        %v3697 = vpop.permute.xlu0 %3696
        %3698 = vrot.lane.b32.xlu0 %v843, 32
        %v3699 = vpop.permute.xlu0 %3698
        %3700 = vrot.lane.b32.xlu0 %v848, 32
        %v3701 = vpop.permute.xlu0 %3700
        %3702 = vrot.lane.b32.xlu0 %v853, 32
        %v3703 = vpop.permute.xlu0 %3702
        %3704 = vrot.lane.b32.xlu0 %v858, 32
        %v3705 = vpop.permute.xlu0 %3704
        %3706 = vrot.lane.b32.xlu0 %v863, 32
        %v3707 = vpop.permute.xlu0 %3706
        %v3717 = vsel %vm868, %v3653, 0
        %v3720 = vsel %vm868, %v3655, 0
        %v3723 = vsel %vm868, %v3657, 0
        %v3726 = vsel %vm868, %v3659, 0
        %v3729 = vsel %vm868, %v3661, 0
        %v3732 = vsel %vm868, %v3663, 0
        %v3735 = vsel %vm868, %v3665, 0
        %v3738 = vsel %vm868, %v3667, 0
        %3740 = vmatprep.subr.mxu0 0.0
        %3741 = vmatpush1.msra.mxu0 %v3693
        %3742 = vmatprep.subr.mxu0 0.0
        %3743 = vmatpush1.msra.mxu0 %v3695
        %3744 = vmatprep.subr.mxu0 0.0
        %3745 = vmatpush1.msra.mxu0 %v3697
        %3746 = vmatprep.subr.mxu0 0.0
        %3747 = vmatpush1.msra.mxu0 %v3699
        %3748 = vmatprep.subr.mxu0 0.0
        %3749 = vmatpush1.msra.mxu0 %v3701
        %3750 = vmatprep.subr.mxu0 0.0
        %3751 = vmatpush1.msra.mxu0 %v3703
        %3752 = vmatprep.subr.mxu0 0.0
        %3753 = vmatpush1.msra.mxu0 %v3705
        %3754 = vmatprep.subr.mxu0 0.0
        %3755 = vmatpush1.msra.mxu0 %v3707
        %3756 = vmatprep.subr.mxu0 0.0
        %3757 = vmatpush1.msra.mxu0 0.0
        %3758 = vmatprep.subr.mxu0 0.0
        %3759 = vmatpush1.msra.mxu0 0.0
        %3760 = vmatprep.subr.mxu0 0.0
        %3761 = vmatpush1.msra.mxu0 0.0
        %3762 = vmatprep.subr.mxu0 0.0
        %3763 = vmatpush1.msra.mxu0 0.0
        %3764 = vmatprep.subr.mxu0 0.0
        %3765 = vmatpush1.msra.mxu0 0.0
        %3766 = vmatprep.subr.mxu0 0.0
        %3767 = vmatpush1.msra.mxu0 0.0
        %3768 = vmatprep.subr.mxu0 0.0
        %3769 = vmatpush1.msra.mxu0 0.0
        %3770 = vmatprep.subr.mxu0 0.0
        %3771 = vmatpush1.msra.mxu0 0.0
        %3772 = vmatprep.subr.mxu0 0.0
        %3773 = vmatpush1.msra.mxu0 0.0
        %3774 = vmatprep.subr.mxu0 0.0
        %3775 = vmatpush1.msra.mxu0 0.0
        %3776 = vmatprep.subr.mxu0 0.0
        %3777 = vmatpush1.msra.mxu0 0.0
        %3778 = vmatprep.subr.mxu0 0.0
        %3779 = vmatpush1.msra.mxu0 0.0
        %3780 = vmatprep.subr.mxu0 0.0
        %3781 = vmatpush1.msra.mxu0 0.0
        %3782 = vmatprep.subr.mxu0 0.0
        %3783 = vmatpush1.msra.mxu0 0.0
        %3784 = vmatprep.subr.mxu0 0.0
        %3785 = vmatpush1.msra.mxu0 0.0
        %3786 = vmatprep.subr.mxu0 0.0
        %3787 = vmatpush1.msra.mxu0 0.0
        %3788 = vmatprep.subr.mxu0 0.0
        %3789 = vmatpush1.msra.mxu0 0.0
        %3790 = vmatprep.subr.mxu0 0.0
        %3791 = vmatpush1.msra.mxu0 0.0
        %3792 = vmatprep.subr.mxu0 0.0
        %3793 = vmatpush1.msra.mxu0 0.0
        %3794 = vmatprep.subr.mxu0 0.0
        %3795 = vmatpush1.msra.mxu0 0.0
        %3796 = vmatprep.subr.mxu0 0.0
        %3797 = vmatpush1.msra.mxu0 0.0
        %3798 = vmatprep.subr.mxu0 0.0
        %3799 = vmatpush1.msra.mxu0 0.0
        %3800 = vmatprep.subr.mxu0 0.0
        %3801 = vmatpush1.msra.mxu0 0.0
        %3802 = vmatprep.subr.mxu0 0.0
        %3803 = vmatpush1.msra.mxu0 0.0
        %3804 = vmatprep.mubr.f32.mxu0 0.0
        %3805 = vmatmul.mubr.f32.gmra.mrb[0].mxu0 %v3717
        %v3806 = vpop.f32.mrb[0].mxu0
        %v3807 = vadd.f32 0.0, %v3806
        %v3808 = vpop.f32.mrb[0].mxu0
        %3809 = vmatprep.mubr.f32.mxu0 0.0
        %3810 = vmatmul.mubr.f32.gmra.mrb[0].mxu0 %v3720
        %v3811 = vpop.f32.mrb[0].mxu0
        %v3812 = vadd.f32 0.0, %v3811
        %v3813 = vpop.f32.mrb[0].mxu0
        %3814 = vmatprep.mubr.f32.mxu0 0.0
        %3815 = vmatmul.mubr.f32.gmra.mrb[0].mxu0 %v3723
        %v3816 = vpop.f32.mrb[0].mxu0
        %v3817 = vadd.f32 0.0, %v3816
        %v3818 = vpop.f32.mrb[0].mxu0
        %3819 = vmatprep.mubr.f32.mxu0 0.0
        %3820 = vmatmul.mubr.f32.gmra.mrb[0].mxu0 %v3726
        %v3821 = vpop.f32.mrb[0].mxu0
        %v3822 = vadd.f32 0.0, %v3821
        %v3823 = vpop.f32.mrb[0].mxu0
        %3824 = vmatprep.mubr.f32.mxu0 0.0
        %3825 = vmatmul.mubr.f32.gmra.mrb[0].mxu0 %v3729
        %v3826 = vpop.f32.mrb[0].mxu0
        %v3827 = vadd.f32 0.0, %v3826
        %v3828 = vpop.f32.mrb[0].mxu0
        %3829 = vmatprep.mubr.f32.mxu0 0.0
        %3830 = vmatmul.mubr.f32.gmra.mrb[0].mxu0 %v3732
        %v3831 = vpop.f32.mrb[0].mxu0
        %v3832 = vadd.f32 0.0, %v3831
        %v3833 = vpop.f32.mrb[0].mxu0
        %3834 = vmatprep.mubr.f32.mxu0 0.0
        %3835 = vmatmul.mubr.f32.gmra.mrb[0].mxu0 %v3735
        %v3836 = vpop.f32.mrb[0].mxu0
        %v3837 = vadd.f32 0.0, %v3836
        %v3838 = vpop.f32.mrb[0].mxu0
        %3839 = vmatprep.mubr.f32.mxu0 0.0
        %3840 = vmatmul.mubr.f32.gmra.mrb[0].mxu0 %v3738
        %v3841 = vpop.f32.mrb[0].mxu0
        %v3842 = vadd.f32 0.0, %v3841
        %v3843 = vpop.f32.mrb[0].mxu0
        %3844 = vdwg.mxu0
        %v3845 = vrcp.pop %v3670
        %v3846 = vrcp.pop %v3673
        %v3847 = vrcp.pop %v3676
        %v3848 = vrcp.pop %v3679
        %v3849 = vrcp.pop %v3682
        %v3850 = vrcp.pop %v3685
        %v3851 = vrcp.pop %v3688
        %v3852 = vrcp.pop %v3691
        %v3853 = vmul.f32 %v3807, %v3845
        %v3854 = vmul.f32 %v3812, %v3846
        %v3855 = vmul.f32 %v3817, %v3847
        %v3856 = vmul.f32 %v3822, %v3848
        %v3857 = vmul.f32 %v3827, %v3849
        %v3858 = vmul.f32 %v3832, %v3850
        %v3859 = vmul.f32 %v3837, %v3851
        %v3860 = vmul.f32 %v3842, %v3852
        %3861 = vrot.lane.b32.xlu0 %v1051, 32
        %v3862 = vpop.permute.xlu0 %3861
        %3863 = vrot.lane.b32.xlu0 %v1052, 32
        %v3864 = vpop.permute.xlu0 %3863
        %v3865 = vsel %vm1053, %v3862, 0
        %v3867 = vsel %vm1053, %v3864, 0
        %3869 = vmatprep.subr.mxu0 0.0
        %3870 = vmatpush1.xpose.msra.mxu0 %v3499
        %3871 = vmatprep.subr.mxu0 0.0
        %3872 = vmatpush1.xpose.msra.mxu0 %v3501
        %3873 = vmatprep.subr.mxu0 0.0
        %3874 = vmatpush1.xpose.msra.mxu0 %v3503
        %3875 = vmatprep.subr.mxu0 0.0
        %3876 = vmatpush1.xpose.msra.mxu0 %v3505
        %3877 = vmatprep.subr.mxu0 0.0
        %3878 = vmatpush1.xpose.msra.mxu0 %v3507
        %3879 = vmatprep.subr.mxu0 0.0
        %3880 = vmatpush1.xpose.msra.mxu0 %v3509
        %3881 = vmatprep.subr.mxu0 0.0
        %3882 = vmatpush1.xpose.msra.mxu0 %v3511
        %3883 = vmatprep.subr.mxu0 0.0
        %3884 = vmatpush1.xpose.msra.mxu0 %v3513
        %3885 = vmatprep.subr.mxu0 0.0
        %3886 = vmatpush1.xpose.msra.mxu0 0.0
        %3887 = vmatprep.subr.mxu0 0.0
        %3888 = vmatpush1.xpose.msra.mxu0 0.0
        %3889 = vmatprep.subr.mxu0 0.0
        %3890 = vmatpush1.xpose.msra.mxu0 0.0
        %3891 = vmatprep.subr.mxu0 0.0
        %3892 = vmatpush1.xpose.msra.mxu0 0.0
        %3893 = vmatprep.subr.mxu0 0.0
        %3894 = vmatpush1.xpose.msra.mxu0 0.0
        %3895 = vmatprep.subr.mxu0 0.0
        %3896 = vmatpush1.xpose.msra.mxu0 0.0
        %3897 = vmatprep.subr.mxu0 0.0
        %3898 = vmatpush1.xpose.msra.mxu0 0.0
        %3899 = vmatprep.subr.mxu0 0.0
        %3900 = vmatpush1.xpose.msra.mxu0 0.0
        %3901 = vmatprep.subr.mxu0 0.0
        %3902 = vmatpush1.xpose.msra.mxu0 0.0
        %3903 = vmatprep.subr.mxu0 0.0
        %3904 = vmatpush1.xpose.msra.mxu0 0.0
        %3905 = vmatprep.subr.mxu0 0.0
        %3906 = vmatpush1.xpose.msra.mxu0 0.0
        %3907 = vmatprep.subr.mxu0 0.0
        %3908 = vmatpush1.xpose.msra.mxu0 0.0
        %3909 = vmatprep.subr.mxu0 0.0
        %3910 = vmatpush1.xpose.msra.mxu0 0.0
        %3911 = vmatprep.subr.mxu0 0.0
        %3912 = vmatpush1.xpose.msra.mxu0 0.0
        %3913 = vmatprep.subr.mxu0 0.0
        %3914 = vmatpush1.xpose.msra.mxu0 0.0
        %3915 = vmatprep.subr.mxu0 0.0
        %3916 = vmatpush1.xpose.msra.mxu0 0.0
        %3917 = vmatprep.subr.mxu0 0.0
        %3918 = vmatpush1.xpose.msra.mxu0 0.0
        %3919 = vmatprep.subr.mxu0 0.0
        %3920 = vmatpush1.xpose.msra.mxu0 0.0
        %3921 = vmatprep.subr.mxu0 0.0
        %3922 = vmatpush1.xpose.msra.mxu0 0.0
        %3923 = vmatprep.subr.mxu0 0.0
        %3924 = vmatpush1.xpose.msra.mxu0 0.0
        %3925 = vmatprep.subr.mxu0 0.0
        %3926 = vmatpush1.xpose.msra.mxu0 0.0
        %3927 = vmatprep.subr.mxu0 0.0
        %3928 = vmatpush1.xpose.msra.mxu0 0.0
        %3929 = vmatprep.subr.mxu0 0.0
        %3930 = vmatpush1.xpose.msra.mxu0 0.0
        %3931 = vmatprep.subr.mxu0 0.0
        %3932 = vmatpush1.xpose.msra.mxu0 0.0
        %3933 = vmatprep.mubr.f32.mxu0 0.0
        %3934 = vmatmul.mubr.f32.gmra.mrb[0].mxu0 %v3865
        %v3935 = vpop.f32.mrb[0].mxu0
        %v3936 = vadd.f32 %v1039, %v3935
        %v3937 = vpop.f32.mrb[0].mxu0
        %3938 = vmatprep.mubr.f32.mxu0 0.0
        %3939 = vmatmul.mubr.f32.gmra.mrb[0].mxu0 %v3867
        %v3940 = vpop.f32.mrb[0].mxu0
        %v3941 = vadd.f32 %v1040, %v3940
        %v3942 = vpop.f32.mrb[0].mxu0
        %3943 = vdwg.mxu0
        %3944 = vrot.lane.b32.xlu0 %v1505, 32
        %v3945 = vpop.permute.xlu0 %3944
        %3946 = vrot.lane.b32.xlu0 %v1506, 32
        %v3947 = vpop.permute.xlu0 %3946
        %v3950 = vsel %vm1053, %v3945, 0.0
        %3951 = vadd.xlane.f32.xlu0 %v3950
        %v3952 = vpop.xlane.xlu0 %3951
        %v3953 = vsel %vm1053, %v3947, 0.0
        %3954 = vadd.xlane.f32.xlu0 %v3953
        %v3955 = vpop.xlane.xlu0 %3954
        %v3956 = vsel %vm868, %v3936, -inf
        %3957 = vmax.xlane.f32.xlu0 %v3956
        %v3958 = vpop.xlane.xlu0 %3957
        %v3959 = vsel %vm868, %v3941, -inf
        %3960 = vmax.xlane.f32.xlu0 %v3959
        %v3961 = vpop.xlane.xlu0 %3960
        %v3962 = vmax.f32 %v3958, %v3952
        %v3963 = vmax.f32 %v3961, %v3955
        %v3964 = vsub.f32 %v3936, %v3962
        %v3965 = vsub.f32 %v3941, %v3963
        %v3966 = vmul.f32 %v3964, 1.442695
        %v3967 = vpow.pop %v3966
        %v3968 = vmul.f32 %v3965, 1.442695
        %v3969 = vpow.pop %v3968
        %v3970 = vsub.f32 %v3952, %v3962
        %v3971 = vsub.f32 %v3955, %v3963
        %v3972 = vmul.f32 %v3970, 1.442695
        %v3973 = vpow.pop %v3972
        %v3974 = vmul.f32 %v3971, 1.442695
        %v3975 = vpow.pop %v3974
        %v3976 = vsel %vm868, %v3967, 0.0
        %3977 = vadd.xlane.f32.xlu0 %v3976
        %v3978 = vpop.xlane.xlu0 %3977
        %v3979 = vsel %vm868, %v3969, 0.0
        %3980 = vadd.xlane.f32.xlu0 %v3979
        %v3981 = vpop.xlane.xlu0 %3980
        %v3982 = vadd.f32 %v3978, %v3973
        %v3983 = vadd.f32 %v3981, %v3975
        %v3984 = vmul.f32 %v3973, %v1019
        %v3985 = vmul.f32 %v3975, %v1024
        %3988 = vrot.lane.b32.xlu0 %v3984, 32
        %v3989 = vpop.permute.xlu0 %3988
        %3990 = vrot.lane.b32.xlu0 %v3985, 32
        %v3991 = vpop.permute.xlu0 %3990
        %v3995 = vsel %vm868, %v3967, 0
        %v3998 = vsel %vm868, %v3969, 0
        %4000 = vmatprep.subr.mxu0 0.0
        %4001 = vmatpush1.msra.mxu0 %v3693
        %4002 = vmatprep.subr.mxu0 0.0
        %4003 = vmatpush1.msra.mxu0 %v3695
        %4004 = vmatprep.subr.mxu0 0.0
        %4005 = vmatpush1.msra.mxu0 %v3697
        %4006 = vmatprep.subr.mxu0 0.0
        %4007 = vmatpush1.msra.mxu0 %v3699
        %4008 = vmatprep.subr.mxu0 0.0
        %4009 = vmatpush1.msra.mxu0 %v3701
        %4010 = vmatprep.subr.mxu0 0.0
        %4011 = vmatpush1.msra.mxu0 %v3703
        %4012 = vmatprep.subr.mxu0 0.0
        %4013 = vmatpush1.msra.mxu0 %v3705
        %4014 = vmatprep.subr.mxu0 0.0
        %4015 = vmatpush1.msra.mxu0 %v3707
        %4016 = vmatprep.subr.mxu0 0.0
        %4017 = vmatpush1.msra.mxu0 0.0
        %4018 = vmatprep.subr.mxu0 0.0
        %4019 = vmatpush1.msra.mxu0 0.0
        %4020 = vmatprep.subr.mxu0 0.0
        %4021 = vmatpush1.msra.mxu0 0.0
        %4022 = vmatprep.subr.mxu0 0.0
        %4023 = vmatpush1.msra.mxu0 0.0
        %4024 = vmatprep.subr.mxu0 0.0
        %4025 = vmatpush1.msra.mxu0 0.0
        %4026 = vmatprep.subr.mxu0 0.0
        %4027 = vmatpush1.msra.mxu0 0.0
        %4028 = vmatprep.subr.mxu0 0.0
        %4029 = vmatpush1.msra.mxu0 0.0
        %4030 = vmatprep.subr.mxu0 0.0
        %4031 = vmatpush1.msra.mxu0 0.0
        %4032 = vmatprep.subr.mxu0 0.0
        %4033 = vmatpush1.msra.mxu0 0.0
        %4034 = vmatprep.subr.mxu0 0.0
        %4035 = vmatpush1.msra.mxu0 0.0
        %4036 = vmatprep.subr.mxu0 0.0
        %4037 = vmatpush1.msra.mxu0 0.0
        %4038 = vmatprep.subr.mxu0 0.0
        %4039 = vmatpush1.msra.mxu0 0.0
        %4040 = vmatprep.subr.mxu0 0.0
        %4041 = vmatpush1.msra.mxu0 0.0
        %4042 = vmatprep.subr.mxu0 0.0
        %4043 = vmatpush1.msra.mxu0 0.0
        %4044 = vmatprep.subr.mxu0 0.0
        %4045 = vmatpush1.msra.mxu0 0.0
        %4046 = vmatprep.subr.mxu0 0.0
        %4047 = vmatpush1.msra.mxu0 0.0
        %4048 = vmatprep.subr.mxu0 0.0
        %4049 = vmatpush1.msra.mxu0 0.0
        %4050 = vmatprep.subr.mxu0 0.0
        %4051 = vmatpush1.msra.mxu0 0.0
        %4052 = vmatprep.subr.mxu0 0.0
        %4053 = vmatpush1.msra.mxu0 0.0
        %4054 = vmatprep.subr.mxu0 0.0
        %4055 = vmatpush1.msra.mxu0 0.0
        %4056 = vmatprep.subr.mxu0 0.0
        %4057 = vmatpush1.msra.mxu0 0.0
        %4058 = vmatprep.subr.mxu0 0.0
        %4059 = vmatpush1.msra.mxu0 0.0
        %4060 = vmatprep.subr.mxu0 0.0
        %4061 = vmatpush1.msra.mxu0 0.0
        %4062 = vmatprep.subr.mxu0 0.0
        %4063 = vmatpush1.msra.mxu0 0.0
        %4064 = vmatprep.mubr.f32.mxu0 0.0
        %4065 = vmatmul.mubr.f32.gmra.mrb[0].mxu0 %v3995
        %v4066 = vpop.f32.mrb[0].mxu0
        %v4067 = vadd.f32 %v3989, %v4066
        %v4068 = vpop.f32.mrb[0].mxu0
        %4069 = vmatprep.mubr.f32.mxu0 0.0
        %4070 = vmatmul.mubr.f32.gmra.mrb[0].mxu0 %v3998
        %v4071 = vpop.f32.mrb[0].mxu0
        %v4072 = vadd.f32 %v3991, %v4071
        %v4073 = vpop.f32.mrb[0].mxu0
        %4074 = vdwg.mxu0
        %v4075 = vrcp.pop %v3982
        %v4076 = vrcp.pop %v3983
        %v4077 = vmul.f32 %v4067, %v4075
        %v4078 = vmul.f32 %v4072, %v4076
        %4079 = vrot.lane.b32.xlu0 %v944, 32
        %v4080 = vpop.permute.xlu0 %4079
        %4081 = vrot.lane.b32.xlu0 %v950, 32
        %v4082 = vpop.permute.xlu0 %4081
        %v4083 = vsel %vm1053, %v4080, 0
        %v4085 = vsel %vm1053, %v4082, 0
        %4087 = vmatprep.subr.mxu0 0.0
        %4088 = vmatpush1.xpose.msra.mxu0 %v4083
        %4089 = vmatprep.subr.mxu0 0.0
        %4090 = vmatpush1.xpose.msra.mxu0 %v4085
        %4091 = vmatprep.subr.mxu0 0.0
        %4092 = vmatpush1.xpose.msra.mxu0 0.0
        %4093 = vmatprep.subr.mxu0 0.0
        %4094 = vmatpush1.xpose.msra.mxu0 0.0
        %4095 = vmatprep.subr.mxu0 0.0
        %4096 = vmatpush1.xpose.msra.mxu0 0.0
        %4097 = vmatprep.subr.mxu0 0.0
        %4098 = vmatpush1.xpose.msra.mxu0 0.0
        %4099 = vmatprep.subr.mxu0 0.0
        %4100 = vmatpush1.xpose.msra.mxu0 0.0
        %4101 = vmatprep.subr.mxu0 0.0
        %4102 = vmatpush1.xpose.msra.mxu0 0.0
        %4103 = vmatprep.subr.mxu0 0.0
        %4104 = vmatpush1.xpose.msra.mxu0 0.0
        %4105 = vmatprep.subr.mxu0 0.0
        %4106 = vmatpush1.xpose.msra.mxu0 0.0
        %4107 = vmatprep.subr.mxu0 0.0
        %4108 = vmatpush1.xpose.msra.mxu0 0.0
        %4109 = vmatprep.subr.mxu0 0.0
        %4110 = vmatpush1.xpose.msra.mxu0 0.0
        %4111 = vmatprep.subr.mxu0 0.0
        %4112 = vmatpush1.xpose.msra.mxu0 0.0
        %4113 = vmatprep.subr.mxu0 0.0
        %4114 = vmatpush1.xpose.msra.mxu0 0.0
        %4115 = vmatprep.subr.mxu0 0.0
        %4116 = vmatpush1.xpose.msra.mxu0 0.0
        %4117 = vmatprep.subr.mxu0 0.0
        %4118 = vmatpush1.xpose.msra.mxu0 0.0
        %4119 = vmatprep.subr.mxu0 0.0
        %4120 = vmatpush1.xpose.msra.mxu0 0.0
        %4121 = vmatprep.subr.mxu0 0.0
        %4122 = vmatpush1.xpose.msra.mxu0 0.0
        %4123 = vmatprep.subr.mxu0 0.0
        %4124 = vmatpush1.xpose.msra.mxu0 0.0
        %4125 = vmatprep.subr.mxu0 0.0
        %4126 = vmatpush1.xpose.msra.mxu0 0.0
        %4127 = vmatprep.subr.mxu0 0.0
        %4128 = vmatpush1.xpose.msra.mxu0 0.0
        %4129 = vmatprep.subr.mxu0 0.0
        %4130 = vmatpush1.xpose.msra.mxu0 0.0
        %4131 = vmatprep.subr.mxu0 0.0
        %4132 = vmatpush1.xpose.msra.mxu0 0.0
        %4133 = vmatprep.subr.mxu0 0.0
        %4134 = vmatpush1.xpose.msra.mxu0 0.0
        %4135 = vmatprep.subr.mxu0 0.0
        %4136 = vmatpush1.xpose.msra.mxu0 0.0
        %4137 = vmatprep.subr.mxu0 0.0
        %4138 = vmatpush1.xpose.msra.mxu0 0.0
        %4139 = vmatprep.subr.mxu0 0.0
        %4140 = vmatpush1.xpose.msra.mxu0 0.0
        %4141 = vmatprep.subr.mxu0 0.0
        %4142 = vmatpush1.xpose.msra.mxu0 0.0
        %4143 = vmatprep.subr.mxu0 0.0
        %4144 = vmatpush1.xpose.msra.mxu0 0.0
        %4145 = vmatprep.subr.mxu0 0.0
        %4146 = vmatpush1.xpose.msra.mxu0 0.0
        %4147 = vmatprep.subr.mxu0 0.0
        %4148 = vmatpush1.xpose.msra.mxu0 0.0
        %4149 = vmatprep.subr.mxu0 0.0
        %4150 = vmatpush1.xpose.msra.mxu0 0.0
        %4151 = vmatprep.mubr.f32.mxu0 0.0
        %4152 = vmatmul.mubr.f32.gmra.mrb[0].mxu0 %v3865
        %v4153 = vpop.f32.mrb[0].mxu0
        %v4154 = vadd.f32 %v1041, %v4153
        %v4155 = vpop.f32.mrb[0].mxu0
        %4156 = vmatprep.mubr.f32.mxu0 0.0
        %4157 = vmatmul.mubr.f32.gmra.mrb[0].mxu0 %v3867
        %v4158 = vpop.f32.mrb[0].mxu0
        %v4159 = vadd.f32 %v1042, %v4158
        %v4160 = vpop.f32.mrb[0].mxu0
        %4161 = vdwg.mxu0
        %v4162 = vsel %vm1709, %v4154, -inf
        %4163 = vmax.xlane.f32.xlu0 %v4162
        %v4164 = vpop.xlane.xlu0 %4163
        %v4165 = vsel %vm1709, %v4159, -inf
        %4166 = vmax.xlane.f32.xlu0 %v4165
        %v4167 = vpop.xlane.xlu0 %4166
        %v4168 = vsub.f32 %v4154, %v4164
        %v4169 = vsub.f32 %v4159, %v4167
        %v4170 = vmul.f32 %v4168, 1.442695
        %v4171 = vpow.pop %v4170
        %v4172 = vmul.f32 %v4169, 1.442695
        %v4173 = vpow.pop %v4172
        %v4174 = vsel %vm1709, %v4171, 0.0
        %4175 = vadd.xlane.f32.xlu0 %v4174
        %v4176 = vpop.xlane.xlu0 %4175
        %v4177 = vsel %vm1709, %v4173, 0.0
        %4178 = vadd.xlane.f32.xlu0 %v4177
        %v4179 = vpop.xlane.xlu0 %4178
        %v4181 = vsel %vm1709, %v4171, 0
        %v4184 = vsel %vm1709, %v4173, 0
        %4186 = vmatprep.subr.mxu0 0.0
        %4187 = vmatpush1.msra.mxu0 %v4077
        %4188 = vmatprep.subr.mxu0 0.0
        %4189 = vmatpush1.msra.mxu0 %v4078
        %4190 = vmatprep.subr.mxu0 0.0
        %4191 = vmatpush1.msra.mxu0 0.0
        %4192 = vmatprep.subr.mxu0 0.0
        %4193 = vmatpush1.msra.mxu0 0.0
        %4194 = vmatprep.subr.mxu0 0.0
        %4195 = vmatpush1.msra.mxu0 0.0
        %4196 = vmatprep.subr.mxu0 0.0
        %4197 = vmatpush1.msra.mxu0 0.0
        %4198 = vmatprep.subr.mxu0 0.0
        %4199 = vmatpush1.msra.mxu0 0.0
        %4200 = vmatprep.subr.mxu0 0.0
        %4201 = vmatpush1.msra.mxu0 0.0
        %4202 = vmatprep.subr.mxu0 0.0
        %4203 = vmatpush1.msra.mxu0 0.0
        %4204 = vmatprep.subr.mxu0 0.0
        %4205 = vmatpush1.msra.mxu0 0.0
        %4206 = vmatprep.subr.mxu0 0.0
        %4207 = vmatpush1.msra.mxu0 0.0
        %4208 = vmatprep.subr.mxu0 0.0
        %4209 = vmatpush1.msra.mxu0 0.0
        %4210 = vmatprep.subr.mxu0 0.0
        %4211 = vmatpush1.msra.mxu0 0.0
        %4212 = vmatprep.subr.mxu0 0.0
        %4213 = vmatpush1.msra.mxu0 0.0
        %4214 = vmatprep.subr.mxu0 0.0
        %4215 = vmatpush1.msra.mxu0 0.0
        %4216 = vmatprep.subr.mxu0 0.0
        %4217 = vmatpush1.msra.mxu0 0.0
        %4218 = vmatprep.subr.mxu0 0.0
        %4219 = vmatpush1.msra.mxu0 0.0
        %4220 = vmatprep.subr.mxu0 0.0
        %4221 = vmatpush1.msra.mxu0 0.0
        %4222 = vmatprep.subr.mxu0 0.0
        %4223 = vmatpush1.msra.mxu0 0.0
        %4224 = vmatprep.subr.mxu0 0.0
        %4225 = vmatpush1.msra.mxu0 0.0
        %4226 = vmatprep.subr.mxu0 0.0
        %4227 = vmatpush1.msra.mxu0 0.0
        %4228 = vmatprep.subr.mxu0 0.0
        %4229 = vmatpush1.msra.mxu0 0.0
        %4230 = vmatprep.subr.mxu0 0.0
        %4231 = vmatpush1.msra.mxu0 0.0
        %4232 = vmatprep.subr.mxu0 0.0
        %4233 = vmatpush1.msra.mxu0 0.0
        %4234 = vmatprep.subr.mxu0 0.0
        %4235 = vmatpush1.msra.mxu0 0.0
        %4236 = vmatprep.subr.mxu0 0.0
        %4237 = vmatpush1.msra.mxu0 0.0
        %4238 = vmatprep.subr.mxu0 0.0
        %4239 = vmatpush1.msra.mxu0 0.0
        %4240 = vmatprep.subr.mxu0 0.0
        %4241 = vmatpush1.msra.mxu0 0.0
        %4242 = vmatprep.subr.mxu0 0.0
        %4243 = vmatpush1.msra.mxu0 0.0
        %4244 = vmatprep.subr.mxu0 0.0
        %4245 = vmatpush1.msra.mxu0 0.0
        %4246 = vmatprep.subr.mxu0 0.0
        %4247 = vmatpush1.msra.mxu0 0.0
        %4248 = vmatprep.subr.mxu0 0.0
        %4249 = vmatpush1.msra.mxu0 0.0
        %4250 = vmatprep.mubr.f32.mxu0 0.0
        %4251 = vmatmul.mubr.f32.gmra.mrb[0].mxu0 %v4181
        %v4252 = vpop.f32.mrb[0].mxu0
        %v4253 = vadd.f32 0.0, %v4252
        %v4254 = vpop.f32.mrb[0].mxu0
        %4255 = vmatprep.mubr.f32.mxu0 0.0
        %4256 = vmatmul.mubr.f32.gmra.mrb[0].mxu0 %v4184
        %v4257 = vpop.f32.mrb[0].mxu0
        %v4258 = vadd.f32 0.0, %v4257
        %v4259 = vpop.f32.mrb[0].mxu0
        %4260 = vdwg.mxu0
        %v4261 = vrcp.pop %v4176
        %v4262 = vrcp.pop %v4179
        %v4263 = vmul.f32 %v4253, %v4261
        %v4264 = vmul.f32 %v4258, %v4262
        %4273 = vrot.lane.b32.xlu0 %v2223, 32
        %v4274 = vpop.permute.xlu0 %4273
        %4275 = vrot.lane.b32.xlu0 %v2224, 32
        %v4276 = vpop.permute.xlu0 %4275
        %4277 = vrot.lane.b32.xlu0 %v2225, 32
        %v4278 = vpop.permute.xlu0 %4277
        %4279 = vrot.lane.b32.xlu0 %v2226, 32
        %v4280 = vpop.permute.xlu0 %4279
        %4281 = vrot.lane.b32.xlu0 %v2227, 32
        %v4282 = vpop.permute.xlu0 %4281
        %4283 = vrot.lane.b32.xlu0 %v2228, 32
        %v4284 = vpop.permute.xlu0 %4283
        %4285 = vrot.lane.b32.xlu0 %v2229, 32
        %v4286 = vpop.permute.xlu0 %4285
        %4287 = vrot.lane.b32.xlu0 %v2230, 32
        %v4288 = vpop.permute.xlu0 %4287
        %4305 = vrot.lane.b32.xlu0 %v3039, 64
        %v4306 = vpop.permute.xlu0 %4305
        %4307 = vrot.lane.b32.xlu0 %v3040, 64
        %v4308 = vpop.permute.xlu0 %4307
        %4309 = vrot.lane.b32.xlu0 %v3041, 64
        %v4310 = vpop.permute.xlu0 %4309
        %4311 = vrot.lane.b32.xlu0 %v3042, 64
        %v4312 = vpop.permute.xlu0 %4311
        %4313 = vrot.lane.b32.xlu0 %v3043, 64
        %v4314 = vpop.permute.xlu0 %4313
        %4315 = vrot.lane.b32.xlu0 %v3044, 64
        %v4316 = vpop.permute.xlu0 %4315
        %4317 = vrot.lane.b32.xlu0 %v3045, 64
        %v4318 = vpop.permute.xlu0 %4317
        %4319 = vrot.lane.b32.xlu0 %v3046, 64
        %v4320 = vpop.permute.xlu0 %4319
        %4337 = vrot.lane.b32.xlu0 %v3853, 96
        %v4338 = vpop.permute.xlu0 %4337
        %4339 = vrot.lane.b32.xlu0 %v3854, 96
        %v4340 = vpop.permute.xlu0 %4339
        %4341 = vrot.lane.b32.xlu0 %v3855, 96
        %v4342 = vpop.permute.xlu0 %4341
        %4343 = vrot.lane.b32.xlu0 %v3856, 96
        %v4344 = vpop.permute.xlu0 %4343
        %4345 = vrot.lane.b32.xlu0 %v3857, 96
        %v4346 = vpop.permute.xlu0 %4345
        %4347 = vrot.lane.b32.xlu0 %v3858, 96
        %v4348 = vpop.permute.xlu0 %4347
        %4349 = vrot.lane.b32.xlu0 %v3859, 96
        %v4350 = vpop.permute.xlu0 %4349
        %4351 = vrot.lane.b32.xlu0 %v3860, 96
        %v4352 = vpop.permute.xlu0 %4351
        %v4361 = vsel %vm1053, %v1416, %v4274
        %v4362 = vsel %vm1053, %v1417, %v4276
        %v4363 = vsel %vm1053, %v1418, %v4278
        %v4364 = vsel %vm1053, %v1419, %v4280
        %v4365 = vsel %vm1053, %v1420, %v4282
        %v4366 = vsel %vm1053, %v1421, %v4284
        %v4367 = vsel %vm1053, %v1422, %v4286
        %v4368 = vsel %vm1053, %v1423, %v4288
        %v4369 = vsel %vm868, %v4361, %v4306
        %v4370 = vsel %vm868, %v4362, %v4308
        %v4371 = vsel %vm868, %v4363, %v4310
        %v4372 = vsel %vm868, %v4364, %v4312
        %v4373 = vsel %vm868, %v4365, %v4314
        %v4374 = vsel %vm868, %v4366, %v4316
        %v4375 = vsel %vm868, %v4367, %v4318
        %v4376 = vsel %vm868, %v4368, %v4320
        %vm4377 = vcmask 785408
        %v4378 = vsel %vm4377, %v4369, %v4338
        %v4379 = vsel %vm4377, %v4370, %v4340
        %v4380 = vsel %vm4377, %v4371, %v4342
        %v4381 = vsel %vm4377, %v4372, %v4344
        %v4382 = vsel %vm4377, %v4373, %v4346
        %v4383 = vsel %vm4377, %v4374, %v4348
        %v4384 = vsel %vm4377, %v4375, %v4350
        %v4385 = vsel %vm4377, %v4376, %v4352
        %v4386 = vld [vmem:[#allocation7] sm:$0xff]
        %v4387 = vld [vmem:[#allocation7 + $0x8] sm:$0xff]
        %v4388 = vld [vmem:[#allocation7 + $0x10] sm:$0xff]
        %v4389 = vld [vmem:[#allocation7 + $0x18] sm:$0xff]
        %v4390 = vld [vmem:[#allocation7 + $0x20] sm:$0xff]
        %v4391 = vld [vmem:[#allocation7 + $0x28] sm:$0xff]
        %v4392 = vld [vmem:[#allocation7 + $0x30] sm:$0xff]
        %v4393 = vld [vmem:[#allocation7 + $0x38] sm:$0xff]
        %v4394 = vld [vmem:[#allocation7 + $0x40] sm:$0xff]
        %v4395 = vld [vmem:[#allocation7 + $0x48] sm:$0xff]
        %v4396 = vld [vmem:[#allocation7 + $0x50] sm:$0xff]
        %v4397 = vld [vmem:[#allocation7 + $0x58] sm:$0xff]
        %v4398 = vld [vmem:[#allocation7 + $0x60] sm:$0xff]
        %v4399 = vld [vmem:[#allocation7 + $0x68] sm:$0xff]
        %v4400 = vld [vmem:[#allocation7 + $0x70] sm:$0xff]
        %v4401 = vld [vmem:[#allocation7 + $0x78] sm:$0xff]
        %4402 = vmatprep.subr.mxu0 0.0
        %4403 = vmatpush1.msra.mxu0 %v4386
        %4404 = vmatprep.subr.mxu0 0.0
        %4405 = vmatpush1.msra.mxu0 %v4387
        %4406 = vmatprep.subr.mxu0 0.0
        %4407 = vmatpush1.msra.mxu0 %v4388
        %4408 = vmatprep.subr.mxu0 0.0
        %4409 = vmatpush1.msra.mxu0 %v4389
        %4410 = vmatprep.subr.mxu0 0.0
        %4411 = vmatpush1.msra.mxu0 %v4390
        %4412 = vmatprep.subr.mxu0 0.0
        %4413 = vmatpush1.msra.mxu0 %v4391
        %4414 = vmatprep.subr.mxu0 0.0
        %4415 = vmatpush1.msra.mxu0 %v4392
        %4416 = vmatprep.subr.mxu0 0.0
        %4417 = vmatpush1.msra.mxu0 %v4393
        %4418 = vmatprep.subr.mxu0 0.0
        %4419 = vmatpush1.msra.mxu0 %v4394
        %4420 = vmatprep.subr.mxu0 0.0
        %4421 = vmatpush1.msra.mxu0 %v4395
        %4422 = vmatprep.subr.mxu0 0.0
        %4423 = vmatpush1.msra.mxu0 %v4396
        %4424 = vmatprep.subr.mxu0 0.0
        %4425 = vmatpush1.msra.mxu0 %v4397
        %4426 = vmatprep.subr.mxu0 0.0
        %4427 = vmatpush1.msra.mxu0 %v4398
        %4428 = vmatprep.subr.mxu0 0.0
        %4429 = vmatpush1.msra.mxu0 %v4399
        %4430 = vmatprep.subr.mxu0 0.0
        %4431 = vmatpush1.msra.mxu0 %v4400
        %4432 = vmatprep.subr.mxu0 0.0
        %4433 = vmatpush1.msra.mxu0 %v4401
        %4434 = vmatprep.subr.mxu0 0.0
        %4435 = vmatpush1.msra.mxu0 0.0
        %4436 = vmatprep.subr.mxu0 0.0
        %4437 = vmatpush1.msra.mxu0 0.0
        %4438 = vmatprep.subr.mxu0 0.0
        %4439 = vmatpush1.msra.mxu0 0.0
        %4440 = vmatprep.subr.mxu0 0.0
        %4441 = vmatpush1.msra.mxu0 0.0
        %4442 = vmatprep.subr.mxu0 0.0
        %4443 = vmatpush1.msra.mxu0 0.0
        %4444 = vmatprep.subr.mxu0 0.0
        %4445 = vmatpush1.msra.mxu0 0.0
        %4446 = vmatprep.subr.mxu0 0.0
        %4447 = vmatpush1.msra.mxu0 0.0
        %4448 = vmatprep.subr.mxu0 0.0
        %4449 = vmatpush1.msra.mxu0 0.0
        %4450 = vmatprep.subr.mxu0 0.0
        %4451 = vmatpush1.msra.mxu0 0.0
        %4452 = vmatprep.subr.mxu0 0.0
        %4453 = vmatpush1.msra.mxu0 0.0
        %4454 = vmatprep.subr.mxu0 0.0
        %4455 = vmatpush1.msra.mxu0 0.0
        %4456 = vmatprep.subr.mxu0 0.0
        %4457 = vmatpush1.msra.mxu0 0.0
        %4458 = vmatprep.subr.mxu0 0.0
        %4459 = vmatpush1.msra.mxu0 0.0
        %4460 = vmatprep.subr.mxu0 0.0
        %4461 = vmatpush1.msra.mxu0 0.0
        %4462 = vmatprep.subr.mxu0 0.0
        %4463 = vmatpush1.msra.mxu0 0.0
        %4464 = vmatprep.subr.mxu0 0.0
        %4465 = vmatpush1.msra.mxu0 0.0
        %4466 = vmatprep.mubr.f32.mxu0 0.0
        %4467 = vmatmul.mubr.f32.gmra.mrb[0].mxu0 %v4378
        %v4468 = vpop.f32.mrb[0].mxu0
        %v4469 = vadd.f32 0.0, %v4468
        %v4470 = vpop.f32.mrb[0].mxu0
        %4471 = vmatprep.mubr.f32.mxu0 0.0
        %4472 = vmatmul.mubr.f32.gmra.mrb[0].mxu0 %v4379
        %v4473 = vpop.f32.mrb[0].mxu0
        %v4474 = vadd.f32 0.0, %v4473
        %v4475 = vpop.f32.mrb[0].mxu0
        %4476 = vmatprep.mubr.f32.mxu0 0.0
        %4477 = vmatmul.mubr.f32.gmra.mrb[0].mxu0 %v4380
        %v4478 = vpop.f32.mrb[0].mxu0
        %v4479 = vadd.f32 0.0, %v4478
        %v4480 = vpop.f32.mrb[0].mxu0
        %4481 = vmatprep.mubr.f32.mxu0 0.0
        %4482 = vmatmul.mubr.f32.gmra.mrb[0].mxu0 %v4381
        %v4483 = vpop.f32.mrb[0].mxu0
        %v4484 = vadd.f32 0.0, %v4483
        %v4485 = vpop.f32.mrb[0].mxu0
        %4486 = vmatprep.mubr.f32.mxu0 0.0
        %4487 = vmatmul.mubr.f32.gmra.mrb[0].mxu0 %v4382
        %v4488 = vpop.f32.mrb[0].mxu0
        %v4489 = vadd.f32 0.0, %v4488
        %v4490 = vpop.f32.mrb[0].mxu0
        %4491 = vmatprep.mubr.f32.mxu0 0.0
        %4492 = vmatmul.mubr.f32.gmra.mrb[0].mxu0 %v4383
        %v4493 = vpop.f32.mrb[0].mxu0
        %v4494 = vadd.f32 0.0, %v4493
        %v4495 = vpop.f32.mrb[0].mxu0
        %4496 = vmatprep.mubr.f32.mxu0 0.0
        %4497 = vmatmul.mubr.f32.gmra.mrb[0].mxu0 %v4384
        %v4498 = vpop.f32.mrb[0].mxu0
        %v4499 = vadd.f32 0.0, %v4498
        %v4500 = vpop.f32.mrb[0].mxu0
        %4501 = vmatprep.mubr.f32.mxu0 0.0
        %4502 = vmatmul.mubr.f32.gmra.mrb[0].mxu0 %v4385
        %v4503 = vpop.f32.mrb[0].mxu0
        %v4504 = vadd.f32 0.0, %v4503
        %v4505 = vpop.f32.mrb[0].mxu0
        %4506 = vdwg.mxu0
        %4507 = vst [vmem:[%s478] sm:$0xff] %v4469
        %4508 = vst [vmem:[%s478 + $0x8] sm:$0xff] %v4474
        %4509 = vst [vmem:[%s478 + $0x10] sm:$0xff] %v4479
        %4510 = vst [vmem:[%s478 + $0x18] sm:$0xff] %v4484
        %4511 = vst [vmem:[%s478 + $0x20] sm:$0xff] %v4489
        %4512 = vst [vmem:[%s478 + $0x28] sm:$0xff] %v4494
        %4513 = vst [vmem:[%s478 + $0x30] sm:$0xff] %v4499
        %4514 = vst [vmem:[%s478 + $0x38] sm:$0xff] %v4504
        %4517 = vrot.lane.b32.xlu0 %v2635, 32
        %v4518 = vpop.permute.xlu0 %4517
        %4519 = vrot.lane.b32.xlu0 %v2636, 32
        %v4520 = vpop.permute.xlu0 %4519
        %4525 = vrot.lane.b32.xlu0 %v3449, 64
        %v4526 = vpop.permute.xlu0 %4525
        %4527 = vrot.lane.b32.xlu0 %v3450, 64
        %v4528 = vpop.permute.xlu0 %4527
        %4533 = vrot.lane.b32.xlu0 %v4263, 96
        %v4534 = vpop.permute.xlu0 %4533
        %4535 = vrot.lane.b32.xlu0 %v4264, 96
        %v4536 = vpop.permute.xlu0 %4535
        %v4539 = vsel %vm1053, %v1811, %v4518
        %v4540 = vsel %vm1053, %v1812, %v4520
        %v4541 = vsel %vm868, %v4539, %v4526
        %v4542 = vsel %vm868, %v4540, %v4528
        %v4543 = vsel %vm4377, %v4541, %v4534
        %v4544 = vsel %vm4377, %v4542, %v4536
        %4545 = vst [vmem:[%s518] sm:$0xff] %v4543
        %4546 = vst [vmem:[%s518 + $0x8] sm:$0xff] %v4544
        %s4547 = sand.u32 %s213, 1
        %s4548 = scalar_lea.sflag [#allocation4], %s4547
        %s4549 = sand.u32 %s213, 1
        %s4550 = smul.addr %s4549, 64
        %s4551 = scalar_lea.vmem [#allocation13], %s4550
        %s4552 = smul.u32 2, %s32
        %p4553 = scmp.lt.s32.totalorder %s4552, 3
        %s4554 = scalar_select %p4553, %s4552, 3
        %s4555 = smul.addr %s4554, 8
        %s4556 = scalar_lea.vmem %s9, %s4555
        %s4557 = smul.u32 2, %s32
        %p4558 = scmp.lt.s32.totalorder %s4557, 3
        %s4559 = scalar_select %p4558, %s4557, 3
        %s4560 = smul.addr %s4559, 8
        %s4561 = scalar_lea.vmem %s10, %s4560
        %s4562 = smul.u32 2, %s32
        %p4563 = scmp.lt.s32.totalorder %s4562, 3
        %s4564 = scalar_select %p4563, %s4562, 3
        %s4565 = smul.addr %s4564, 8
        %s4566 = scalar_lea.vmem %s11, %s4565
        // Predicated region
        $region77: #{block_forward.1} parent=51 // pred_check
          %p4567 = pneg %p223
        $region78: #{block_forward.1} parent=51 // pred_check_branch
          %4569 = sbr.rel (%p4567) target = $region80
        $region79: #{block_forward.1} parent=51 // pred_region
          %s4570 = smul.u32 8, %s32
          %s4572 = ssub.s32 1024, 1024
          %4573 = vsyncadd %s4548, %s4572
          %s4574 = smul.addr %s4570, 128
          %s4575 = scalar_lea.hbm %s8, %s4574
          %s4576 = sshll.u32 %s4551, 4
          %s4577 = int_to_ptr.vmem [resolvable:$true] %s4576
          %4582 = dma.vmem_to_hbm [thread:$0]  %s4577, 1024, %s4575, %s4548, 128, 128, 8
        $region80: #{block_forward.1} parent=51 // pred_fallthru
          _
        // Predicated region
        $region81: #{block_forward.1} parent=51 // pred_check
          %p4583 = pneg %p249
        $region82: #{block_forward.1} parent=51 // pred_check_branch
          %4585 = sbr.rel (%p4583) target = $region84
        $region83: #{block_forward.1} parent=51 // pred_region
          %s4586 = smul.u32 2, %s32
        $region84: #{block_forward.1} parent=51 // pred_fallthru
          _
        // Predicated region
        $region85: #{block_forward.1} parent=51 // pred_check
          %p4587 = pneg %p275
        $region86: #{block_forward.1} parent=51 // pred_check_branch
          %4589 = sbr.rel (%p4587) target = $region88
        $region87: #{block_forward.1} parent=51 // pred_region
          %s4590 = smul.u32 2, %s32
        $region88: #{block_forward.1} parent=51 // pred_fallthru
          _
        // Predicated region
        $region89: #{block_forward.1} parent=51 // pred_check
          %p4591 = pneg %p301
        $region90: #{block_forward.1} parent=51 // pred_check_branch
          %4593 = sbr.rel (%p4591) target = $region92
        $region91: #{block_forward.1} parent=51 // pred_region
          %s4594 = smul.u32 2, %s32
        $region92: #{block_forward.1} parent=51 // pred_fallthru
          _
      $region52: #{block_forward.1} parent=5 // pred_fallthru
        _
      %p4595 = scmp.le.s32.totalorder 2, %s27
      // Predicated region
      $region93: #{block_forward.1} parent=5 // pred_check
        %p4596 = pneg %p4595
      $region94: #{block_forward.1} parent=5 // pred_check_branch
        %4598 = sbr.rel (%p4596) target = $region96
      $region95: #{block_forward.1} parent=5 // pred_region
        %s4599 = ssub.s32 %s27, 2
        // Predicated region
        $region97: #{block_forward.1} parent=95 // pred_check
          %p4600 = pneg %p229
        $region98: #{block_forward.1} parent=95 // pred_check_branch
          %4602 = sbr.rel (%p4600) target = $region100
        $region99: #{block_forward.1} parent=95 // pred_region
          %s4603 = sand.u32 %s214, 1
          %s4604 = scalar_lea.sflag [#allocation4], %s4603
          %s4605 = sand.u32 %s214, 1
          %s4606 = smul.addr %s4605, 64
          %s4607 = scalar_lea.vmem [#allocation13], %s4606
          %4608 = dma.done %s4604, 1024
        $region100: #{block_forward.1} parent=95 // pred_fallthru
          _
        // Predicated region
        $region101: #{block_forward.1} parent=95 // pred_check
          %p4609 = pneg %p255
        $region102: #{block_forward.1} parent=95 // pred_check_branch
          %4611 = sbr.rel (%p4609) target = $region104
        $region103: #{block_forward.1} parent=95 // pred_region
          %s4612 = smul.u32 2, %s33
          %p4613 = scmp.lt.s32.totalorder %s4612, 3
          %s4614 = scalar_select %p4613, %s4612, 3
          %s4615 = smul.addr %s4614, 8
          %s4616 = scalar_lea.vmem %s9, %s4615
        $region104: #{block_forward.1} parent=95 // pred_fallthru
          _
        // Predicated region
        $region105: #{block_forward.1} parent=95 // pred_check
          %p4617 = pneg %p281
        $region106: #{block_forward.1} parent=95 // pred_check_branch
          %4619 = sbr.rel (%p4617) target = $region108
        $region107: #{block_forward.1} parent=95 // pred_region
          %s4620 = smul.u32 2, %s33
          %p4621 = scmp.lt.s32.totalorder %s4620, 3
          %s4622 = scalar_select %p4621, %s4620, 3
          %s4623 = smul.addr %s4622, 8
          %s4624 = scalar_lea.vmem %s10, %s4623
        $region108: #{block_forward.1} parent=95 // pred_fallthru
          _
        // Predicated region
        $region109: #{block_forward.1} parent=95 // pred_check
          %p4625 = pneg %p307
        $region110: #{block_forward.1} parent=95 // pred_check_branch
          %4627 = sbr.rel (%p4625) target = $region112
        $region111: #{block_forward.1} parent=95 // pred_region
          %s4628 = smul.u32 2, %s33
          %p4629 = scmp.lt.s32.totalorder %s4628, 3
          %s4630 = scalar_select %p4629, %s4628, 3
          %s4631 = smul.addr %s4630, 8
          %s4632 = scalar_lea.vmem %s11, %s4631
        $region112: #{block_forward.1} parent=95 // pred_fallthru
          _
      $region96: #{block_forward.1} parent=5 // pred_fallthru
        _
    $region6: #{block_forward.1} parent=1 // loop_footer
      %s31 = sadd.s32 1, %s27
    $region7: #{block_forward.1} parent=1 // loop_footer_branch
      %26 = sbr.rel target = $region3
    $region8: #{block_forward.1} parent=1 // loop_exit
      _
    %4633 = vsyncpa [#allocation3], 1
    %s4634 = scalar_lea.sflag [#allocation3], 1
    %4635 = vsyncpa %s4634, 1
    %4636 = vsyncpa [#allocation6], 1
    %4637 = vsyncpa [#allocation9], 1
    %4638 = vsyncpa [#allocation12], 1
    %4639 = vsyncpa [#allocation4], 1
    %s4640 = scalar_lea.sflag [#allocation4], 1
    %4641 = vsyncpa %s4640, 1

</llo_original>
